<compile_context>
chip_gen: v7x
topology: tpu7x:2x2x1
jax: 0.10.0
libtpu: 0.0.40
codegen_flags: <defaults>
</compile_context>

<pallas_src>
import functools

import jax
import jax.numpy as jnp
from jax import lax
from jax.experimental import pallas as pl
from jax.experimental.pallas import tpu as pltpu

LANE = 128             # hidden/gate dims padded to a multiple of this
SUBLANE = 8            # batch padded to a multiple of this
DEFAULT_T_CHUNK = 16   # timesteps per grid step (amortizes ~0.35us/step)
MAX_B_BLOCK = 64       # keep unrolled gates value within the 64-entry vreg file
MATMUL_DTYPE = jnp.bfloat16   # MXU operand dtype (accumulation stays f32)
STREAM_DTYPE = jnp.bfloat16   # GX / inter-layer y HBM stream dtype


def _round_up(x, m):
    return (x + m - 1) // m * m


def _pad_gate_cols(w, h, hp):
    """w: (K, 4h) in PyTorch gate order [i,f,g,o] -> (K, 4hp), per-gate zero pad."""
    if hp == h:
        return w
    k = w.shape[0]
    w4 = w.reshape(k, 4, h)
    w4 = jnp.pad(w4, ((0, 0), (0, 0), (0, hp - h)))
    return w4.reshape(k, 4 * hp)


def _tensorcores_per_chip():
    """Best-effort TC count (2 on v7x-style parts); safe fallback of 1."""
    try:
        d = jax.devices()[0]
        kind = str(getattr(d, "device_kind", "")).lower()
        if "v7" in kind:
            return 2
        return max(1, int(getattr(d, "num_cores", 1)))
    except Exception:  # pragma: no cover - defensive
        return 1


def _pick_b_block(batch, n_cores):
    """Largest sensible batch block: full Bp on 1-TC chips, Bp/2 on 2-TC, <=64."""
    bp_min = _round_up(batch, SUBLANE)
    if n_cores >= 2 and bp_min >= 2 * SUBLANE:
        blk = _round_up((bp_min + n_cores - 1) // n_cores, SUBLANE)
    else:
        blk = bp_min
    return min(blk, MAX_B_BLOCK)


# ---------------------------------------------------------------------------
# Pallas kernel: LSTM recurrence for one layer.
# grid = (batch_blocks [parallel], time_chunks [arbitrary])
# Per grid step it consumes a (T_CHUNK, B_BLOCK, 4Hp) bf16 slab of the
# precomputed input projection GX and runs T_CHUNK serial steps of
# h @ W_hh + gate math.  h/c live in f32 VMEM scratch across the time axis.
# ---------------------------------------------------------------------------
def _lstm_layer_kernel(gx_ref, len_ref, whh_ref,
                       y_ref, hf_ref, cf_ref,
                       h_sc, c_sc):
    t_idx = pl.program_id(1)
    t_chunk = gx_ref.shape[0]
    hp = h_sc.shape[-1]

    @pl.when(t_idx == 0)
    def _():
        h_sc[...] = jnp.zeros_like(h_sc)
        c_sc[...] = jnp.zeros_like(c_sc)

    lens = len_ref[...]                      # (B_BLOCK, 1) int32, grid-invariant
    t0 = t_idx * t_chunk

    def step(tt, carry):
        h, c = carry
        # bf16 x bf16 -> f32 on the MXU; W_hh streamed from VMEM (not hoisted).
        gates = gx_ref[tt].astype(jnp.float32) + jnp.dot(
            h.astype(whh_ref.dtype), whh_ref[...],
            preferred_element_type=jnp.float32)
        # Hp is a multiple of 128, so every gate slice is a full-lane slab.
        i_g = jax.nn.sigmoid(gates[:, 0 * hp:1 * hp])
        f_g = jax.nn.sigmoid(gates[:, 1 * hp:2 * hp])
        g_g = jnp.tanh(gates[:, 2 * hp:3 * hp])
        o_g = jax.nn.sigmoid(gates[:, 3 * hp:4 * hp])
        c_new = f_g * c + i_g * g_g
        h_new = o_g * jnp.tanh(c_new)
        # packed-sequence semantics: only update state while t < length[b]
        valid = (t0 + tt) < lens             # (B_BLOCK, 1) bool
        h_upd = jnp.where(valid, h_new, h)
        c_upd = jnp.where(valid, c_new, c)
        # zero padded positions, like pad_packed_sequence
        y_ref[tt] = jnp.where(valid, h_new, 0.0).astype(y_ref.dtype)
        return h_upd, c_upd

    h, c = lax.fori_loop(0, t_chunk, step, (h_sc[...], c_sc[...]), unroll=True)
    h_sc[...] = h
    c_sc[...] = c

    # Final-state writes only on the last time chunk.
    @pl.when(t_idx == pl.num_programs(1) - 1)
    def _():
        hf_ref[...] = h.astype(hf_ref.dtype)
        cf_ref[...] = c.astype(cf_ref.dtype)


def lstm_layer(gx, lens, w_hh_t, *, t_chunk, b_block):
    """gx: (S_pad, Bp, 4Hp) bf16; lens: (Bp, 1) int32; w_hh_t: (Hp, 4Hp) bf16."""
    s_pad, bp, h4p = gx.shape
    hp = h4p // 4
    num_t = s_pad // t_chunk
    num_b = bp // b_block

    # Explicit VMEM budget (double-buffered inputs/outputs + scratch), 2x margin.
    vmem_need = (
        2 * t_chunk * b_block * h4p * gx.dtype.itemsize        # GX blocks
        + 2 * t_chunk * b_block * hp * 2                       # y blocks (bf16)
        + 2 * hp * h4p * w_hh_t.dtype.itemsize                 # W_hh (grid-invariant)
        + 2 * b_block * 4                                      # lens
        + 4 * b_block * hp * 4                                 # h_T / c_T outputs
        + 2 * b_block * hp * 4                                 # h/c scratch
    )
    vmem_limit = int(min(64 * 1024 * 1024,
                         max(2 * vmem_need, 16 * 1024 * 1024)))

    grid_spec = pltpu.PrefetchScalarGridSpec(
        num_scalar_prefetch=0,
        grid=(num_b, num_t),
        in_specs=[
            pl.BlockSpec((t_chunk, b_block, h4p), lambda b, t: (t, b, 0)),  # GX
            pl.BlockSpec((b_block, 1), lambda b, t: (b, 0)),                # lengths
            pl.BlockSpec((hp, h4p), lambda b, t: (0, 0)),                   # W_hh^T
        ],
        out_specs=[
            pl.BlockSpec((t_chunk, b_block, hp), lambda b, t: (t, b, 0)),   # y
            pl.BlockSpec((b_block, hp), lambda b, t: (b, 0)),               # h_T
            pl.BlockSpec((b_block, hp), lambda b, t: (b, 0)),               # c_T
        ],
        scratch_shapes=[
            pltpu.VMEM((b_block, hp), jnp.float32),
            pltpu.VMEM((b_block, hp), jnp.float32),
        ],
    )
    return pl.pallas_call(
        _lstm_layer_kernel,
        out_shape=(
            jax.ShapeDtypeStruct((s_pad, bp, hp), STREAM_DTYPE),   # y (bf16)
            jax.ShapeDtypeStruct((bp, hp), jnp.float32),           # h_T
            jax.ShapeDtypeStruct((bp, hp), jnp.float32),           # c_T
        ),
        grid_spec=grid_spec,
        compiler_params=pltpu.CompilerParams(
            dimension_semantics=("parallel", "arbitrary"),
            vmem_limit_bytes=vmem_limit),
    )(gx, lens, w_hh_t)


# ---------------------------------------------------------------------------
# Params (PyTorch conventions: W_ih (4H, Din), W_hh (4H, H), gates [i,f,g,o])
# ---------------------------------------------------------------------------
def init_params(key, vocab_size, embedding_dim, hidden_dim, output_dim,
                n_layers):
    keys = jax.random.split(key, 2 + 2 * n_layers)
    params = {
        "embedding": jax.random.normal(
            keys[0], (vocab_size, embedding_dim), jnp.float32) * 0.1,
        "layers": [],
        "fc_w": jax.random.normal(
            keys[1], (output_dim, hidden_dim), jnp.float32) * 0.1,
        "fc_b": jnp.zeros((output_dim,), jnp.float32),
    }
    for l in range(n_layers):
        din = embedding_dim if l == 0 else hidden_dim
        kw = keys[2 + 2 * l: 2 + 2 * (l + 1)]
        w_ih = jax.random.normal(kw[0], (4 * hidden_dim, din), jnp.float32) * 0.1
        w_hh = jax.random.normal(kw[1], (4 * hidden_dim, hidden_dim),
                                 jnp.float32) * 0.1
        b_ih = jnp.zeros((4 * hidden_dim,), jnp.float32)   # zeros as in _init_weight
        b_hh = jnp.zeros((4 * hidden_dim,), jnp.float32)
        params["layers"].append((w_ih, w_hh, b_ih, b_hh))
    return params


# ---------------------------------------------------------------------------
# Full module forward
# ---------------------------------------------------------------------------
@functools.partial(jax.jit, static_argnames=("t_chunk", "b_block"))
def lstm_forward(params, ids, lengths, *, t_chunk=None, b_block=None):
    # Embedding lookup (gather glue in plain JAX) -> (B, S, E)
    emb = jnp.take(params["embedding"], ids, axis=0)
    # Dropout: eval-mode identity.
    # TODO(synk): training-mode dropout mask not implemented (inference path).
    x = jnp.transpose(emb, (1, 0, 2)).astype(jnp.float32)     # (S, B, E)
    S, B, _E = x.shape
    H = params["fc_w"].shape[1]
    Hp = _round_up(H, LANE)

    if t_chunk is None:
        t_chunk = max(1, min(DEFAULT_T_CHUNK, S))
    if b_block is None:
        b_block = _pick_b_block(B, _tensorcores_per_chip())
    Bp = _round_up(B, b_block)
    S_pad = _round_up(S, t_chunk)

    # Zero-pad seq / batch once; padded positions never update state (len=0).
    x = jnp.pad(x, ((0, S_pad - S), (0, Bp - B), (0, 0)))
    lens_p = jnp.pad(lengths.astype(jnp.int32), (0, Bp - B))[:, None]  # (Bp, 1)

    h_finals = []
    for li, (w_ih, w_hh, b_ih, b_hh) in enumerate(params["layers"]):
        # Pre-transpose + lane-pad weights (done once, outside the recurrence).
        w_ih_t = w_ih.T                                        # (Din, 4H)
        if li > 0:                                             # input is padded y
            w_ih_t = jnp.pad(w_ih_t, ((0, Hp - H), (0, 0)))
        w_ih_t = _pad_gate_cols(w_ih_t, H, Hp)                 # (Din|Hp, 4Hp)
        w_hh_t = _pad_gate_cols(jnp.pad(w_hh.T, ((0, Hp - H), (0, 0))), H, Hp)
        bias = _pad_gate_cols((b_ih + b_hh)[None, :], H, Hp)[0]

        # Hoisted input projection as ONE 2-D GEMM over all timesteps (XLA),
        # bf16 operands, f32 accumulate, stored to HBM as bf16.
        din = x.shape[-1]
        x2d = x.reshape(S_pad * Bp, din)
        gx2d = jnp.dot(x2d.astype(MATMUL_DTYPE), w_ih_t.astype(MATMUL_DTYPE),
                       preferred_element_type=jnp.float32) + bias
        gx = gx2d.reshape(S_pad, Bp, 4 * Hp).astype(STREAM_DTYPE)

        y, h_f, _c_f = lstm_layer(gx, lens_p, w_hh_t.astype(MATMUL_DTYPE),
                                  t_chunk=t_chunk, b_block=b_block)
        h_finals.append(h_f)
        x = y                                                  # bf16, feeds next layer

    h = jnp.stack(h_finals, axis=0)[:, :B, :H]                 # (L, B, H) f32
    # Final linear layer: tiny; plain XLA dot beats a pallas_call dispatch.
    pred = jnp.einsum("lbh,oh->lbo", h, params["fc_w"]) + params["fc_b"]
    return pred                                                # (L, B, out)


if __name__ == "__main__":
    vocab_size = 64
    embedding_dim = 32
    hidden_dim = 32
    output_dim = 8
    n_layers = 2
    batch = 4
    seq = 8

    key = jax.random.PRNGKey(0)
    k_params, k_ids = jax.random.split(key)
    params = init_params(k_params, vocab_size, embedding_dim, hidden_dim,
                         output_dim, n_layers)

    ids = jax.random.randint(k_ids, (batch, seq), 0, vocab_size, jnp.int32)
    lengths = jnp.array([8, 5, 3, 6], jnp.int32)               # valid lengths

    pred = lstm_forward(params, ids, lengths)
    jax.block_until_ready(pred)
    assert pred.shape == (n_layers, batch, output_dim), pred.shape
    assert bool(jnp.all(jnp.isfinite(pred))), "non-finite output"
    print("KERNEL_OK")
</pallas_src>

<mosaic_0001>
module attributes {stable_mosaic.version = 11 : i64} {
  func.func @_lstm_layer_kernel(%arg0: i32, %arg1: i32, %arg2: memref<8x8x512xbf16, #tpu.memory_space<vmem>>, %arg3: memref<8x1xi32, #tpu.memory_space<vmem>>, %arg4: memref<128x512xbf16, #tpu.memory_space<vmem>>, %arg5: memref<8x8x128xbf16, #tpu.memory_space<vmem>>, %arg6: memref<8x128xf32, #tpu.memory_space<vmem>>, %arg7: memref<8x128xf32, #tpu.memory_space<vmem>>, %arg8: memref<8x128xf32, #tpu.memory_space<vmem>>, %arg9: memref<8x128xf32, #tpu.memory_space<vmem>>) attributes {dimension_semantics = [#tpu.dimension_semantics<parallel>, #tpu.dimension_semantics<arbitrary>], iteration_bounds = array<i64: 1, 1>, scalar_prefetch = 0 : i64, scratch_operands = 2 : i64, tpu.core_type = #tpu.core_type<tc>, window_params = [{transform_indices = @transform_0, window_bounds = array<i64: 8, 8, 512>}, {transform_indices = @transform_1, window_bounds = array<i64: 8, 1>}, {pipeline_mode = #tpu.pipeline_mode<synchronous>, transform_indices = @transform_2, window_bounds = array<i64: 128, 512>}, {transform_indices = @transform_3, window_bounds = array<i64: 8, 8, 128>}, {transform_indices = @transform_4, window_bounds = array<i64: 8, 128>}, {transform_indices = @transform_5, window_bounds = array<i64: 8, 128>}]} {
    %c0_i32 = arith.constant 0 : i32
    %0 = arith.cmpi eq, %arg1, %c0_i32 : i32
    %1 = arith.extui %0 : i1 to i32
    %c0_i32_0 = arith.constant 0 : i32
    %2 = arith.cmpi ne, %1, %c0_i32_0 : i32
    scf.if %2 {
      %cst_101 = arith.constant 0.000000e+00 : f32
      %420 = vector.broadcast %cst_101 : f32 to vector<8x128xf32>
      %c0_102 = arith.constant 0 : index
      %c0_103 = arith.constant 0 : index
      %421 = vector.load %arg8[%c0_102, %c0_103] : memref<8x128xf32, #tpu.memory_space<vmem>>, vector<8x128xf32>
      tpu.vector_store %arg8[%c0_102, %c0_103], %420 {strides = array<i32>} : memref<8x128xf32, #tpu.memory_space<vmem>>, vector<8x128xf32>,
      %cst_104 = arith.constant 0.000000e+00 : f32
      %422 = vector.broadcast %cst_104 : f32 to vector<8x128xf32>
      %c0_105 = arith.constant 0 : index
      %c0_106 = arith.constant 0 : index
      %423 = vector.load %arg9[%c0_105, %c0_106] : memref<8x128xf32, #tpu.memory_space<vmem>>, vector<8x128xf32>
      tpu.vector_store %arg9[%c0_105, %c0_106], %422 {strides = array<i32>} : memref<8x128xf32, #tpu.memory_space<vmem>>, vector<8x128xf32>,
    } else {
    }
    %c0 = arith.constant 0 : index
    %c0_1 = arith.constant 0 : index
    %3 = vector.load %arg3[%c0, %c0_1] : memref<8x1xi32, #tpu.memory_space<vmem>>, vector<8x1xi32>
    %c8_i32 = arith.constant 8 : i32
    %4 = arith.muli %arg1, %c8_i32 : i32
    %c0_2 = arith.constant 0 : index
    %c0_3 = arith.constant 0 : index
    %5 = vector.load %arg8[%c0_2, %c0_3] : memref<8x128xf32, #tpu.memory_space<vmem>>, vector<8x128xf32>
    %c0_4 = arith.constant 0 : index
    %c0_5 = arith.constant 0 : index
    %6 = vector.load %arg9[%c0_4, %c0_5] : memref<8x128xf32, #tpu.memory_space<vmem>>, vector<8x128xf32>
    %c0_i32_6 = arith.constant 0 : i32
    %7 = arith.index_cast %c0_i32_6 : i32 to index
    %c0_7 = arith.constant 0 : index
    %c0_8 = arith.constant 0 : index
    %8 = vector.load %arg2[%7, %c0_7, %c0_8] : memref<8x8x512xbf16, #tpu.memory_space<vmem>>, vector<1x8x512xbf16>
    %9 = vector.shape_cast %8 : vector<1x8x512xbf16> to vector<8x512xbf16>
    %10 = arith.extf %9 : vector<8x512xbf16> to vector<8x512xf32>
    %11 = arith.truncf %5 : vector<8x128xf32> to vector<8x128xbf16>
    %c0_9 = arith.constant 0 : index
    %c0_10 = arith.constant 0 : index
    %12 = vector.load %arg4[%c0_9, %c0_10] : memref<128x512xbf16, #tpu.memory_space<vmem>>, vector<128x512xbf16>
    %cst = arith.constant dense<0.000000e+00> : vector<8x512xf32>
    %13 = tpu.matmul %11, %12, %cst {dimension_numbers = #tpu.dot_dimension_numbers<[1], [0], [0], [1], [0, 0, 1, 1], [], []>} : vector<8x128xbf16>, vector<128x512xbf16>, vector<8x512xf32> -> vector<8x512xf32>
    %14 = arith.addf %10, %13 : vector<8x512xf32>
    %15 = vector.extract_strided_slice %14 {offsets = [0, 0], sizes = [8, 128], strides = [1, 1]} : vector<8x512xf32> to vector<8x128xf32>
    %16 = arith.negf %15 : vector<8x128xf32>
    %17 = math.exp %16 : vector<8x128xf32>
    %cst_11 = arith.constant 1.000000e+00 : f32
    %18 = vector.broadcast %cst_11 : f32 to vector<8x128xf32>
    %19 = arith.addf %18, %17 : vector<8x128xf32>
    %20 = arith.divf %18, %19 : vector<8x128xf32>
    %21 = vector.extract_strided_slice %14 {offsets = [0, 128], sizes = [8, 128], strides = [1, 1]} : vector<8x512xf32> to vector<8x128xf32>
    %22 = arith.negf %21 : vector<8x128xf32>
    %23 = math.exp %22 : vector<8x128xf32>
    %cst_12 = arith.constant 1.000000e+00 : f32
    %24 = vector.broadcast %cst_12 : f32 to vector<8x128xf32>
    %25 = arith.addf %24, %23 : vector<8x128xf32>
    %26 = arith.divf %24, %25 : vector<8x128xf32>
    %27 = vector.extract_strided_slice %14 {offsets = [0, 256], sizes = [8, 128], strides = [1, 1]} : vector<8x512xf32> to vector<8x128xf32>
    %28 = math.tanh %27 : vector<8x128xf32>
    %29 = vector.extract_strided_slice %14 {offsets = [0, 384], sizes = [8, 128], strides = [1, 1]} : vector<8x512xf32> to vector<8x128xf32>
    %30 = arith.negf %29 : vector<8x128xf32>
    %31 = math.exp %30 : vector<8x128xf32>
    %cst_13 = arith.constant 1.000000e+00 : f32
    %32 = vector.broadcast %cst_13 : f32 to vector<8x128xf32>
    %33 = arith.addf %32, %31 : vector<8x128xf32>
    %34 = arith.divf %32, %33 : vector<8x128xf32>
    %35 = arith.mulf %26, %6 : vector<8x128xf32>
    %36 = arith.mulf %20, %28 : vector<8x128xf32>
    %37 = arith.addf %35, %36 : vector<8x128xf32>
    %38 = math.tanh %37 : vector<8x128xf32>
    %39 = arith.mulf %34, %38 : vector<8x128xf32>
    %40 = arith.addi %4, %c0_i32_6 : i32
    %41 = vector.broadcast %40 : i32 to vector<8x1xi32>
    %42 = arith.cmpi slt, %41, %3 : vector<8x1xi32>
    %43 = vector.shape_cast %42 : vector<8x1xi1> to vector<8x1xi1>
    %44 = vector.broadcast %43 : vector<8x1xi1> to vector<8x128xi1>
    %45 = arith.select %44, %39, %5 : vector<8x128xi1>, vector<8x128xf32>
    %46 = vector.shape_cast %42 : vector<8x1xi1> to vector<8x1xi1>
    %47 = vector.broadcast %46 : vector<8x1xi1> to vector<8x128xi1>
    %48 = arith.select %47, %37, %6 : vector<8x128xi1>, vector<8x128xf32>
    %cst_14 = arith.constant 0.000000e+00 : f32
    %49 = vector.shape_cast %42 : vector<8x1xi1> to vector<8x1xi1>
    %50 = vector.broadcast %49 : vector<8x1xi1> to vector<8x128xi1>
    %51 = vector.broadcast %cst_14 : f32 to vector<8x128xf32>
    %52 = arith.select %50, %39, %51 : vector<8x128xi1>, vector<8x128xf32>
    %53 = arith.truncf %52 : vector<8x128xf32> to vector<8x128xbf16>
    %54 = arith.index_cast %c0_i32_6 : i32 to index
    %c0_15 = arith.constant 0 : index
    %c0_16 = arith.constant 0 : index
    %55 = vector.load %arg5[%54, %c0_15, %c0_16] : memref<8x8x128xbf16, #tpu.memory_space<vmem>>, vector<1x8x128xbf16>
    %56 = vector.shape_cast %55 : vector<1x8x128xbf16> to vector<8x128xbf16>
    %57 = vector.shape_cast %53 : vector<8x128xbf16> to vector<1x8x128xbf16>
    tpu.vector_store %arg5[%54, %c0_15, %c0_16], %57 {strides = array<i32>} : memref<8x8x128xbf16, #tpu.memory_space<vmem>>, vector<1x8x128xbf16>,
    %c1_i32 = arith.constant 1 : i32
    %58 = arith.index_cast %c1_i32 : i32 to index
    %c0_17 = arith.constant 0 : index
    %c0_18 = arith.constant 0 : index
    %59 = vector.load %arg2[%58, %c0_17, %c0_18] : memref<8x8x512xbf16, #tpu.memory_space<vmem>>, vector<1x8x512xbf16>
    %60 = vector.shape_cast %59 : vector<1x8x512xbf16> to vector<8x512xbf16>
    %61 = arith.extf %60 : vector<8x512xbf16> to vector<8x512xf32>
    %62 = arith.truncf %45 : vector<8x128xf32> to vector<8x128xbf16>
    %c0_19 = arith.constant 0 : index
    %c0_20 = arith.constant 0 : index
    %63 = vector.load %arg4[%c0_19, %c0_20] : memref<128x512xbf16, #tpu.memory_space<vmem>>, vector<128x512xbf16>
    %cst_21 = arith.constant dense<0.000000e+00> : vector<8x512xf32>
    %64 = tpu.matmul %62, %63, %cst_21 {dimension_numbers = #tpu.dot_dimension_numbers<[1], [0], [0], [1], [0, 0, 1, 1], [], []>} : vector<8x128xbf16>, vector<128x512xbf16>, vector<8x512xf32> -> vector<8x512xf32>
    %65 = arith.addf %61, %64 : vector<8x512xf32>
    %66 = vector.extract_strided_slice %65 {offsets = [0, 0], sizes = [8, 128], strides = [1, 1]} : vector<8x512xf32> to vector<8x128xf32>
    %67 = arith.negf %66 : vector<8x128xf32>
    %68 = math.exp %67 : vector<8x128xf32>
    %cst_22 = arith.constant 1.000000e+00 : f32
    %69 = vector.broadcast %cst_22 : f32 to vector<8x128xf32>
    %70 = arith.addf %69, %68 : vector<8x128xf32>
    %71 = arith.divf %69, %70 : vector<8x128xf32>
    %72 = vector.extract_strided_slice %65 {offsets = [0, 128], sizes = [8, 128], strides = [1, 1]} : vector<8x512xf32> to vector<8x128xf32>
    %73 = arith.negf %72 : vector<8x128xf32>
    %74 = math.exp %73 : vector<8x128xf32>
    %cst_23 = arith.constant 1.000000e+00 : f32
    %75 = vector.broadcast %cst_23 : f32 to vector<8x128xf32>
    %76 = arith.addf %75, %74 : vector<8x128xf32>
    %77 = arith.divf %75, %76 : vector<8x128xf32>
    %78 = vector.extract_strided_slice %65 {offsets = [0, 256], sizes = [8, 128], strides = [1, 1]} : vector<8x512xf32> to vector<8x128xf32>
    %79 = math.tanh %78 : vector<8x128xf32>
    %80 = vector.extract_strided_slice %65 {offsets = [0, 384], sizes = [8, 128], strides = [1, 1]} : vector<8x512xf32> to vector<8x128xf32>
    %81 = arith.negf %80 : vector<8x128xf32>
    %82 = math.exp %81 : vector<8x128xf32>
    %cst_24 = arith.constant 1.000000e+00 : f32
    %83 = vector.broadcast %cst_24 : f32 to vector<8x128xf32>
    %84 = arith.addf %83, %82 : vector<8x128xf32>
    %85 = arith.divf %83, %84 : vector<8x128xf32>
    %86 = arith.mulf %77, %48 : vector<8x128xf32>
    %87 = arith.mulf %71, %79 : vector<8x128xf32>
    %88 = arith.addf %86, %87 : vector<8x128xf32>
    %89 = math.tanh %88 : vector<8x128xf32>
    %90 = arith.mulf %85, %89 : vector<8x128xf32>
    %91 = arith.addi %4, %c1_i32 : i32
    %92 = vector.broadcast %91 : i32 to vector<8x1xi32>
    %93 = arith.cmpi slt, %92, %3 : vector<8x1xi32>
    %94 = vector.shape_cast %93 : vector<8x1xi1> to vector<8x1xi1>
    %95 = vector.broadcast %94 : vector<8x1xi1> to vector<8x128xi1>
    %96 = arith.select %95, %90, %45 : vector<8x128xi1>, vector<8x128xf32>
    %97 = vector.shape_cast %93 : vector<8x1xi1> to vector<8x1xi1>
    %98 = vector.broadcast %97 : vector<8x1xi1> to vector<8x128xi1>
    %99 = arith.select %98, %88, %48 : vector<8x128xi1>, vector<8x128xf32>
    %cst_25 = arith.constant 0.000000e+00 : f32
    %100 = vector.shape_cast %93 : vector<8x1xi1> to vector<8x1xi1>
    %101 = vector.broadcast %100 : vector<8x1xi1> to vector<8x128xi1>
    %102 = vector.broadcast %cst_25 : f32 to vector<8x128xf32>
    %103 = arith.select %101, %90, %102 : vector<8x128xi1>, vector<8x128xf32>
    %104 = arith.truncf %103 : vector<8x128xf32> to vector<8x128xbf16>
    %105 = arith.index_cast %c1_i32 : i32 to index
    %c0_26 = arith.constant 0 : index
    %c0_27 = arith.constant 0 : index
    %106 = vector.load %arg5[%105, %c0_26, %c0_27] : memref<8x8x128xbf16, #tpu.memory_space<vmem>>, vector<1x8x128xbf16>
    %107 = vector.shape_cast %106 : vector<1x8x128xbf16> to vector<8x128xbf16>
    %108 = vector.shape_cast %104 : vector<8x128xbf16> to vector<1x8x128xbf16>
    tpu.vector_store %arg5[%105, %c0_26, %c0_27], %108 {strides = array<i32>} : memref<8x8x128xbf16, #tpu.memory_space<vmem>>, vector<1x8x128xbf16>,
    %c2_i32 = arith.constant 2 : i32
    %109 = arith.index_cast %c2_i32 : i32 to index
    %c0_28 = arith.constant 0 : index
    %c0_29 = arith.constant 0 : index
    %110 = vector.load %arg2[%109, %c0_28, %c0_29] : memref<8x8x512xbf16, #tpu.memory_space<vmem>>, vector<1x8x512xbf16>
    %111 = vector.shape_cast %110 : vector<1x8x512xbf16> to vector<8x512xbf16>
    %112 = arith.extf %111 : vector<8x512xbf16> to vector<8x512xf32>
    %113 = arith.truncf %96 : vector<8x128xf32> to vector<8x128xbf16>
    %c0_30 = arith.constant 0 : index
    %c0_31 = arith.constant 0 : index
    %114 = vector.load %arg4[%c0_30, %c0_31] : memref<128x512xbf16, #tpu.memory_space<vmem>>, vector<128x512xbf16>
    %cst_32 = arith.constant dense<0.000000e+00> : vector<8x512xf32>
    %115 = tpu.matmul %113, %114, %cst_32 {dimension_numbers = #tpu.dot_dimension_numbers<[1], [0], [0], [1], [0, 0, 1, 1], [], []>} : vector<8x128xbf16>, vector<128x512xbf16>, vector<8x512xf32> -> vector<8x512xf32>
    %116 = arith.addf %112, %115 : vector<8x512xf32>
    %117 = vector.extract_strided_slice %116 {offsets = [0, 0], sizes = [8, 128], strides = [1, 1]} : vector<8x512xf32> to vector<8x128xf32>
    %118 = arith.negf %117 : vector<8x128xf32>
    %119 = math.exp %118 : vector<8x128xf32>
    %cst_33 = arith.constant 1.000000e+00 : f32
    %120 = vector.broadcast %cst_33 : f32 to vector<8x128xf32>
    %121 = arith.addf %120, %119 : vector<8x128xf32>
    %122 = arith.divf %120, %121 : vector<8x128xf32>
    %123 = vector.extract_strided_slice %116 {offsets = [0, 128], sizes = [8, 128], strides = [1, 1]} : vector<8x512xf32> to vector<8x128xf32>
    %124 = arith.negf %123 : vector<8x128xf32>
    %125 = math.exp %124 : vector<8x128xf32>
    %cst_34 = arith.constant 1.000000e+00 : f32
    %126 = vector.broadcast %cst_34 : f32 to vector<8x128xf32>
    %127 = arith.addf %126, %125 : vector<8x128xf32>
    %128 = arith.divf %126, %127 : vector<8x128xf32>
    %129 = vector.extract_strided_slice %116 {offsets = [0, 256], sizes = [8, 128], strides = [1, 1]} : vector<8x512xf32> to vector<8x128xf32>
    %130 = math.tanh %129 : vector<8x128xf32>
    %131 = vector.extract_strided_slice %116 {offsets = [0, 384], sizes = [8, 128], strides = [1, 1]} : vector<8x512xf32> to vector<8x128xf32>
    %132 = arith.negf %131 : vector<8x128xf32>
    %133 = math.exp %132 : vector<8x128xf32>
    %cst_35 = arith.constant 1.000000e+00 : f32
    %134 = vector.broadcast %cst_35 : f32 to vector<8x128xf32>
    %135 = arith.addf %134, %133 : vector<8x128xf32>
    %136 = arith.divf %134, %135 : vector<8x128xf32>
    %137 = arith.mulf %128, %99 : vector<8x128xf32>
    %138 = arith.mulf %122, %130 : vector<8x128xf32>
    %139 = arith.addf %137, %138 : vector<8x128xf32>
    %140 = math.tanh %139 : vector<8x128xf32>
    %141 = arith.mulf %136, %140 : vector<8x128xf32>
    %142 = arith.addi %4, %c2_i32 : i32
    %143 = vector.broadcast %142 : i32 to vector<8x1xi32>
    %144 = arith.cmpi slt, %143, %3 : vector<8x1xi32>
    %145 = vector.shape_cast %144 : vector<8x1xi1> to vector<8x1xi1>
    %146 = vector.broadcast %145 : vector<8x1xi1> to vector<8x128xi1>
    %147 = arith.select %146, %141, %96 : vector<8x128xi1>, vector<8x128xf32>
    %148 = vector.shape_cast %144 : vector<8x1xi1> to vector<8x1xi1>
    %149 = vector.broadcast %148 : vector<8x1xi1> to vector<8x128xi1>
    %150 = arith.select %149, %139, %99 : vector<8x128xi1>, vector<8x128xf32>
    %cst_36 = arith.constant 0.000000e+00 : f32
    %151 = vector.shape_cast %144 : vector<8x1xi1> to vector<8x1xi1>
    %152 = vector.broadcast %151 : vector<8x1xi1> to vector<8x128xi1>
    %153 = vector.broadcast %cst_36 : f32 to vector<8x128xf32>
    %154 = arith.select %152, %141, %153 : vector<8x128xi1>, vector<8x128xf32>
    %155 = arith.truncf %154 : vector<8x128xf32> to vector<8x128xbf16>
    %156 = arith.index_cast %c2_i32 : i32 to index
    %c0_37 = arith.constant 0 : index
    %c0_38 = arith.constant 0 : index
    %157 = vector.load %arg5[%156, %c0_37, %c0_38] : memref<8x8x128xbf16, #tpu.memory_space<vmem>>, vector<1x8x128xbf16>
    %158 = vector.shape_cast %157 : vector<1x8x128xbf16> to vector<8x128xbf16>
    %159 = vector.shape_cast %155 : vector<8x128xbf16> to vector<1x8x128xbf16>
    tpu.vector_store %arg5[%156, %c0_37, %c0_38], %159 {strides = array<i32>} : memref<8x8x128xbf16, #tpu.memory_space<vmem>>, vector<1x8x128xbf16>,
    %c3_i32 = arith.constant 3 : i32
    %160 = arith.index_cast %c3_i32 : i32 to index
    %c0_39 = arith.constant 0 : index
    %c0_40 = arith.constant 0 : index
    %161 = vector.load %arg2[%160, %c0_39, %c0_40] : memref<8x8x512xbf16, #tpu.memory_space<vmem>>, vector<1x8x512xbf16>
    %162 = vector.shape_cast %161 : vector<1x8x512xbf16> to vector<8x512xbf16>
    %163 = arith.extf %162 : vector<8x512xbf16> to vector<8x512xf32>
    %164 = arith.truncf %147 : vector<8x128xf32> to vector<8x128xbf16>
    %c0_41 = arith.constant 0 : index
    %c0_42 = arith.constant 0 : index
    %165 = vector.load %arg4[%c0_41, %c0_42] : memref<128x512xbf16, #tpu.memory_space<vmem>>, vector<128x512xbf16>
    %cst_43 = arith.constant dense<0.000000e+00> : vector<8x512xf32>
    %166 = tpu.matmul %164, %165, %cst_43 {dimension_numbers = #tpu.dot_dimension_numbers<[1], [0], [0], [1], [0, 0, 1, 1], [], []>} : vector<8x128xbf16>, vector<128x512xbf16>, vector<8x512xf32> -> vector<8x512xf32>
    %167 = arith.addf %163, %166 : vector<8x512xf32>
    %168 = vector.extract_strided_slice %167 {offsets = [0, 0], sizes = [8, 128], strides = [1, 1]} : vector<8x512xf32> to vector<8x128xf32>
    %169 = arith.negf %168 : vector<8x128xf32>
    %170 = math.exp %169 : vector<8x128xf32>
    %cst_44 = arith.constant 1.000000e+00 : f32
    %171 = vector.broadcast %cst_44 : f32 to vector<8x128xf32>
    %172 = arith.addf %171, %170 : vector<8x128xf32>
    %173 = arith.divf %171, %172 : vector<8x128xf32>
    %174 = vector.extract_strided_slice %167 {offsets = [0, 128], sizes = [8, 128], strides = [1, 1]} : vector<8x512xf32> to vector<8x128xf32>
    %175 = arith.negf %174 : vector<8x128xf32>
    %176 = math.exp %175 : vector<8x128xf32>
    %cst_45 = arith.constant 1.000000e+00 : f32
    %177 = vector.broadcast %cst_45 : f32 to vector<8x128xf32>
    %178 = arith.addf %177, %176 : vector<8x128xf32>
    %179 = arith.divf %177, %178 : vector<8x128xf32>
    %180 = vector.extract_strided_slice %167 {offsets = [0, 256], sizes = [8, 128], strides = [1, 1]} : vector<8x512xf32> to vector<8x128xf32>
    %181 = math.tanh %180 : vector<8x128xf32>
    %182 = vector.extract_strided_slice %167 {offsets = [0, 384], sizes = [8, 128], strides = [1, 1]} : vector<8x512xf32> to vector<8x128xf32>
    %183 = arith.negf %182 : vector<8x128xf32>
    %184 = math.exp %183 : vector<8x128xf32>
    %cst_46 = arith.constant 1.000000e+00 : f32
    %185 = vector.broadcast %cst_46 : f32 to vector<8x128xf32>
    %186 = arith.addf %185, %184 : vector<8x128xf32>
    %187 = arith.divf %185, %186 : vector<8x128xf32>
    %188 = arith.mulf %179, %150 : vector<8x128xf32>
    %189 = arith.mulf %173, %181 : vector<8x128xf32>
    %190 = arith.addf %188, %189 : vector<8x128xf32>
    %191 = math.tanh %190 : vector<8x128xf32>
    %192 = arith.mulf %187, %191 : vector<8x128xf32>
    %193 = arith.addi %4, %c3_i32 : i32
    %194 = vector.broadcast %193 : i32 to vector<8x1xi32>
    %195 = arith.cmpi slt, %194, %3 : vector<8x1xi32>
    %196 = vector.shape_cast %195 : vector<8x1xi1> to vector<8x1xi1>
    %197 = vector.broadcast %196 : vector<8x1xi1> to vector<8x128xi1>
    %198 = arith.select %197, %192, %147 : vector<8x128xi1>, vector<8x128xf32>
    %199 = vector.shape_cast %195 : vector<8x1xi1> to vector<8x1xi1>
    %200 = vector.broadcast %199 : vector<8x1xi1> to vector<8x128xi1>
    %201 = arith.select %200, %190, %150 : vector<8x128xi1>, vector<8x128xf32>
    %cst_47 = arith.constant 0.000000e+00 : f32
    %202 = vector.shape_cast %195 : vector<8x1xi1> to vector<8x1xi1>
    %203 = vector.broadcast %202 : vector<8x1xi1> to vector<8x128xi1>
    %204 = vector.broadcast %cst_47 : f32 to vector<8x128xf32>
    %205 = arith.select %203, %192, %204 : vector<8x128xi1>, vector<8x128xf32>
    %206 = arith.truncf %205 : vector<8x128xf32> to vector<8x128xbf16>
    %207 = arith.index_cast %c3_i32 : i32 to index
    %c0_48 = arith.constant 0 : index
    %c0_49 = arith.constant 0 : index
    %208 = vector.load %arg5[%207, %c0_48, %c0_49] : memref<8x8x128xbf16, #tpu.memory_space<vmem>>, vector<1x8x128xbf16>
    %209 = vector.shape_cast %208 : vector<1x8x128xbf16> to vector<8x128xbf16>
    %210 = vector.shape_cast %206 : vector<8x128xbf16> to vector<1x8x128xbf16>
    tpu.vector_store %arg5[%207, %c0_48, %c0_49], %210 {strides = array<i32>} : memref<8x8x128xbf16, #tpu.memory_space<vmem>>, vector<1x8x128xbf16>,
    %c4_i32 = arith.constant 4 : i32
    %211 = arith.index_cast %c4_i32 : i32 to index
    %c0_50 = arith.constant 0 : index
    %c0_51 = arith.constant 0 : index
    %212 = vector.load %arg2[%211, %c0_50, %c0_51] : memref<8x8x512xbf16, #tpu.memory_space<vmem>>, vector<1x8x512xbf16>
    %213 = vector.shape_cast %212 : vector<1x8x512xbf16> to vector<8x512xbf16>
    %214 = arith.extf %213 : vector<8x512xbf16> to vector<8x512xf32>
    %215 = arith.truncf %198 : vector<8x128xf32> to vector<8x128xbf16>
    %c0_52 = arith.constant 0 : index
    %c0_53 = arith.constant 0 : index
    %216 = vector.load %arg4[%c0_52, %c0_53] : memref<128x512xbf16, #tpu.memory_space<vmem>>, vector<128x512xbf16>
    %cst_54 = arith.constant dense<0.000000e+00> : vector<8x512xf32>
    %217 = tpu.matmul %215, %216, %cst_54 {dimension_numbers = #tpu.dot_dimension_numbers<[1], [0], [0], [1], [0, 0, 1, 1], [], []>} : vector<8x128xbf16>, vector<128x512xbf16>, vector<8x512xf32> -> vector<8x512xf32>
    %218 = arith.addf %214, %217 : vector<8x512xf32>
    %219 = vector.extract_strided_slice %218 {offsets = [0, 0], sizes = [8, 128], strides = [1, 1]} : vector<8x512xf32> to vector<8x128xf32>
    %220 = arith.negf %219 : vector<8x128xf32>
    %221 = math.exp %220 : vector<8x128xf32>
    %cst_55 = arith.constant 1.000000e+00 : f32
    %222 = vector.broadcast %cst_55 : f32 to vector<8x128xf32>
    %223 = arith.addf %222, %221 : vector<8x128xf32>
    %224 = arith.divf %222, %223 : vector<8x128xf32>
    %225 = vector.extract_strided_slice %218 {offsets = [0, 128], sizes = [8, 128], strides = [1, 1]} : vector<8x512xf32> to vector<8x128xf32>
    %226 = arith.negf %225 : vector<8x128xf32>
    %227 = math.exp %226 : vector<8x128xf32>
    %cst_56 = arith.constant 1.000000e+00 : f32
    %228 = vector.broadcast %cst_56 : f32 to vector<8x128xf32>
    %229 = arith.addf %228, %227 : vector<8x128xf32>
    %230 = arith.divf %228, %229 : vector<8x128xf32>
    %231 = vector.extract_strided_slice %218 {offsets = [0, 256], sizes = [8, 128], strides = [1, 1]} : vector<8x512xf32> to vector<8x128xf32>
    %232 = math.tanh %231 : vector<8x128xf32>
    %233 = vector.extract_strided_slice %218 {offsets = [0, 384], sizes = [8, 128], strides = [1, 1]} : vector<8x512xf32> to vector<8x128xf32>
    %234 = arith.negf %233 : vector<8x128xf32>
    %235 = math.exp %234 : vector<8x128xf32>
    %cst_57 = arith.constant 1.000000e+00 : f32
    %236 = vector.broadcast %cst_57 : f32 to vector<8x128xf32>
    %237 = arith.addf %236, %235 : vector<8x128xf32>
    %238 = arith.divf %236, %237 : vector<8x128xf32>
    %239 = arith.mulf %230, %201 : vector<8x128xf32>
    %240 = arith.mulf %224, %232 : vector<8x128xf32>
    %241 = arith.addf %239, %240 : vector<8x128xf32>
    %242 = math.tanh %241 : vector<8x128xf32>
    %243 = arith.mulf %238, %242 : vector<8x128xf32>
    %244 = arith.addi %4, %c4_i32 : i32
    %245 = vector.broadcast %244 : i32 to vector<8x1xi32>
    %246 = arith.cmpi slt, %245, %3 : vector<8x1xi32>
    %247 = vector.shape_cast %246 : vector<8x1xi1> to vector<8x1xi1>
    %248 = vector.broadcast %247 : vector<8x1xi1> to vector<8x128xi1>
    %249 = arith.select %248, %243, %198 : vector<8x128xi1>, vector<8x128xf32>
    %250 = vector.shape_cast %246 : vector<8x1xi1> to vector<8x1xi1>
    %251 = vector.broadcast %250 : vector<8x1xi1> to vector<8x128xi1>
    %252 = arith.select %251, %241, %201 : vector<8x128xi1>, vector<8x128xf32>
    %cst_58 = arith.constant 0.000000e+00 : f32
    %253 = vector.shape_cast %246 : vector<8x1xi1> to vector<8x1xi1>
    %254 = vector.broadcast %253 : vector<8x1xi1> to vector<8x128xi1>
    %255 = vector.broadcast %cst_58 : f32 to vector<8x128xf32>
    %256 = arith.select %254, %243, %255 : vector<8x128xi1>, vector<8x128xf32>
    %257 = arith.truncf %256 : vector<8x128xf32> to vector<8x128xbf16>
    %258 = arith.index_cast %c4_i32 : i32 to index
    %c0_59 = arith.constant 0 : index
    %c0_60 = arith.constant 0 : index
    %259 = vector.load %arg5[%258, %c0_59, %c0_60] : memref<8x8x128xbf16, #tpu.memory_space<vmem>>, vector<1x8x128xbf16>
    %260 = vector.shape_cast %259 : vector<1x8x128xbf16> to vector<8x128xbf16>
    %261 = vector.shape_cast %257 : vector<8x128xbf16> to vector<1x8x128xbf16>
    tpu.vector_store %arg5[%258, %c0_59, %c0_60], %261 {strides = array<i32>} : memref<8x8x128xbf16, #tpu.memory_space<vmem>>, vector<1x8x128xbf16>,
    %c5_i32 = arith.constant 5 : i32
    %262 = arith.index_cast %c5_i32 : i32 to index
    %c0_61 = arith.constant 0 : index
    %c0_62 = arith.constant 0 : index
    %263 = vector.load %arg2[%262, %c0_61, %c0_62] : memref<8x8x512xbf16, #tpu.memory_space<vmem>>, vector<1x8x512xbf16>
    %264 = vector.shape_cast %263 : vector<1x8x512xbf16> to vector<8x512xbf16>
    %265 = arith.extf %264 : vector<8x512xbf16> to vector<8x512xf32>
    %266 = arith.truncf %249 : vector<8x128xf32> to vector<8x128xbf16>
    %c0_63 = arith.constant 0 : index
    %c0_64 = arith.constant 0 : index
    %267 = vector.load %arg4[%c0_63, %c0_64] : memref<128x512xbf16, #tpu.memory_space<vmem>>, vector<128x512xbf16>
    %cst_65 = arith.constant dense<0.000000e+00> : vector<8x512xf32>
    %268 = tpu.matmul %266, %267, %cst_65 {dimension_numbers = #tpu.dot_dimension_numbers<[1], [0], [0], [1], [0, 0, 1, 1], [], []>} : vector<8x128xbf16>, vector<128x512xbf16>, vector<8x512xf32> -> vector<8x512xf32>
    %269 = arith.addf %265, %268 : vector<8x512xf32>
    %270 = vector.extract_strided_slice %269 {offsets = [0, 0], sizes = [8, 128], strides = [1, 1]} : vector<8x512xf32> to vector<8x128xf32>
    %271 = arith.negf %270 : vector<8x128xf32>
    %272 = math.exp %271 : vector<8x128xf32>
    %cst_66 = arith.constant 1.000000e+00 : f32
    %273 = vector.broadcast %cst_66 : f32 to vector<8x128xf32>
    %274 = arith.addf %273, %272 : vector<8x128xf32>
    %275 = arith.divf %273, %274 : vector<8x128xf32>
    %276 = vector.extract_strided_slice %269 {offsets = [0, 128], sizes = [8, 128], strides = [1, 1]} : vector<8x512xf32> to vector<8x128xf32>
    %277 = arith.negf %276 : vector<8x128xf32>
    %278 = math.exp %277 : vector<8x128xf32>
    %cst_67 = arith.constant 1.000000e+00 : f32
    %279 = vector.broadcast %cst_67 : f32 to vector<8x128xf32>
    %280 = arith.addf %279, %278 : vector<8x128xf32>
    %281 = arith.divf %279, %280 : vector<8x128xf32>
    %282 = vector.extract_strided_slice %269 {offsets = [0, 256], sizes = [8, 128], strides = [1, 1]} : vector<8x512xf32> to vector<8x128xf32>
    %283 = math.tanh %282 : vector<8x128xf32>
    %284 = vector.extract_strided_slice %269 {offsets = [0, 384], sizes = [8, 128], strides = [1, 1]} : vector<8x512xf32> to vector<8x128xf32>
    %285 = arith.negf %284 : vector<8x128xf32>
    %286 = math.exp %285 : vector<8x128xf32>
    %cst_68 = arith.constant 1.000000e+00 : f32
    %287 = vector.broadcast %cst_68 : f32 to vector<8x128xf32>
    %288 = arith.addf %287, %286 : vector<8x128xf32>
    %289 = arith.divf %287, %288 : vector<8x128xf32>
    %290 = arith.mulf %281, %252 : vector<8x128xf32>
    %291 = arith.mulf %275, %283 : vector<8x128xf32>
    %292 = arith.addf %290, %291 : vector<8x128xf32>
    %293 = math.tanh %292 : vector<8x128xf32>
    %294 = arith.mulf %289, %293 : vector<8x128xf32>
    %295 = arith.addi %4, %c5_i32 : i32
    %296 = vector.broadcast %295 : i32 to vector<8x1xi32>
    %297 = arith.cmpi slt, %296, %3 : vector<8x1xi32>
    %298 = vector.shape_cast %297 : vector<8x1xi1> to vector<8x1xi1>
    %299 = vector.broadcast %298 : vector<8x1xi1> to vector<8x128xi1>
    %300 = arith.select %299, %294, %249 : vector<8x128xi1>, vector<8x128xf32>
    %301 = vector.shape_cast %297 : vector<8x1xi1> to vector<8x1xi1>
    %302 = vector.broadcast %301 : vector<8x1xi1> to vector<8x128xi1>
    %303 = arith.select %302, %292, %252 : vector<8x128xi1>, vector<8x128xf32>
    %cst_69 = arith.constant 0.000000e+00 : f32
    %304 = vector.shape_cast %297 : vector<8x1xi1> to vector<8x1xi1>
    %305 = vector.broadcast %304 : vector<8x1xi1> to vector<8x128xi1>
    %306 = vector.broadcast %cst_69 : f32 to vector<8x128xf32>
    %307 = arith.select %305, %294, %306 : vector<8x128xi1>, vector<8x128xf32>
    %308 = arith.truncf %307 : vector<8x128xf32> to vector<8x128xbf16>
    %309 = arith.index_cast %c5_i32 : i32 to index
    %c0_70 = arith.constant 0 : index
    %c0_71 = arith.constant 0 : index
    %310 = vector.load %arg5[%309, %c0_70, %c0_71] : memref<8x8x128xbf16, #tpu.memory_space<vmem>>, vector<1x8x128xbf16>
    %311 = vector.shape_cast %310 : vector<1x8x128xbf16> to vector<8x128xbf16>
    %312 = vector.shape_cast %308 : vector<8x128xbf16> to vector<1x8x128xbf16>
    tpu.vector_store %arg5[%309, %c0_70, %c0_71], %312 {strides = array<i32>} : memref<8x8x128xbf16, #tpu.memory_space<vmem>>, vector<1x8x128xbf16>,
    %c6_i32 = arith.constant 6 : i32
    %313 = arith.index_cast %c6_i32 : i32 to index
    %c0_72 = arith.constant 0 : index
    %c0_73 = arith.constant 0 : index
    %314 = vector.load %arg2[%313, %c0_72, %c0_73] : memref<8x8x512xbf16, #tpu.memory_space<vmem>>, vector<1x8x512xbf16>
    %315 = vector.shape_cast %314 : vector<1x8x512xbf16> to vector<8x512xbf16>
    %316 = arith.extf %315 : vector<8x512xbf16> to vector<8x512xf32>
    %317 = arith.truncf %300 : vector<8x128xf32> to vector<8x128xbf16>
    %c0_74 = arith.constant 0 : index
    %c0_75 = arith.constant 0 : index
    %318 = vector.load %arg4[%c0_74, %c0_75] : memref<128x512xbf16, #tpu.memory_space<vmem>>, vector<128x512xbf16>
    %cst_76 = arith.constant dense<0.000000e+00> : vector<8x512xf32>
    %319 = tpu.matmul %317, %318, %cst_76 {dimension_numbers = #tpu.dot_dimension_numbers<[1], [0], [0], [1], [0, 0, 1, 1], [], []>} : vector<8x128xbf16>, vector<128x512xbf16>, vector<8x512xf32> -> vector<8x512xf32>
    %320 = arith.addf %316, %319 : vector<8x512xf32>
    %321 = vector.extract_strided_slice %320 {offsets = [0, 0], sizes = [8, 128], strides = [1, 1]} : vector<8x512xf32> to vector<8x128xf32>
    %322 = arith.negf %321 : vector<8x128xf32>
    %323 = math.exp %322 : vector<8x128xf32>
    %cst_77 = arith.constant 1.000000e+00 : f32
    %324 = vector.broadcast %cst_77 : f32 to vector<8x128xf32>
    %325 = arith.addf %324, %323 : vector<8x128xf32>
    %326 = arith.divf %324, %325 : vector<8x128xf32>
    %327 = vector.extract_strided_slice %320 {offsets = [0, 128], sizes = [8, 128], strides = [1, 1]} : vector<8x512xf32> to vector<8x128xf32>
    %328 = arith.negf %327 : vector<8x128xf32>
    %329 = math.exp %328 : vector<8x128xf32>
    %cst_78 = arith.constant 1.000000e+00 : f32
    %330 = vector.broadcast %cst_78 : f32 to vector<8x128xf32>
    %331 = arith.addf %330, %329 : vector<8x128xf32>
    %332 = arith.divf %330, %331 : vector<8x128xf32>
    %333 = vector.extract_strided_slice %320 {offsets = [0, 256], sizes = [8, 128], strides = [1, 1]} : vector<8x512xf32> to vector<8x128xf32>
    %334 = math.tanh %333 : vector<8x128xf32>
    %335 = vector.extract_strided_slice %320 {offsets = [0, 384], sizes = [8, 128], strides = [1, 1]} : vector<8x512xf32> to vector<8x128xf32>
    %336 = arith.negf %335 : vector<8x128xf32>
    %337 = math.exp %336 : vector<8x128xf32>
    %cst_79 = arith.constant 1.000000e+00 : f32
    %338 = vector.broadcast %cst_79 : f32 to vector<8x128xf32>
    %339 = arith.addf %338, %337 : vector<8x128xf32>
    %340 = arith.divf %338, %339 : vector<8x128xf32>
    %341 = arith.mulf %332, %303 : vector<8x128xf32>
    %342 = arith.mulf %326, %334 : vector<8x128xf32>
    %343 = arith.addf %341, %342 : vector<8x128xf32>
    %344 = math.tanh %343 : vector<8x128xf32>
    %345 = arith.mulf %340, %344 : vector<8x128xf32>
    %346 = arith.addi %4, %c6_i32 : i32
    %347 = vector.broadcast %346 : i32 to vector<8x1xi32>
    %348 = arith.cmpi slt, %347, %3 : vector<8x1xi32>
    %349 = vector.shape_cast %348 : vector<8x1xi1> to vector<8x1xi1>
    %350 = vector.broadcast %349 : vector<8x1xi1> to vector<8x128xi1>
    %351 = arith.select %350, %345, %300 : vector<8x128xi1>, vector<8x128xf32>
    %352 = vector.shape_cast %348 : vector<8x1xi1> to vector<8x1xi1>
    %353 = vector.broadcast %352 : vector<8x1xi1> to vector<8x128xi1>
    %354 = arith.select %353, %343, %303 : vector<8x128xi1>, vector<8x128xf32>
    %cst_80 = arith.constant 0.000000e+00 : f32
    %355 = vector.shape_cast %348 : vector<8x1xi1> to vector<8x1xi1>
    %356 = vector.broadcast %355 : vector<8x1xi1> to vector<8x128xi1>
    %357 = vector.broadcast %cst_80 : f32 to vector<8x128xf32>
    %358 = arith.select %356, %345, %357 : vector<8x128xi1>, vector<8x128xf32>
    %359 = arith.truncf %358 : vector<8x128xf32> to vector<8x128xbf16>
    %360 = arith.index_cast %c6_i32 : i32 to index
    %c0_81 = arith.constant 0 : index
    %c0_82 = arith.constant 0 : index
    %361 = vector.load %arg5[%360, %c0_81, %c0_82] : memref<8x8x128xbf16, #tpu.memory_space<vmem>>, vector<1x8x128xbf16>
    %362 = vector.shape_cast %361 : vector<1x8x128xbf16> to vector<8x128xbf16>
    %363 = vector.shape_cast %359 : vector<8x128xbf16> to vector<1x8x128xbf16>
    tpu.vector_store %arg5[%360, %c0_81, %c0_82], %363 {strides = array<i32>} : memref<8x8x128xbf16, #tpu.memory_space<vmem>>, vector<1x8x128xbf16>,
    %c7_i32 = arith.constant 7 : i32
    %364 = arith.index_cast %c7_i32 : i32 to index
    %c0_83 = arith.constant 0 : index
    %c0_84 = arith.constant 0 : index
    %365 = vector.load %arg2[%364, %c0_83, %c0_84] : memref<8x8x512xbf16, #tpu.memory_space<vmem>>, vector<1x8x512xbf16>
    %366 = vector.shape_cast %365 : vector<1x8x512xbf16> to vector<8x512xbf16>
    %367 = arith.extf %366 : vector<8x512xbf16> to vector<8x512xf32>
    %368 = arith.truncf %351 : vector<8x128xf32> to vector<8x128xbf16>
    %c0_85 = arith.constant 0 : index
    %c0_86 = arith.constant 0 : index
    %369 = vector.load %arg4[%c0_85, %c0_86] : memref<128x512xbf16, #tpu.memory_space<vmem>>, vector<128x512xbf16>
    %cst_87 = arith.constant dense<0.000000e+00> : vector<8x512xf32>
    %370 = tpu.matmul %368, %369, %cst_87 {dimension_numbers = #tpu.dot_dimension_numbers<[1], [0], [0], [1], [0, 0, 1, 1], [], []>} : vector<8x128xbf16>, vector<128x512xbf16>, vector<8x512xf32> -> vector<8x512xf32>
    %371 = arith.addf %367, %370 : vector<8x512xf32>
    %372 = vector.extract_strided_slice %371 {offsets = [0, 0], sizes = [8, 128], strides = [1, 1]} : vector<8x512xf32> to vector<8x128xf32>
    %373 = arith.negf %372 : vector<8x128xf32>
    %374 = math.exp %373 : vector<8x128xf32>
    %cst_88 = arith.constant 1.000000e+00 : f32
    %375 = vector.broadcast %cst_88 : f32 to vector<8x128xf32>
    %376 = arith.addf %375, %374 : vector<8x128xf32>
    %377 = arith.divf %375, %376 : vector<8x128xf32>
    %378 = vector.extract_strided_slice %371 {offsets = [0, 128], sizes = [8, 128], strides = [1, 1]} : vector<8x512xf32> to vector<8x128xf32>
    %379 = arith.negf %378 : vector<8x128xf32>
    %380 = math.exp %379 : vector<8x128xf32>
    %cst_89 = arith.constant 1.000000e+00 : f32
    %381 = vector.broadcast %cst_89 : f32 to vector<8x128xf32>
    %382 = arith.addf %381, %380 : vector<8x128xf32>
    %383 = arith.divf %381, %382 : vector<8x128xf32>
    %384 = vector.extract_strided_slice %371 {offsets = [0, 256], sizes = [8, 128], strides = [1, 1]} : vector<8x512xf32> to vector<8x128xf32>
    %385 = math.tanh %384 : vector<8x128xf32>
    %386 = vector.extract_strided_slice %371 {offsets = [0, 384], sizes = [8, 128], strides = [1, 1]} : vector<8x512xf32> to vector<8x128xf32>
    %387 = arith.negf %386 : vector<8x128xf32>
    %388 = math.exp %387 : vector<8x128xf32>
    %cst_90 = arith.constant 1.000000e+00 : f32
    %389 = vector.broadcast %cst_90 : f32 to vector<8x128xf32>
    %390 = arith.addf %389, %388 : vector<8x128xf32>
    %391 = arith.divf %389, %390 : vector<8x128xf32>
    %392 = arith.mulf %383, %354 : vector<8x128xf32>
    %393 = arith.mulf %377, %385 : vector<8x128xf32>
    %394 = arith.addf %392, %393 : vector<8x128xf32>
    %395 = math.tanh %394 : vector<8x128xf32>
    %396 = arith.mulf %391, %395 : vector<8x128xf32>
    %397 = arith.addi %4, %c7_i32 : i32
    %398 = vector.broadcast %397 : i32 to vector<8x1xi32>
    %399 = arith.cmpi slt, %398, %3 : vector<8x1xi32>
    %400 = vector.shape_cast %399 : vector<8x1xi1> to vector<8x1xi1>
    %401 = vector.broadcast %400 : vector<8x1xi1> to vector<8x128xi1>
    %402 = arith.select %401, %396, %351 : vector<8x128xi1>, vector<8x128xf32>
    %403 = vector.shape_cast %399 : vector<8x1xi1> to vector<8x1xi1>
    %404 = vector.broadcast %403 : vector<8x1xi1> to vector<8x128xi1>
    %405 = arith.select %404, %394, %354 : vector<8x128xi1>, vector<8x128xf32>
    %cst_91 = arith.constant 0.000000e+00 : f32
    %406 = vector.shape_cast %399 : vector<8x1xi1> to vector<8x1xi1>
    %407 = vector.broadcast %406 : vector<8x1xi1> to vector<8x128xi1>
    %408 = vector.broadcast %cst_91 : f32 to vector<8x128xf32>
    %409 = arith.select %407, %396, %408 : vector<8x128xi1>, vector<8x128xf32>
    %410 = arith.truncf %409 : vector<8x128xf32> to vector<8x128xbf16>
    %411 = arith.index_cast %c7_i32 : i32 to index
    %c0_92 = arith.constant 0 : index
    %c0_93 = arith.constant 0 : index
    %412 = vector.load %arg5[%411, %c0_92, %c0_93] : memref<8x8x128xbf16, #tpu.memory_space<vmem>>, vector<1x8x128xbf16>
    %413 = vector.shape_cast %412 : vector<1x8x128xbf16> to vector<8x128xbf16>
    %414 = vector.shape_cast %410 : vector<8x128xbf16> to vector<1x8x128xbf16>
    tpu.vector_store %arg5[%411, %c0_92, %c0_93], %414 {strides = array<i32>} : memref<8x8x128xbf16, #tpu.memory_space<vmem>>, vector<1x8x128xbf16>,
    %c8_i32_94 = arith.constant 8 : i32
    %c0_95 = arith.constant 0 : index
    %c0_96 = arith.constant 0 : index
    %415 = vector.load %arg8[%c0_95, %c0_96] : memref<8x128xf32, #tpu.memory_space<vmem>>, vector<8x128xf32>
    tpu.vector_store %arg8[%c0_95, %c0_96], %402 {strides = array<i32>} : memref<8x128xf32, #tpu.memory_space<vmem>>, vector<8x128xf32>,
    %c0_97 = arith.constant 0 : index
    %c0_98 = arith.constant 0 : index
    %416 = vector.load %arg9[%c0_97, %c0_98] : memref<8x128xf32, #tpu.memory_space<vmem>>, vector<8x128xf32>
    tpu.vector_store %arg9[%c0_97, %c0_98], %405 {strides = array<i32>} : memref<8x128xf32, #tpu.memory_space<vmem>>, vector<8x128xf32>,
    %c0_i32_99 = arith.constant 0 : i32
    %417 = arith.cmpi eq, %arg1, %c0_i32_99 : i32
    %418 = arith.extui %417 : i1 to i32
    %c0_i32_100 = arith.constant 0 : i32
    %419 = arith.cmpi ne, %418, %c0_i32_100 : i32
    scf.if %419 {
      %c0_101 = arith.constant 0 : index
      %c0_102 = arith.constant 0 : index
      %420 = vector.load %arg6[%c0_101, %c0_102] : memref<8x128xf32, #tpu.memory_space<vmem>>, vector<8x128xf32>
      tpu.vector_store %arg6[%c0_101, %c0_102], %402 {strides = array<i32>} : memref<8x128xf32, #tpu.memory_space<vmem>>, vector<8x128xf32>,
      %c0_103 = arith.constant 0 : index
      %c0_104 = arith.constant 0 : index
      %421 = vector.load %arg7[%c0_103, %c0_104] : memref<8x128xf32, #tpu.memory_space<vmem>>, vector<8x128xf32>
      tpu.vector_store %arg7[%c0_103, %c0_104], %405 {strides = array<i32>} : memref<8x128xf32, #tpu.memory_space<vmem>>, vector<8x128xf32>,
    } else {
    }
    return
  }
  func.func @transform_0(%arg0: i32, %arg1: i32) -> (i32, i32, i32) {
    %c0_i32 = arith.constant 0 : i32
    %c0_i32_0 = arith.constant 0 : i32
    return %arg1, %arg0, %c0_i32 : i32, i32, i32
  }
  func.func @transform_1(%arg0: i32, %arg1: i32) -> (i32, i32) {
    %c0_i32 = arith.constant 0 : i32
    %c0_i32_0 = arith.constant 0 : i32
    return %arg0, %c0_i32 : i32, i32
  }
  func.func @transform_2(%arg0: i32, %arg1: i32) -> (i32, i32) {
    %c0_i32 = arith.constant 0 : i32
    %c0_i32_0 = arith.constant 0 : i32
    %c0_i32_1 = arith.constant 0 : i32
    return %c0_i32, %c0_i32_0 : i32, i32
  }
  func.func @transform_3(%arg0: i32, %arg1: i32) -> (i32, i32, i32) {
    %c0_i32 = arith.constant 0 : i32
    %c0_i32_0 = arith.constant 0 : i32
    return %arg1, %arg0, %c0_i32 : i32, i32, i32
  }
  func.func @transform_4(%arg0: i32, %arg1: i32) -> (i32, i32) {
    %c0_i32 = arith.constant 0 : i32
    %c0_i32_0 = arith.constant 0 : i32
    return %arg0, %c0_i32 : i32, i32
  }
  func.func @transform_5(%arg0: i32, %arg1: i32) -> (i32, i32) {
    %c0_i32 = arith.constant 0 : i32
    %c0_i32_0 = arith.constant 0 : i32
    return %arg0, %c0_i32 : i32, i32
  }
}

module attributes {stable_mosaic.version = 11 : i64} {
  func.func @_lstm_layer_kernel(%arg0: i32, %arg1: i32, %arg2: memref<8x8x512xbf16, #tpu.memory_space<vmem>>, %arg3: memref<8x1xi32, #tpu.memory_space<vmem>>, %arg4: memref<128x512xbf16, #tpu.memory_space<vmem>>, %arg5: memref<8x8x128xbf16, #tpu.memory_space<vmem>>, %arg6: memref<8x128xf32, #tpu.memory_space<vmem>>, %arg7: memref<8x128xf32, #tpu.memory_space<vmem>>, %arg8: memref<8x128xf32, #tpu.memory_space<vmem>>, %arg9: memref<8x128xf32, #tpu.memory_space<vmem>>) attributes {dimension_semantics = [#tpu.dimension_semantics<parallel>, #tpu.dimension_semantics<arbitrary>], iteration_bounds = array<i64: 1, 1>, scalar_prefetch = 0 : i64, scratch_operands = 2 : i64, tpu.core_type = #tpu.core_type<tc>, window_params = [{transform_indices = @transform_0, window_bounds = array<i64: 8, 8, 512>}, {transform_indices = @transform_1, window_bounds = array<i64: 8, 1>}, {pipeline_mode = #tpu.pipeline_mode<synchronous>, transform_indices = @transform_2, window_bounds = array<i64: 128, 512>}, {transform_indices = @transform_3, window_bounds = array<i64: 8, 8, 128>}, {transform_indices = @transform_4, window_bounds = array<i64: 8, 128>}, {transform_indices = @transform_5, window_bounds = array<i64: 8, 128>}]} {
    %c0_i32 = arith.constant 0 : i32
    %0 = arith.cmpi eq, %arg1, %c0_i32 : i32
    %1 = arith.extui %0 : i1 to i32
    %c0_i32_0 = arith.constant 0 : i32
    %2 = arith.cmpi ne, %1, %c0_i32_0 : i32
    scf.if %2 {
      %cst_101 = arith.constant 0.000000e+00 : f32
      %420 = vector.broadcast %cst_101 : f32 to vector<8x128xf32>
      %c0_102 = arith.constant 0 : index
      %c0_103 = arith.constant 0 : index
      %421 = vector.load %arg8[%c0_102, %c0_103] : memref<8x128xf32, #tpu.memory_space<vmem>>, vector<8x128xf32>
      tpu.vector_store %arg8[%c0_102, %c0_103], %420 {strides = array<i32>} : memref<8x128xf32, #tpu.memory_space<vmem>>, vector<8x128xf32>,
      %cst_104 = arith.constant 0.000000e+00 : f32
      %422 = vector.broadcast %cst_104 : f32 to vector<8x128xf32>
      %c0_105 = arith.constant 0 : index
      %c0_106 = arith.constant 0 : index
      %423 = vector.load %arg9[%c0_105, %c0_106] : memref<8x128xf32, #tpu.memory_space<vmem>>, vector<8x128xf32>
      tpu.vector_store %arg9[%c0_105, %c0_106], %422 {strides = array<i32>} : memref<8x128xf32, #tpu.memory_space<vmem>>, vector<8x128xf32>,
    } else {
    }
    %c0 = arith.constant 0 : index
    %c0_1 = arith.constant 0 : index
    %3 = vector.load %arg3[%c0, %c0_1] : memref<8x1xi32, #tpu.memory_space<vmem>>, vector<8x1xi32>
    %c8_i32 = arith.constant 8 : i32
    %4 = arith.muli %arg1, %c8_i32 : i32
    %c0_2 = arith.constant 0 : index
    %c0_3 = arith.constant 0 : index
    %5 = vector.load %arg8[%c0_2, %c0_3] : memref<8x128xf32, #tpu.memory_space<vmem>>, vector<8x128xf32>
    %c0_4 = arith.constant 0 : index
    %c0_5 = arith.constant 0 : index
    %6 = vector.load %arg9[%c0_4, %c0_5] : memref<8x128xf32, #tpu.memory_space<vmem>>, vector<8x128xf32>
    %c0_i32_6 = arith.constant 0 : i32
    %7 = arith.index_cast %c0_i32_6 : i32 to index
    %c0_7 = arith.constant 0 : index
    %c0_8 = arith.constant 0 : index
    %8 = vector.load %arg2[%7, %c0_7, %c0_8] : memref<8x8x512xbf16, #tpu.memory_space<vmem>>, vector<1x8x512xbf16>
    %9 = vector.shape_cast %8 : vector<1x8x512xbf16> to vector<8x512xbf16>
    %10 = arith.extf %9 : vector<8x512xbf16> to vector<8x512xf32>
    %11 = arith.truncf %5 : vector<8x128xf32> to vector<8x128xbf16>
    %c0_9 = arith.constant 0 : index
    %c0_10 = arith.constant 0 : index
    %12 = vector.load %arg4[%c0_9, %c0_10] : memref<128x512xbf16, #tpu.memory_space<vmem>>, vector<128x512xbf16>
    %cst = arith.constant dense<0.000000e+00> : vector<8x512xf32>
    %13 = tpu.matmul %11, %12, %cst {dimension_numbers = #tpu.dot_dimension_numbers<[1], [0], [0], [1], [0, 0, 1, 1], [], []>} : vector<8x128xbf16>, vector<128x512xbf16>, vector<8x512xf32> -> vector<8x512xf32>
    %14 = arith.addf %10, %13 : vector<8x512xf32>
    %15 = vector.extract_strided_slice %14 {offsets = [0, 0], sizes = [8, 128], strides = [1, 1]} : vector<8x512xf32> to vector<8x128xf32>
    %16 = arith.negf %15 : vector<8x128xf32>
    %17 = math.exp %16 : vector<8x128xf32>
    %cst_11 = arith.constant 1.000000e+00 : f32
    %18 = vector.broadcast %cst_11 : f32 to vector<8x128xf32>
    %19 = arith.addf %18, %17 : vector<8x128xf32>
    %20 = arith.divf %18, %19 : vector<8x128xf32>
    %21 = vector.extract_strided_slice %14 {offsets = [0, 128], sizes = [8, 128], strides = [1, 1]} : vector<8x512xf32> to vector<8x128xf32>
    %22 = arith.negf %21 : vector<8x128xf32>
    %23 = math.exp %22 : vector<8x128xf32>
    %cst_12 = arith.constant 1.000000e+00 : f32
    %24 = vector.broadcast %cst_12 : f32 to vector<8x128xf32>
    %25 = arith.addf %24, %23 : vector<8x128xf32>
    %26 = arith.divf %24, %25 : vector<8x128xf32>
    %27 = vector.extract_strided_slice %14 {offsets = [0, 256], sizes = [8, 128], strides = [1, 1]} : vector<8x512xf32> to vector<8x128xf32>
    %28 = math.tanh %27 : vector<8x128xf32>
    %29 = vector.extract_strided_slice %14 {offsets = [0, 384], sizes = [8, 128], strides = [1, 1]} : vector<8x512xf32> to vector<8x128xf32>
    %30 = arith.negf %29 : vector<8x128xf32>
    %31 = math.exp %30 : vector<8x128xf32>
    %cst_13 = arith.constant 1.000000e+00 : f32
    %32 = vector.broadcast %cst_13 : f32 to vector<8x128xf32>
    %33 = arith.addf %32, %31 : vector<8x128xf32>
    %34 = arith.divf %32, %33 : vector<8x128xf32>
    %35 = arith.mulf %26, %6 : vector<8x128xf32>
    %36 = arith.mulf %20, %28 : vector<8x128xf32>
    %37 = arith.addf %35, %36 : vector<8x128xf32>
    %38 = math.tanh %37 : vector<8x128xf32>
    %39 = arith.mulf %34, %38 : vector<8x128xf32>
    %40 = arith.addi %4, %c0_i32_6 : i32
    %41 = vector.broadcast %40 : i32 to vector<8x1xi32>
    %42 = arith.cmpi slt, %41, %3 : vector<8x1xi32>
    %43 = vector.shape_cast %42 : vector<8x1xi1> to vector<8x1xi1>
    %44 = vector.broadcast %43 : vector<8x1xi1> to vector<8x128xi1>
    %45 = arith.select %44, %39, %5 : vector<8x128xi1>, vector<8x128xf32>
    %46 = vector.shape_cast %42 : vector<8x1xi1> to vector<8x1xi1>
    %47 = vector.broadcast %46 : vector<8x1xi1> to vector<8x128xi1>
    %48 = arith.select %47, %37, %6 : vector<8x128xi1>, vector<8x128xf32>
    %cst_14 = arith.constant 0.000000e+00 : f32
    %49 = vector.shape_cast %42 : vector<8x1xi1> to vector<8x1xi1>
    %50 = vector.broadcast %49 : vector<8x1xi1> to vector<8x128xi1>
    %51 = vector.broadcast %cst_14 : f32 to vector<8x128xf32>
    %52 = arith.select %50, %39, %51 : vector<8x128xi1>, vector<8x128xf32>
    %53 = arith.truncf %52 : vector<8x128xf32> to vector<8x128xbf16>
    %54 = arith.index_cast %c0_i32_6 : i32 to index
    %c0_15 = arith.constant 0 : index
    %c0_16 = arith.constant 0 : index
    %55 = vector.load %arg5[%54, %c0_15, %c0_16] : memref<8x8x128xbf16, #tpu.memory_space<vmem>>, vector<1x8x128xbf16>
    %56 = vector.shape_cast %55 : vector<1x8x128xbf16> to vector<8x128xbf16>
    %57 = vector.shape_cast %53 : vector<8x128xbf16> to vector<1x8x128xbf16>
    tpu.vector_store %arg5[%54, %c0_15, %c0_16], %57 {strides = array<i32>} : memref<8x8x128xbf16, #tpu.memory_space<vmem>>, vector<1x8x128xbf16>,
    %c1_i32 = arith.constant 1 : i32
    %58 = arith.index_cast %c1_i32 : i32 to index
    %c0_17 = arith.constant 0 : index
    %c0_18 = arith.constant 0 : index
    %59 = vector.load %arg2[%58, %c0_17, %c0_18] : memref<8x8x512xbf16, #tpu.memory_space<vmem>>, vector<1x8x512xbf16>
    %60 = vector.shape_cast %59 : vector<1x8x512xbf16> to vector<8x512xbf16>
    %61 = arith.extf %60 : vector<8x512xbf16> to vector<8x512xf32>
    %62 = arith.truncf %45 : vector<8x128xf32> to vector<8x128xbf16>
    %c0_19 = arith.constant 0 : index
    %c0_20 = arith.constant 0 : index
    %63 = vector.load %arg4[%c0_19, %c0_20] : memref<128x512xbf16, #tpu.memory_space<vmem>>, vector<128x512xbf16>
    %cst_21 = arith.constant dense<0.000000e+00> : vector<8x512xf32>
    %64 = tpu.matmul %62, %63, %cst_21 {dimension_numbers = #tpu.dot_dimension_numbers<[1], [0], [0], [1], [0, 0, 1, 1], [], []>} : vector<8x128xbf16>, vector<128x512xbf16>, vector<8x512xf32> -> vector<8x512xf32>
    %65 = arith.addf %61, %64 : vector<8x512xf32>
    %66 = vector.extract_strided_slice %65 {offsets = [0, 0], sizes = [8, 128], strides = [1, 1]} : vector<8x512xf32> to vector<8x128xf32>
    %67 = arith.negf %66 : vector<8x128xf32>
    %68 = math.exp %67 : vector<8x128xf32>
    %cst_22 = arith.constant 1.000000e+00 : f32
    %69 = vector.broadcast %cst_22 : f32 to vector<8x128xf32>
    %70 = arith.addf %69, %68 : vector<8x128xf32>
    %71 = arith.divf %69, %70 : vector<8x128xf32>
    %72 = vector.extract_strided_slice %65 {offsets = [0, 128], sizes = [8, 128], strides = [1, 1]} : vector<8x512xf32> to vector<8x128xf32>
    %73 = arith.negf %72 : vector<8x128xf32>
    %74 = math.exp %73 : vector<8x128xf32>
    %cst_23 = arith.constant 1.000000e+00 : f32
    %75 = vector.broadcast %cst_23 : f32 to vector<8x128xf32>
    %76 = arith.addf %75, %74 : vector<8x128xf32>
    %77 = arith.divf %75, %76 : vector<8x128xf32>
    %78 = vector.extract_strided_slice %65 {offsets = [0, 256], sizes = [8, 128], strides = [1, 1]} : vector<8x512xf32> to vector<8x128xf32>
    %79 = math.tanh %78 : vector<8x128xf32>
    %80 = vector.extract_strided_slice %65 {offsets = [0, 384], sizes = [8, 128], strides = [1, 1]} : vector<8x512xf32> to vector<8x128xf32>
    %81 = arith.negf %80 : vector<8x128xf32>
    %82 = math.exp %81 : vector<8x128xf32>
    %cst_24 = arith.constant 1.000000e+00 : f32
    %83 = vector.broadcast %cst_24 : f32 to vector<8x128xf32>
    %84 = arith.addf %83, %82 : vector<8x128xf32>
    %85 = arith.divf %83, %84 : vector<8x128xf32>
    %86 = arith.mulf %77, %48 : vector<8x128xf32>
    %87 = arith.mulf %71, %79 : vector<8x128xf32>
    %88 = arith.addf %86, %87 : vector<8x128xf32>
    %89 = math.tanh %88 : vector<8x128xf32>
    %90 = arith.mulf %85, %89 : vector<8x128xf32>
    %91 = arith.addi %4, %c1_i32 : i32
    %92 = vector.broadcast %91 : i32 to vector<8x1xi32>
    %93 = arith.cmpi slt, %92, %3 : vector<8x1xi32>
    %94 = vector.shape_cast %93 : vector<8x1xi1> to vector<8x1xi1>
    %95 = vector.broadcast %94 : vector<8x1xi1> to vector<8x128xi1>
    %96 = arith.select %95, %90, %45 : vector<8x128xi1>, vector<8x128xf32>
    %97 = vector.shape_cast %93 : vector<8x1xi1> to vector<8x1xi1>
    %98 = vector.broadcast %97 : vector<8x1xi1> to vector<8x128xi1>
    %99 = arith.select %98, %88, %48 : vector<8x128xi1>, vector<8x128xf32>
    %cst_25 = arith.constant 0.000000e+00 : f32
    %100 = vector.shape_cast %93 : vector<8x1xi1> to vector<8x1xi1>
    %101 = vector.broadcast %100 : vector<8x1xi1> to vector<8x128xi1>
    %102 = vector.broadcast %cst_25 : f32 to vector<8x128xf32>
    %103 = arith.select %101, %90, %102 : vector<8x128xi1>, vector<8x128xf32>
    %104 = arith.truncf %103 : vector<8x128xf32> to vector<8x128xbf16>
    %105 = arith.index_cast %c1_i32 : i32 to index
    %c0_26 = arith.constant 0 : index
    %c0_27 = arith.constant 0 : index
    %106 = vector.load %arg5[%105, %c0_26, %c0_27] : memref<8x8x128xbf16, #tpu.memory_space<vmem>>, vector<1x8x128xbf16>
    %107 = vector.shape_cast %106 : vector<1x8x128xbf16> to vector<8x128xbf16>
    %108 = vector.shape_cast %104 : vector<8x128xbf16> to vector<1x8x128xbf16>
    tpu.vector_store %arg5[%105, %c0_26, %c0_27], %108 {strides = array<i32>} : memref<8x8x128xbf16, #tpu.memory_space<vmem>>, vector<1x8x128xbf16>,
    %c2_i32 = arith.constant 2 : i32
    %109 = arith.index_cast %c2_i32 : i32 to index
    %c0_28 = arith.constant 0 : index
    %c0_29 = arith.constant 0 : index
    %110 = vector.load %arg2[%109, %c0_28, %c0_29] : memref<8x8x512xbf16, #tpu.memory_space<vmem>>, vector<1x8x512xbf16>
    %111 = vector.shape_cast %110 : vector<1x8x512xbf16> to vector<8x512xbf16>
    %112 = arith.extf %111 : vector<8x512xbf16> to vector<8x512xf32>
    %113 = arith.truncf %96 : vector<8x128xf32> to vector<8x128xbf16>
    %c0_30 = arith.constant 0 : index
    %c0_31 = arith.constant 0 : index
    %114 = vector.load %arg4[%c0_30, %c0_31] : memref<128x512xbf16, #tpu.memory_space<vmem>>, vector<128x512xbf16>
    %cst_32 = arith.constant dense<0.000000e+00> : vector<8x512xf32>
    %115 = tpu.matmul %113, %114, %cst_32 {dimension_numbers = #tpu.dot_dimension_numbers<[1], [0], [0], [1], [0, 0, 1, 1], [], []>} : vector<8x128xbf16>, vector<128x512xbf16>, vector<8x512xf32> -> vector<8x512xf32>
    %116 = arith.addf %112, %115 : vector<8x512xf32>
    %117 = vector.extract_strided_slice %116 {offsets = [0, 0], sizes = [8, 128], strides = [1, 1]} : vector<8x512xf32> to vector<8x128xf32>
    %118 = arith.negf %117 : vector<8x128xf32>
    %119 = math.exp %118 : vector<8x128xf32>
    %cst_33 = arith.constant 1.000000e+00 : f32
    %120 = vector.broadcast %cst_33 : f32 to vector<8x128xf32>
    %121 = arith.addf %120, %119 : vector<8x128xf32>
    %122 = arith.divf %120, %121 : vector<8x128xf32>
    %123 = vector.extract_strided_slice %116 {offsets = [0, 128], sizes = [8, 128], strides = [1, 1]} : vector<8x512xf32> to vector<8x128xf32>
    %124 = arith.negf %123 : vector<8x128xf32>
    %125 = math.exp %124 : vector<8x128xf32>
    %cst_34 = arith.constant 1.000000e+00 : f32
    %126 = vector.broadcast %cst_34 : f32 to vector<8x128xf32>
    %127 = arith.addf %126, %125 : vector<8x128xf32>
    %128 = arith.divf %126, %127 : vector<8x128xf32>
    %129 = vector.extract_strided_slice %116 {offsets = [0, 256], sizes = [8, 128], strides = [1, 1]} : vector<8x512xf32> to vector<8x128xf32>
    %130 = math.tanh %129 : vector<8x128xf32>
    %131 = vector.extract_strided_slice %116 {offsets = [0, 384], sizes = [8, 128], strides = [1, 1]} : vector<8x512xf32> to vector<8x128xf32>
    %132 = arith.negf %131 : vector<8x128xf32>
    %133 = math.exp %132 : vector<8x128xf32>
    %cst_35 = arith.constant 1.000000e+00 : f32
    %134 = vector.broadcast %cst_35 : f32 to vector<8x128xf32>
    %135 = arith.addf %134, %133 : vector<8x128xf32>
    %136 = arith.divf %134, %135 : vector<8x128xf32>
    %137 = arith.mulf %128, %99 : vector<8x128xf32>
    %138 = arith.mulf %122, %130 : vector<8x128xf32>
    %139 = arith.addf %137, %138 : vector<8x128xf32>
    %140 = math.tanh %139 : vector<8x128xf32>
    %141 = arith.mulf %136, %140 : vector<8x128xf32>
    %142 = arith.addi %4, %c2_i32 : i32
    %143 = vector.broadcast %142 : i32 to vector<8x1xi32>
    %144 = arith.cmpi slt, %143, %3 : vector<8x1xi32>
    %145 = vector.shape_cast %144 : vector<8x1xi1> to vector<8x1xi1>
    %146 = vector.broadcast %145 : vector<8x1xi1> to vector<8x128xi1>
    %147 = arith.select %146, %141, %96 : vector<8x128xi1>, vector<8x128xf32>
    %148 = vector.shape_cast %144 : vector<8x1xi1> to vector<8x1xi1>
    %149 = vector.broadcast %148 : vector<8x1xi1> to vector<8x128xi1>
    %150 = arith.select %149, %139, %99 : vector<8x128xi1>, vector<8x128xf32>
    %cst_36 = arith.constant 0.000000e+00 : f32
    %151 = vector.shape_cast %144 : vector<8x1xi1> to vector<8x1xi1>
    %152 = vector.broadcast %151 : vector<8x1xi1> to vector<8x128xi1>
    %153 = vector.broadcast %cst_36 : f32 to vector<8x128xf32>
    %154 = arith.select %152, %141, %153 : vector<8x128xi1>, vector<8x128xf32>
    %155 = arith.truncf %154 : vector<8x128xf32> to vector<8x128xbf16>
    %156 = arith.index_cast %c2_i32 : i32 to index
    %c0_37 = arith.constant 0 : index
    %c0_38 = arith.constant 0 : index
    %157 = vector.load %arg5[%156, %c0_37, %c0_38] : memref<8x8x128xbf16, #tpu.memory_space<vmem>>, vector<1x8x128xbf16>
    %158 = vector.shape_cast %157 : vector<1x8x128xbf16> to vector<8x128xbf16>
    %159 = vector.shape_cast %155 : vector<8x128xbf16> to vector<1x8x128xbf16>
    tpu.vector_store %arg5[%156, %c0_37, %c0_38], %159 {strides = array<i32>} : memref<8x8x128xbf16, #tpu.memory_space<vmem>>, vector<1x8x128xbf16>,
    %c3_i32 = arith.constant 3 : i32
    %160 = arith.index_cast %c3_i32 : i32 to index
    %c0_39 = arith.constant 0 : index
    %c0_40 = arith.constant 0 : index
    %161 = vector.load %arg2[%160, %c0_39, %c0_40] : memref<8x8x512xbf16, #tpu.memory_space<vmem>>, vector<1x8x512xbf16>
    %162 = vector.shape_cast %161 : vector<1x8x512xbf16> to vector<8x512xbf16>
    %163 = arith.extf %162 : vector<8x512xbf16> to vector<8x512xf32>
    %164 = arith.truncf %147 : vector<8x128xf32> to vector<8x128xbf16>
    %c0_41 = arith.constant 0 : index
    %c0_42 = arith.constant 0 : index
    %165 = vector.load %arg4[%c0_41, %c0_42] : memref<128x512xbf16, #tpu.memory_space<vmem>>, vector<128x512xbf16>
    %cst_43 = arith.constant dense<0.000000e+00> : vector<8x512xf32>
    %166 = tpu.matmul %164, %165, %cst_43 {dimension_numbers = #tpu.dot_dimension_numbers<[1], [0], [0], [1], [0, 0, 1, 1], [], []>} : vector<8x128xbf16>, vector<128x512xbf16>, vector<8x512xf32> -> vector<8x512xf32>
    %167 = arith.addf %163, %166 : vector<8x512xf32>
    %168 = vector.extract_strided_slice %167 {offsets = [0, 0], sizes = [8, 128], strides = [1, 1]} : vector<8x512xf32> to vector<8x128xf32>
    %169 = arith.negf %168 : vector<8x128xf32>
    %170 = math.exp %169 : vector<8x128xf32>
    %cst_44 = arith.constant 1.000000e+00 : f32
    %171 = vector.broadcast %cst_44 : f32 to vector<8x128xf32>
    %172 = arith.addf %171, %170 : vector<8x128xf32>
    %173 = arith.divf %171, %172 : vector<8x128xf32>
    %174 = vector.extract_strided_slice %167 {offsets = [0, 128], sizes = [8, 128], strides = [1, 1]} : vector<8x512xf32> to vector<8x128xf32>
    %175 = arith.negf %174 : vector<8x128xf32>
    %176 = math.exp %175 : vector<8x128xf32>
    %cst_45 = arith.constant 1.000000e+00 : f32
    %177 = vector.broadcast %cst_45 : f32 to vector<8x128xf32>
    %178 = arith.addf %177, %176 : vector<8x128xf32>
    %179 = arith.divf %177, %178 : vector<8x128xf32>
    %180 = vector.extract_strided_slice %167 {offsets = [0, 256], sizes = [8, 128], strides = [1, 1]} : vector<8x512xf32> to vector<8x128xf32>
    %181 = math.tanh %180 : vector<8x128xf32>
    %182 = vector.extract_strided_slice %167 {offsets = [0, 384], sizes = [8, 128], strides = [1, 1]} : vector<8x512xf32> to vector<8x128xf32>
    %183 = arith.negf %182 : vector<8x128xf32>
    %184 = math.exp %183 : vector<8x128xf32>
    %cst_46 = arith.constant 1.000000e+00 : f32
    %185 = vector.broadcast %cst_46 : f32 to vector<8x128xf32>
    %186 = arith.addf %185, %184 : vector<8x128xf32>
    %187 = arith.divf %185, %186 : vector<8x128xf32>
    %188 = arith.mulf %179, %150 : vector<8x128xf32>
    %189 = arith.mulf %173, %181 : vector<8x128xf32>
    %190 = arith.addf %188, %189 : vector<8x128xf32>
    %191 = math.tanh %190 : vector<8x128xf32>
    %192 = arith.mulf %187, %191 : vector<8x128xf32>
    %193 = arith.addi %4, %c3_i32 : i32
    %194 = vector.broadcast %193 : i32 to vector<8x1xi32>
    %195 = arith.cmpi slt, %194, %3 : vector<8x1xi32>
    %196 = vector.shape_cast %195 : vector<8x1xi1> to vector<8x1xi1>
    %197 = vector.broadcast %196 : vector<8x1xi1> to vector<8x128xi1>
    %198 = arith.select %197, %192, %147 : vector<8x128xi1>, vector<8x128xf32>
    %199 = vector.shape_cast %195 : vector<8x1xi1> to vector<8x1xi1>
    %200 = vector.broadcast %199 : vector<8x1xi1> to vector<8x128xi1>
    %201 = arith.select %200, %190, %150 : vector<8x128xi1>, vector<8x128xf32>
    %cst_47 = arith.constant 0.000000e+00 : f32
    %202 = vector.shape_cast %195 : vector<8x1xi1> to vector<8x1xi1>
    %203 = vector.broadcast %202 : vector<8x1xi1> to vector<8x128xi1>
    %204 = vector.broadcast %cst_47 : f32 to vector<8x128xf32>
    %205 = arith.select %203, %192, %204 : vector<8x128xi1>, vector<8x128xf32>
    %206 = arith.truncf %205 : vector<8x128xf32> to vector<8x128xbf16>
    %207 = arith.index_cast %c3_i32 : i32 to index
    %c0_48 = arith.constant 0 : index
    %c0_49 = arith.constant 0 : index
    %208 = vector.load %arg5[%207, %c0_48, %c0_49] : memref<8x8x128xbf16, #tpu.memory_space<vmem>>, vector<1x8x128xbf16>
    %209 = vector.shape_cast %208 : vector<1x8x128xbf16> to vector<8x128xbf16>
    %210 = vector.shape_cast %206 : vector<8x128xbf16> to vector<1x8x128xbf16>
    tpu.vector_store %arg5[%207, %c0_48, %c0_49], %210 {strides = array<i32>} : memref<8x8x128xbf16, #tpu.memory_space<vmem>>, vector<1x8x128xbf16>,
    %c4_i32 = arith.constant 4 : i32
    %211 = arith.index_cast %c4_i32 : i32 to index
    %c0_50 = arith.constant 0 : index
    %c0_51 = arith.constant 0 : index
    %212 = vector.load %arg2[%211, %c0_50, %c0_51] : memref<8x8x512xbf16, #tpu.memory_space<vmem>>, vector<1x8x512xbf16>
    %213 = vector.shape_cast %212 : vector<1x8x512xbf16> to vector<8x512xbf16>
    %214 = arith.extf %213 : vector<8x512xbf16> to vector<8x512xf32>
    %215 = arith.truncf %198 : vector<8x128xf32> to vector<8x128xbf16>
    %c0_52 = arith.constant 0 : index
    %c0_53 = arith.constant 0 : index
    %216 = vector.load %arg4[%c0_52, %c0_53] : memref<128x512xbf16, #tpu.memory_space<vmem>>, vector<128x512xbf16>
    %cst_54 = arith.constant dense<0.000000e+00> : vector<8x512xf32>
    %217 = tpu.matmul %215, %216, %cst_54 {dimension_numbers = #tpu.dot_dimension_numbers<[1], [0], [0], [1], [0, 0, 1, 1], [], []>} : vector<8x128xbf16>, vector<128x512xbf16>, vector<8x512xf32> -> vector<8x512xf32>
    %218 = arith.addf %214, %217 : vector<8x512xf32>
    %219 = vector.extract_strided_slice %218 {offsets = [0, 0], sizes = [8, 128], strides = [1, 1]} : vector<8x512xf32> to vector<8x128xf32>
    %220 = arith.negf %219 : vector<8x128xf32>
    %221 = math.exp %220 : vector<8x128xf32>
    %cst_55 = arith.constant 1.000000e+00 : f32
    %222 = vector.broadcast %cst_55 : f32 to vector<8x128xf32>
    %223 = arith.addf %222, %221 : vector<8x128xf32>
    %224 = arith.divf %222, %223 : vector<8x128xf32>
    %225 = vector.extract_strided_slice %218 {offsets = [0, 128], sizes = [8, 128], strides = [1, 1]} : vector<8x512xf32> to vector<8x128xf32>
    %226 = arith.negf %225 : vector<8x128xf32>
    %227 = math.exp %226 : vector<8x128xf32>
    %cst_56 = arith.constant 1.000000e+00 : f32
    %228 = vector.broadcast %cst_56 : f32 to vector<8x128xf32>
    %229 = arith.addf %228, %227 : vector<8x128xf32>
    %230 = arith.divf %228, %229 : vector<8x128xf32>
    %231 = vector.extract_strided_slice %218 {offsets = [0, 256], sizes = [8, 128], strides = [1, 1]} : vector<8x512xf32> to vector<8x128xf32>
    %232 = math.tanh %231 : vector<8x128xf32>
    %233 = vector.extract_strided_slice %218 {offsets = [0, 384], sizes = [8, 128], strides = [1, 1]} : vector<8x512xf32> to vector<8x128xf32>
    %234 = arith.negf %233 : vector<8x128xf32>
    %235 = math.exp %234 : vector<8x128xf32>
    %cst_57 = arith.constant 1.000000e+00 : f32
    %236 = vector.broadcast %cst_57 : f32 to vector<8x128xf32>
    %237 = arith.addf %236, %235 : vector<8x128xf32>
    %238 = arith.divf %236, %237 : vector<8x128xf32>
    %239 = arith.mulf %230, %201 : vector<8x128xf32>
    %240 = arith.mulf %224, %232 : vector<8x128xf32>
    %241 = arith.addf %239, %240 : vector<8x128xf32>
    %242 = math.tanh %241 : vector<8x128xf32>
    %243 = arith.mulf %238, %242 : vector<8x128xf32>
    %244 = arith.addi %4, %c4_i32 : i32
    %245 = vector.broadcast %244 : i32 to vector<8x1xi32>
    %246 = arith.cmpi slt, %245, %3 : vector<8x1xi32>
    %247 = vector.shape_cast %246 : vector<8x1xi1> to vector<8x1xi1>
    %248 = vector.broadcast %247 : vector<8x1xi1> to vector<8x128xi1>
    %249 = arith.select %248, %243, %198 : vector<8x128xi1>, vector<8x128xf32>
    %250 = vector.shape_cast %246 : vector<8x1xi1> to vector<8x1xi1>
    %251 = vector.broadcast %250 : vector<8x1xi1> to vector<8x128xi1>
    %252 = arith.select %251, %241, %201 : vector<8x128xi1>, vector<8x128xf32>
    %cst_58 = arith.constant 0.000000e+00 : f32
    %253 = vector.shape_cast %246 : vector<8x1xi1> to vector<8x1xi1>
    %254 = vector.broadcast %253 : vector<8x1xi1> to vector<8x128xi1>
    %255 = vector.broadcast %cst_58 : f32 to vector<8x128xf32>
    %256 = arith.select %254, %243, %255 : vector<8x128xi1>, vector<8x128xf32>
    %257 = arith.truncf %256 : vector<8x128xf32> to vector<8x128xbf16>
    %258 = arith.index_cast %c4_i32 : i32 to index
    %c0_59 = arith.constant 0 : index
    %c0_60 = arith.constant 0 : index
    %259 = vector.load %arg5[%258, %c0_59, %c0_60] : memref<8x8x128xbf16, #tpu.memory_space<vmem>>, vector<1x8x128xbf16>
    %260 = vector.shape_cast %259 : vector<1x8x128xbf16> to vector<8x128xbf16>
    %261 = vector.shape_cast %257 : vector<8x128xbf16> to vector<1x8x128xbf16>
    tpu.vector_store %arg5[%258, %c0_59, %c0_60], %261 {strides = array<i32>} : memref<8x8x128xbf16, #tpu.memory_space<vmem>>, vector<1x8x128xbf16>,
    %c5_i32 = arith.constant 5 : i32
    %262 = arith.index_cast %c5_i32 : i32 to index
    %c0_61 = arith.constant 0 : index
    %c0_62 = arith.constant 0 : index
    %263 = vector.load %arg2[%262, %c0_61, %c0_62] : memref<8x8x512xbf16, #tpu.memory_space<vmem>>, vector<1x8x512xbf16>
    %264 = vector.shape_cast %263 : vector<1x8x512xbf16> to vector<8x512xbf16>
    %265 = arith.extf %264 : vector<8x512xbf16> to vector<8x512xf32>
    %266 = arith.truncf %249 : vector<8x128xf32> to vector<8x128xbf16>
    %c0_63 = arith.constant 0 : index
    %c0_64 = arith.constant 0 : index
    %267 = vector.load %arg4[%c0_63, %c0_64] : memref<128x512xbf16, #tpu.memory_space<vmem>>, vector<128x512xbf16>
    %cst_65 = arith.constant dense<0.000000e+00> : vector<8x512xf32>
    %268 = tpu.matmul %266, %267, %cst_65 {dimension_numbers = #tpu.dot_dimension_numbers<[1], [0], [0], [1], [0, 0, 1, 1], [], []>} : vector<8x128xbf16>, vector<128x512xbf16>, vector<8x512xf32> -> vector<8x512xf32>
    %269 = arith.addf %265, %268 : vector<8x512xf32>
    %270 = vector.extract_strided_slice %269 {offsets = [0, 0], sizes = [8, 128], strides = [1, 1]} : vector<8x512xf32> to vector<8x128xf32>
    %271 = arith.negf %270 : vector<8x128xf32>
    %272 = math.exp %271 : vector<8x128xf32>
    %cst_66 = arith.constant 1.000000e+00 : f32
    %273 = vector.broadcast %cst_66 : f32 to vector<8x128xf32>
    %274 = arith.addf %273, %272 : vector<8x128xf32>
    %275 = arith.divf %273, %274 : vector<8x128xf32>
    %276 = vector.extract_strided_slice %269 {offsets = [0, 128], sizes = [8, 128], strides = [1, 1]} : vector<8x512xf32> to vector<8x128xf32>
    %277 = arith.negf %276 : vector<8x128xf32>
    %278 = math.exp %277 : vector<8x128xf32>
    %cst_67 = arith.constant 1.000000e+00 : f32
    %279 = vector.broadcast %cst_67 : f32 to vector<8x128xf32>
    %280 = arith.addf %279, %278 : vector<8x128xf32>
    %281 = arith.divf %279, %280 : vector<8x128xf32>
    %282 = vector.extract_strided_slice %269 {offsets = [0, 256], sizes = [8, 128], strides = [1, 1]} : vector<8x512xf32> to vector<8x128xf32>
    %283 = math.tanh %282 : vector<8x128xf32>
    %284 = vector.extract_strided_slice %269 {offsets = [0, 384], sizes = [8, 128], strides = [1, 1]} : vector<8x512xf32> to vector<8x128xf32>
    %285 = arith.negf %284 : vector<8x128xf32>
    %286 = math.exp %285 : vector<8x128xf32>
    %cst_68 = arith.constant 1.000000e+00 : f32
    %287 = vector.broadcast %cst_68 : f32 to vector<8x128xf32>
    %288 = arith.addf %287, %286 : vector<8x128xf32>
    %289 = arith.divf %287, %288 : vector<8x128xf32>
    %290 = arith.mulf %281, %252 : vector<8x128xf32>
    %291 = arith.mulf %275, %283 : vector<8x128xf32>
    %292 = arith.addf %290, %291 : vector<8x128xf32>
    %293 = math.tanh %292 : vector<8x128xf32>
    %294 = arith.mulf %289, %293 : vector<8x128xf32>
    %295 = arith.addi %4, %c5_i32 : i32
    %296 = vector.broadcast %295 : i32 to vector<8x1xi32>
    %297 = arith.cmpi slt, %296, %3 : vector<8x1xi32>
    %298 = vector.shape_cast %297 : vector<8x1xi1> to vector<8x1xi1>
    %299 = vector.broadcast %298 : vector<8x1xi1> to vector<8x128xi1>
    %300 = arith.select %299, %294, %249 : vector<8x128xi1>, vector<8x128xf32>
    %301 = vector.shape_cast %297 : vector<8x1xi1> to vector<8x1xi1>
    %302 = vector.broadcast %301 : vector<8x1xi1> to vector<8x128xi1>
    %303 = arith.select %302, %292, %252 : vector<8x128xi1>, vector<8x128xf32>
    %cst_69 = arith.constant 0.000000e+00 : f32
    %304 = vector.shape_cast %297 : vector<8x1xi1> to vector<8x1xi1>
    %305 = vector.broadcast %304 : vector<8x1xi1> to vector<8x128xi1>
    %306 = vector.broadcast %cst_69 : f32 to vector<8x128xf32>
    %307 = arith.select %305, %294, %306 : vector<8x128xi1>, vector<8x128xf32>
    %308 = arith.truncf %307 : vector<8x128xf32> to vector<8x128xbf16>
    %309 = arith.index_cast %c5_i32 : i32 to index
    %c0_70 = arith.constant 0 : index
    %c0_71 = arith.constant 0 : index
    %310 = vector.load %arg5[%309, %c0_70, %c0_71] : memref<8x8x128xbf16, #tpu.memory_space<vmem>>, vector<1x8x128xbf16>
    %311 = vector.shape_cast %310 : vector<1x8x128xbf16> to vector<8x128xbf16>
    %312 = vector.shape_cast %308 : vector<8x128xbf16> to vector<1x8x128xbf16>
    tpu.vector_store %arg5[%309, %c0_70, %c0_71], %312 {strides = array<i32>} : memref<8x8x128xbf16, #tpu.memory_space<vmem>>, vector<1x8x128xbf16>,
    %c6_i32 = arith.constant 6 : i32
    %313 = arith.index_cast %c6_i32 : i32 to index
    %c0_72 = arith.constant 0 : index
    %c0_73 = arith.constant 0 : index
    %314 = vector.load %arg2[%313, %c0_72, %c0_73] : memref<8x8x512xbf16, #tpu.memory_space<vmem>>, vector<1x8x512xbf16>
    %315 = vector.shape_cast %314 : vector<1x8x512xbf16> to vector<8x512xbf16>
    %316 = arith.extf %315 : vector<8x512xbf16> to vector<8x512xf32>
    %317 = arith.truncf %300 : vector<8x128xf32> to vector<8x128xbf16>
    %c0_74 = arith.constant 0 : index
    %c0_75 = arith.constant 0 : index
    %318 = vector.load %arg4[%c0_74, %c0_75] : memref<128x512xbf16, #tpu.memory_space<vmem>>, vector<128x512xbf16>
    %cst_76 = arith.constant dense<0.000000e+00> : vector<8x512xf32>
    %319 = tpu.matmul %317, %318, %cst_76 {dimension_numbers = #tpu.dot_dimension_numbers<[1], [0], [0], [1], [0, 0, 1, 1], [], []>} : vector<8x128xbf16>, vector<128x512xbf16>, vector<8x512xf32> -> vector<8x512xf32>
    %320 = arith.addf %316, %319 : vector<8x512xf32>
    %321 = vector.extract_strided_slice %320 {offsets = [0, 0], sizes = [8, 128], strides = [1, 1]} : vector<8x512xf32> to vector<8x128xf32>
    %322 = arith.negf %321 : vector<8x128xf32>
    %323 = math.exp %322 : vector<8x128xf32>
    %cst_77 = arith.constant 1.000000e+00 : f32
    %324 = vector.broadcast %cst_77 : f32 to vector<8x128xf32>
    %325 = arith.addf %324, %323 : vector<8x128xf32>
    %326 = arith.divf %324, %325 : vector<8x128xf32>
    %327 = vector.extract_strided_slice %320 {offsets = [0, 128], sizes = [8, 128], strides = [1, 1]} : vector<8x512xf32> to vector<8x128xf32>
    %328 = arith.negf %327 : vector<8x128xf32>
    %329 = math.exp %328 : vector<8x128xf32>
    %cst_78 = arith.constant 1.000000e+00 : f32
    %330 = vector.broadcast %cst_78 : f32 to vector<8x128xf32>
    %331 = arith.addf %330, %329 : vector<8x128xf32>
    %332 = arith.divf %330, %331 : vector<8x128xf32>
    %333 = vector.extract_strided_slice %320 {offsets = [0, 256], sizes = [8, 128], strides = [1, 1]} : vector<8x512xf32> to vector<8x128xf32>
    %334 = math.tanh %333 : vector<8x128xf32>
    %335 = vector.extract_strided_slice %320 {offsets = [0, 384], sizes = [8, 128], strides = [1, 1]} : vector<8x512xf32> to vector<8x128xf32>
    %336 = arith.negf %335 : vector<8x128xf32>
    %337 = math.exp %336 : vector<8x128xf32>
    %cst_79 = arith.constant 1.000000e+00 : f32
    %338 = vector.broadcast %cst_79 : f32 to vector<8x128xf32>
    %339 = arith.addf %338, %337 : vector<8x128xf32>
    %340 = arith.divf %338, %339 : vector<8x128xf32>
    %341 = arith.mulf %332, %303 : vector<8x128xf32>
    %342 = arith.mulf %326, %334 : vector<8x128xf32>
    %343 = arith.addf %341, %342 : vector<8x128xf32>
    %344 = math.tanh %343 : vector<8x128xf32>
    %345 = arith.mulf %340, %344 : vector<8x128xf32>
    %346 = arith.addi %4, %c6_i32 : i32
    %347 = vector.broadcast %346 : i32 to vector<8x1xi32>
    %348 = arith.cmpi slt, %347, %3 : vector<8x1xi32>
    %349 = vector.shape_cast %348 : vector<8x1xi1> to vector<8x1xi1>
    %350 = vector.broadcast %349 : vector<8x1xi1> to vector<8x128xi1>
    %351 = arith.select %350, %345, %300 : vector<8x128xi1>, vector<8x128xf32>
    %352 = vector.shape_cast %348 : vector<8x1xi1> to vector<8x1xi1>
    %353 = vector.broadcast %352 : vector<8x1xi1> to vector<8x128xi1>
    %354 = arith.select %353, %343, %303 : vector<8x128xi1>, vector<8x128xf32>
    %cst_80 = arith.constant 0.000000e+00 : f32
    %355 = vector.shape_cast %348 : vector<8x1xi1> to vector<8x1xi1>
    %356 = vector.broadcast %355 : vector<8x1xi1> to vector<8x128xi1>
    %357 = vector.broadcast %cst_80 : f32 to vector<8x128xf32>
    %358 = arith.select %356, %345, %357 : vector<8x128xi1>, vector<8x128xf32>
    %359 = arith.truncf %358 : vector<8x128xf32> to vector<8x128xbf16>
    %360 = arith.index_cast %c6_i32 : i32 to index
    %c0_81 = arith.constant 0 : index
    %c0_82 = arith.constant 0 : index
    %361 = vector.load %arg5[%360, %c0_81, %c0_82] : memref<8x8x128xbf16, #tpu.memory_space<vmem>>, vector<1x8x128xbf16>
    %362 = vector.shape_cast %361 : vector<1x8x128xbf16> to vector<8x128xbf16>
    %363 = vector.shape_cast %359 : vector<8x128xbf16> to vector<1x8x128xbf16>
    tpu.vector_store %arg5[%360, %c0_81, %c0_82], %363 {strides = array<i32>} : memref<8x8x128xbf16, #tpu.memory_space<vmem>>, vector<1x8x128xbf16>,
    %c7_i32 = arith.constant 7 : i32
    %364 = arith.index_cast %c7_i32 : i32 to index
    %c0_83 = arith.constant 0 : index
    %c0_84 = arith.constant 0 : index
    %365 = vector.load %arg2[%364, %c0_83, %c0_84] : memref<8x8x512xbf16, #tpu.memory_space<vmem>>, vector<1x8x512xbf16>
    %366 = vector.shape_cast %365 : vector<1x8x512xbf16> to vector<8x512xbf16>
    %367 = arith.extf %366 : vector<8x512xbf16> to vector<8x512xf32>
    %368 = arith.truncf %351 : vector<8x128xf32> to vector<8x128xbf16>
    %c0_85 = arith.constant 0 : index
    %c0_86 = arith.constant 0 : index
    %369 = vector.load %arg4[%c0_85, %c0_86] : memref<128x512xbf16, #tpu.memory_space<vmem>>, vector<128x512xbf16>
    %cst_87 = arith.constant dense<0.000000e+00> : vector<8x512xf32>
    %370 = tpu.matmul %368, %369, %cst_87 {dimension_numbers = #tpu.dot_dimension_numbers<[1], [0], [0], [1], [0, 0, 1, 1], [], []>} : vector<8x128xbf16>, vector<128x512xbf16>, vector<8x512xf32> -> vector<8x512xf32>
    %371 = arith.addf %367, %370 : vector<8x512xf32>
    %372 = vector.extract_strided_slice %371 {offsets = [0, 0], sizes = [8, 128], strides = [1, 1]} : vector<8x512xf32> to vector<8x128xf32>
    %373 = arith.negf %372 : vector<8x128xf32>
    %374 = math.exp %373 : vector<8x128xf32>
    %cst_88 = arith.constant 1.000000e+00 : f32
    %375 = vector.broadcast %cst_88 : f32 to vector<8x128xf32>
    %376 = arith.addf %375, %374 : vector<8x128xf32>
    %377 = arith.divf %375, %376 : vector<8x128xf32>
    %378 = vector.extract_strided_slice %371 {offsets = [0, 128], sizes = [8, 128], strides = [1, 1]} : vector<8x512xf32> to vector<8x128xf32>
    %379 = arith.negf %378 : vector<8x128xf32>
    %380 = math.exp %379 : vector<8x128xf32>
    %cst_89 = arith.constant 1.000000e+00 : f32
    %381 = vector.broadcast %cst_89 : f32 to vector<8x128xf32>
    %382 = arith.addf %381, %380 : vector<8x128xf32>
    %383 = arith.divf %381, %382 : vector<8x128xf32>
    %384 = vector.extract_strided_slice %371 {offsets = [0, 256], sizes = [8, 128], strides = [1, 1]} : vector<8x512xf32> to vector<8x128xf32>
    %385 = math.tanh %384 : vector<8x128xf32>
    %386 = vector.extract_strided_slice %371 {offsets = [0, 384], sizes = [8, 128], strides = [1, 1]} : vector<8x512xf32> to vector<8x128xf32>
    %387 = arith.negf %386 : vector<8x128xf32>
    %388 = math.exp %387 : vector<8x128xf32>
    %cst_90 = arith.constant 1.000000e+00 : f32
    %389 = vector.broadcast %cst_90 : f32 to vector<8x128xf32>
    %390 = arith.addf %389, %388 : vector<8x128xf32>
    %391 = arith.divf %389, %390 : vector<8x128xf32>
    %392 = arith.mulf %383, %354 : vector<8x128xf32>
    %393 = arith.mulf %377, %385 : vector<8x128xf32>
    %394 = arith.addf %392, %393 : vector<8x128xf32>
    %395 = math.tanh %394 : vector<8x128xf32>
    %396 = arith.mulf %391, %395 : vector<8x128xf32>
    %397 = arith.addi %4, %c7_i32 : i32
    %398 = vector.broadcast %397 : i32 to vector<8x1xi32>
    %399 = arith.cmpi slt, %398, %3 : vector<8x1xi32>
    %400 = vector.shape_cast %399 : vector<8x1xi1> to vector<8x1xi1>
    %401 = vector.broadcast %400 : vector<8x1xi1> to vector<8x128xi1>
    %402 = arith.select %401, %396, %351 : vector<8x128xi1>, vector<8x128xf32>
    %403 = vector.shape_cast %399 : vector<8x1xi1> to vector<8x1xi1>
    %404 = vector.broadcast %403 : vector<8x1xi1> to vector<8x128xi1>
    %405 = arith.select %404, %394, %354 : vector<8x128xi1>, vector<8x128xf32>
    %cst_91 = arith.constant 0.000000e+00 : f32
    %406 = vector.shape_cast %399 : vector<8x1xi1> to vector<8x1xi1>
    %407 = vector.broadcast %406 : vector<8x1xi1> to vector<8x128xi1>
    %408 = vector.broadcast %cst_91 : f32 to vector<8x128xf32>
    %409 = arith.select %407, %396, %408 : vector<8x128xi1>, vector<8x128xf32>
    %410 = arith.truncf %409 : vector<8x128xf32> to vector<8x128xbf16>
    %411 = arith.index_cast %c7_i32 : i32 to index
    %c0_92 = arith.constant 0 : index
    %c0_93 = arith.constant 0 : index
    %412 = vector.load %arg5[%411, %c0_92, %c0_93] : memref<8x8x128xbf16, #tpu.memory_space<vmem>>, vector<1x8x128xbf16>
    %413 = vector.shape_cast %412 : vector<1x8x128xbf16> to vector<8x128xbf16>
    %414 = vector.shape_cast %410 : vector<8x128xbf16> to vector<1x8x128xbf16>
    tpu.vector_store %arg5[%411, %c0_92, %c0_93], %414 {strides = array<i32>} : memref<8x8x128xbf16, #tpu.memory_space<vmem>>, vector<1x8x128xbf16>,
    %c8_i32_94 = arith.constant 8 : i32
    %c0_95 = arith.constant 0 : index
    %c0_96 = arith.constant 0 : index
    %415 = vector.load %arg8[%c0_95, %c0_96] : memref<8x128xf32, #tpu.memory_space<vmem>>, vector<8x128xf32>
    tpu.vector_store %arg8[%c0_95, %c0_96], %402 {strides = array<i32>} : memref<8x128xf32, #tpu.memory_space<vmem>>, vector<8x128xf32>,
    %c0_97 = arith.constant 0 : index
    %c0_98 = arith.constant 0 : index
    %416 = vector.load %arg9[%c0_97, %c0_98] : memref<8x128xf32, #tpu.memory_space<vmem>>, vector<8x128xf32>
    tpu.vector_store %arg9[%c0_97, %c0_98], %405 {strides = array<i32>} : memref<8x128xf32, #tpu.memory_space<vmem>>, vector<8x128xf32>,
    %c0_i32_99 = arith.constant 0 : i32
    %417 = arith.cmpi eq, %arg1, %c0_i32_99 : i32
    %418 = arith.extui %417 : i1 to i32
    %c0_i32_100 = arith.constant 0 : i32
    %419 = arith.cmpi ne, %418, %c0_i32_100 : i32
    scf.if %419 {
      %c0_101 = arith.constant 0 : index
      %c0_102 = arith.constant 0 : index
      %420 = vector.load %arg6[%c0_101, %c0_102] : memref<8x128xf32, #tpu.memory_space<vmem>>, vector<8x128xf32>
      tpu.vector_store %arg6[%c0_101, %c0_102], %402 {strides = array<i32>} : memref<8x128xf32, #tpu.memory_space<vmem>>, vector<8x128xf32>,
      %c0_103 = arith.constant 0 : index
      %c0_104 = arith.constant 0 : index
      %421 = vector.load %arg7[%c0_103, %c0_104] : memref<8x128xf32, #tpu.memory_space<vmem>>, vector<8x128xf32>
      tpu.vector_store %arg7[%c0_103, %c0_104], %405 {strides = array<i32>} : memref<8x128xf32, #tpu.memory_space<vmem>>, vector<8x128xf32>,
    } else {
    }
    return
  }
  func.func @transform_0(%arg0: i32, %arg1: i32) -> (i32, i32, i32) {
    %c0_i32 = arith.constant 0 : i32
    %c0_i32_0 = arith.constant 0 : i32
    return %arg1, %arg0, %c0_i32 : i32, i32, i32
  }
  func.func @transform_1(%arg0: i32, %arg1: i32) -> (i32, i32) {
    %c0_i32 = arith.constant 0 : i32
    %c0_i32_0 = arith.constant 0 : i32
    return %arg0, %c0_i32 : i32, i32
  }
  func.func @transform_2(%arg0: i32, %arg1: i32) -> (i32, i32) {
    %c0_i32 = arith.constant 0 : i32
    %c0_i32_0 = arith.constant 0 : i32
    %c0_i32_1 = arith.constant 0 : i32
    return %c0_i32, %c0_i32_0 : i32, i32
  }
  func.func @transform_3(%arg0: i32, %arg1: i32) -> (i32, i32, i32) {
    %c0_i32 = arith.constant 0 : i32
    %c0_i32_0 = arith.constant 0 : i32
    return %arg1, %arg0, %c0_i32 : i32, i32, i32
  }
  func.func @transform_4(%arg0: i32, %arg1: i32) -> (i32, i32) {
    %c0_i32 = arith.constant 0 : i32
    %c0_i32_0 = arith.constant 0 : i32
    return %arg0, %c0_i32 : i32, i32
  }
  func.func @transform_5(%arg0: i32, %arg1: i32) -> (i32, i32) {
    %c0_i32 = arith.constant 0 : i32
    %c0_i32_0 = arith.constant 0 : i32
    return %arg0, %c0_i32 : i32, i32
  }
}

</mosaic_0001>

<llo_original>
// kernel: lstm_forward.3
$region0: #{lstm_forward.3}
  #allocation0 [shape = 'u32[]', space=smem, size = 0x4, offset = 0x4, fixed_abs, tag = 'smem constant byte address 0x4 - core index']
  #allocation1 [shape = 'u32[144,128]{1,0:T(1,128)}', space=vmem, size = 0x12000, scoped, tag = 'internal scratch']
  #allocation2 [shape = 'f32[8,128]{1,0:T(8,128)}', space=vmem, size = 0x1000, scoped, tag = 'scratch operand']
  #allocation3 [shape = 'f32[8,128]{1,0:T(8,128)}', space=vmem, size = 0x1000, scoped, tag = 'scratch operand']
  %s0 = inlined_call_operand.vmem [shape: bf16[8,8,512], index: 0, kind: input, shape index: {}]
  %s1 = inlined_call_operand.vmem [shape: s32[8,1], index: 1, kind: input, shape index: {}]
  %s2 = inlined_call_operand.vmem [shape: bf16[128,512], index: 2, kind: input, shape index: {}]
  %s3 = inlined_call_operand.hbm [shape: bf16[8,8,128], index: 3, kind: output, shape index: {0}]
  %s4 = inlined_call_operand.vmem [shape: f32[8,128], index: 4, kind: output, shape index: {1}]
  %s5 = inlined_call_operand.hbm [shape: f32[8,128], index: 5, kind: output, shape index: {2}]
  %6 = xla_tuple %s3, %s4, %s5
  %s7 = sld [smem:[#allocation0]]
  $region46: #{lstm_forward.3} parent=0
    _
  %s9 = ssub.s32 1, %s7
  %s10 = scalar_select 0, %s9, %s7
  $region1: #{lstm_forward.3} parent=0
    #allocation4 [shape = 'u8[16384]{0}', space=vmem, size = 0x4000, scoped, tag = 'output window, operand 0, single buffered']
    #allocation5 [shape = 's32[1]{0}', space=sflag, size = 0x4, scoped, tag = 'scoped memory for lstm_forward.3']
    #allocation6 [shape = 'u8[4096]{0}', space=vmem, size = 0x1000, scoped, tag = 'output window, operand 2, single buffered']
    #allocation7 [shape = 's32[1]{0}', space=sflag, size = 0x4, scoped, tag = 'scoped memory for lstm_forward.3']
    %11 = vsyncpa [#allocation5], 0
    %12 = vsyncpa [#allocation7], 0
    // Predicated region
    $region2: #{lstm_forward.3} parent=1 // pred_check
      _
    $region3: #{lstm_forward.3} parent=1 // pred_check_branch
      %14 = sbr.rel (0) target = $region5
    $region4: #{lstm_forward.3} parent=1 // pred_region
      _
    $region5: #{lstm_forward.3} parent=1 // pred_fallthru
      _
    // Predicated region
    $region6: #{lstm_forward.3} parent=1 // pred_check
      _
    $region7: #{lstm_forward.3} parent=1 // pred_check_branch
      %16 = sbr.rel (0) target = $region9
    $region8: #{lstm_forward.3} parent=1 // pred_region
      _
    $region9: #{lstm_forward.3} parent=1 // pred_fallthru
      _
    // Predicated region
    $region10: #{lstm_forward.3} parent=1 // pred_check
      _
    $region11: #{lstm_forward.3} parent=1 // pred_check_branch
      %18 = sbr.rel (0) target = $region13
    $region12: #{lstm_forward.3} parent=1 // pred_region
      _
    $region13: #{lstm_forward.3} parent=1 // pred_fallthru
      _
    %p20 = scmp.eq.s32.totalorder 0, 0
    // Predicated region
    $region14: #{lstm_forward.3} parent=1 // pred_check
      %p21 = pneg %p20
    $region15: #{lstm_forward.3} parent=1 // pred_check_branch
      %23 = sbr.rel (%p21) target = $region17
    $region16: #{lstm_forward.3} parent=1 // pred_region
      %24 = vst [vmem:[#allocation2] sm:$0xff] 0.0
      %25 = vst [vmem:[#allocation3] sm:$0xff] 0.0
    $region17: #{lstm_forward.3} parent=1 // pred_fallthru
      _
    %v26 = vld [vmem:[%s1] sm:$0xff]
    %s27 = smul.u32 0, 8
    %v28 = vld [vmem:[#allocation2] sm:$0xff]
    %v29 = vld [vmem:[#allocation3] sm:$0xff]
    %v30 = vld [vmem:[%s0] sm:$0xff]
    %v31 = vld [vmem:[%s0 + $0x8] sm:$0xff]
    %v32 = vunpack.c.l.bf16 %v30
    %v33 = vunpack.c.h.bf16 %v30
    %v34 = vunpack.c.l.bf16 %v31
    %v35 = vunpack.c.h.bf16 %v31
    %v36 = vpack.c.bf16 %v28, %v28
    %v37 = vld [vmem:[%s2] sm:$0xff]
    %v38 = vld [vmem:[%s2 + $0x8] sm:$0xff]
    %v39 = vld [vmem:[%s2 + $0x10] sm:$0xff]
    %v40 = vld [vmem:[%s2 + $0x18] sm:$0xff]
    %v41 = vld [vmem:[%s2 + $0x20] sm:$0xff]
    %v42 = vld [vmem:[%s2 + $0x28] sm:$0xff]
    %v43 = vld [vmem:[%s2 + $0x30] sm:$0xff]
    %v44 = vld [vmem:[%s2 + $0x38] sm:$0xff]
    %v45 = vld [vmem:[%s2 + $0x40] sm:$0xff]
    %v46 = vld [vmem:[%s2 + $0x48] sm:$0xff]
    %v47 = vld [vmem:[%s2 + $0x50] sm:$0xff]
    %v48 = vld [vmem:[%s2 + $0x58] sm:$0xff]
    %v49 = vld [vmem:[%s2 + $0x60] sm:$0xff]
    %v50 = vld [vmem:[%s2 + $0x68] sm:$0xff]
    %v51 = vld [vmem:[%s2 + $0x70] sm:$0xff]
    %v52 = vld [vmem:[%s2 + $0x78] sm:$0xff]
    %v53 = vld [vmem:[%s2 + $0x80] sm:$0xff]
    %v54 = vld [vmem:[%s2 + $0x88] sm:$0xff]
    %v55 = vld [vmem:[%s2 + $0x90] sm:$0xff]
    %v56 = vld [vmem:[%s2 + $0x98] sm:$0xff]
    %v57 = vld [vmem:[%s2 + $0xa0] sm:$0xff]
    %v58 = vld [vmem:[%s2 + $0xa8] sm:$0xff]
    %v59 = vld [vmem:[%s2 + $0xb0] sm:$0xff]
    %v60 = vld [vmem:[%s2 + $0xb8] sm:$0xff]
    %v61 = vld [vmem:[%s2 + $0xc0] sm:$0xff]
    %v62 = vld [vmem:[%s2 + $0xc8] sm:$0xff]
    %v63 = vld [vmem:[%s2 + $0xd0] sm:$0xff]
    %v64 = vld [vmem:[%s2 + $0xd8] sm:$0xff]
    %v65 = vld [vmem:[%s2 + $0xe0] sm:$0xff]
    %v66 = vld [vmem:[%s2 + $0xe8] sm:$0xff]
    %v67 = vld [vmem:[%s2 + $0xf0] sm:$0xff]
    %v68 = vld [vmem:[%s2 + $0xf8] sm:$0xff]
    %v101 = vunpack.c.l.b16 %v37
    %v102 = vunpack.c.h.b16 %v37
    %v103 = vunpack.c.l.b16 %v38
    %v104 = vunpack.c.h.b16 %v38
    %v105 = vunpack.c.l.b16 %v39
    %v106 = vunpack.c.h.b16 %v39
    %v107 = vunpack.c.l.b16 %v40
    %v108 = vunpack.c.h.b16 %v40
    %v109 = vunpack.c.l.b16 %v41
    %v110 = vunpack.c.h.b16 %v41
    %v111 = vunpack.c.l.b16 %v42
    %v112 = vunpack.c.h.b16 %v42
    %v113 = vunpack.c.l.b16 %v43
    %v114 = vunpack.c.h.b16 %v43
    %v115 = vunpack.c.l.b16 %v44
    %v116 = vunpack.c.h.b16 %v44
    %v117 = vunpack.c.l.b16 %v45
    %v118 = vunpack.c.h.b16 %v45
    %v119 = vunpack.c.l.b16 %v46
    %v120 = vunpack.c.h.b16 %v46
    %v121 = vunpack.c.l.b16 %v47
    %v122 = vunpack.c.h.b16 %v47
    %v123 = vunpack.c.l.b16 %v48
    %v124 = vunpack.c.h.b16 %v48
    %v125 = vunpack.c.l.b16 %v49
    %v126 = vunpack.c.h.b16 %v49
    %v127 = vunpack.c.l.b16 %v50
    %v128 = vunpack.c.h.b16 %v50
    %v129 = vunpack.c.l.b16 %v51
    %v130 = vunpack.c.h.b16 %v51
    %v131 = vunpack.c.l.b16 %v52
    %v132 = vunpack.c.h.b16 %v52
    %v133 = vunpack.c.l.b16 %v53
    %v134 = vunpack.c.h.b16 %v53
    %v135 = vunpack.c.l.b16 %v54
    %v136 = vunpack.c.h.b16 %v54
    %v137 = vunpack.c.l.b16 %v55
    %v138 = vunpack.c.h.b16 %v55
    %v139 = vunpack.c.l.b16 %v56
    %v140 = vunpack.c.h.b16 %v56
    %v141 = vunpack.c.l.b16 %v57
    %v142 = vunpack.c.h.b16 %v57
    %v143 = vunpack.c.l.b16 %v58
    %v144 = vunpack.c.h.b16 %v58
    %v145 = vunpack.c.l.b16 %v59
    %v146 = vunpack.c.h.b16 %v59
    %v147 = vunpack.c.l.b16 %v60
    %v148 = vunpack.c.h.b16 %v60
    %v149 = vunpack.c.l.b16 %v61
    %v150 = vunpack.c.h.b16 %v61
    %v151 = vunpack.c.l.b16 %v62
    %v152 = vunpack.c.h.b16 %v62
    %v153 = vunpack.c.l.b16 %v63
    %v154 = vunpack.c.h.b16 %v63
    %v155 = vunpack.c.l.b16 %v64
    %v156 = vunpack.c.h.b16 %v64
    %v157 = vunpack.c.l.b16 %v65
    %v158 = vunpack.c.h.b16 %v65
    %v159 = vunpack.c.l.b16 %v66
    %v160 = vunpack.c.h.b16 %v66
    %v161 = vunpack.c.l.b16 %v67
    %v162 = vunpack.c.h.b16 %v67
    %v163 = vunpack.c.l.b16 %v68
    %v164 = vunpack.c.h.b16 %v68
    %v165 = vpack.c.b16 %v105, %v101
    %v166 = vpack.c.b16 %v106, %v102
    %v167 = vpack.c.b16 %v107, %v103
    %v168 = vpack.c.b16 %v108, %v104
    %v169 = vpack.c.b16 %v113, %v109
    %v170 = vpack.c.b16 %v114, %v110
    %v171 = vpack.c.b16 %v115, %v111
    %v172 = vpack.c.b16 %v116, %v112
    %v173 = vpack.c.b16 %v121, %v117
    %v174 = vpack.c.b16 %v122, %v118
    %v175 = vpack.c.b16 %v123, %v119
    %v176 = vpack.c.b16 %v124, %v120
    %v177 = vpack.c.b16 %v129, %v125
    %v178 = vpack.c.b16 %v130, %v126
    %v179 = vpack.c.b16 %v131, %v127
    %v180 = vpack.c.b16 %v132, %v128
    %v181 = vpack.c.b16 %v137, %v133
    %v182 = vpack.c.b16 %v138, %v134
    %v183 = vpack.c.b16 %v139, %v135
    %v184 = vpack.c.b16 %v140, %v136
    %v185 = vpack.c.b16 %v145, %v141
    %v186 = vpack.c.b16 %v146, %v142
    %v187 = vpack.c.b16 %v147, %v143
    %v188 = vpack.c.b16 %v148, %v144
    %v189 = vpack.c.b16 %v153, %v149
    %v190 = vpack.c.b16 %v154, %v150
    %v191 = vpack.c.b16 %v155, %v151
    %v192 = vpack.c.b16 %v156, %v152
    %v193 = vpack.c.b16 %v161, %v157
    %v194 = vpack.c.b16 %v162, %v158
    %v195 = vpack.c.b16 %v163, %v159
    %v196 = vpack.c.b16 %v164, %v160
    %229 = vmatprep.subr.bf16.mxu0 %v166
    %230 = vmatpush1.bf16.msra.mxu0 %v165
    %231 = vmatprep.subr.bf16.mxu0 %v170
    %232 = vmatpush1.bf16.msra.mxu0 %v169
    %233 = vmatprep.subr.bf16.mxu0 %v174
    %234 = vmatpush1.bf16.msra.mxu0 %v173
    %235 = vmatprep.subr.bf16.mxu0 %v178
    %236 = vmatpush1.bf16.msra.mxu0 %v177
    %237 = vmatprep.subr.bf16.mxu0 %v182
    %238 = vmatpush1.bf16.msra.mxu0 %v181
    %239 = vmatprep.subr.bf16.mxu0 %v186
    %240 = vmatpush1.bf16.msra.mxu0 %v185
    %241 = vmatprep.subr.bf16.mxu0 %v190
    %242 = vmatpush1.bf16.msra.mxu0 %v189
    %243 = vmatprep.subr.bf16.mxu0 %v194
    %244 = vmatpush1.bf16.msra.mxu0 %v193
    %245 = vmatprep.subr.bf16.mxu0 0
    %246 = vmatpush1.bf16.msra.mxu0 0
    %247 = vmatprep.subr.bf16.mxu0 0
    %248 = vmatpush1.bf16.msra.mxu0 0
    %249 = vmatprep.subr.bf16.mxu0 0
    %250 = vmatpush1.bf16.msra.mxu0 0
    %251 = vmatprep.subr.bf16.mxu0 0
    %252 = vmatpush1.bf16.msra.mxu0 0
    %253 = vmatprep.subr.bf16.mxu0 0
    %254 = vmatpush1.bf16.msra.mxu0 0
    %255 = vmatprep.subr.bf16.mxu0 0
    %256 = vmatpush1.bf16.msra.mxu0 0
    %257 = vmatprep.subr.bf16.mxu0 0
    %258 = vmatpush1.bf16.msra.mxu0 0
    %259 = vmatprep.subr.bf16.mxu0 0
    %260 = vmatpush1.bf16.msra.mxu0 0
    %261 = vmatprep.mubr.bf16.mxu0 0
    %262 = vmatmul.mubr.bf16.gmra.mrb[0].mxu0 %v36
    %v263 = vpop.f32.mrb[0].mxu0
    %v264 = vadd.f32 0.0, %v263
    %v265 = vpop.f32.mrb[0].mxu0
    %v266 = vadd.f32 0.0, %v265
    %v267 = vpop.f32.mrb[0].mxu0
    %v268 = vpop.f32.mrb[0].mxu0
    %269 = vdwg.mxu0
    %270 = vmatprep.subr.bf16.mxu0 %v168
    %271 = vmatpush1.bf16.msra.mxu0 %v167
    %272 = vmatprep.subr.bf16.mxu0 %v172
    %273 = vmatpush1.bf16.msra.mxu0 %v171
    %274 = vmatprep.subr.bf16.mxu0 %v176
    %275 = vmatpush1.bf16.msra.mxu0 %v175
    %276 = vmatprep.subr.bf16.mxu0 %v180
    %277 = vmatpush1.bf16.msra.mxu0 %v179
    %278 = vmatprep.subr.bf16.mxu0 %v184
    %279 = vmatpush1.bf16.msra.mxu0 %v183
    %280 = vmatprep.subr.bf16.mxu0 %v188
    %281 = vmatpush1.bf16.msra.mxu0 %v187
    %282 = vmatprep.subr.bf16.mxu0 %v192
    %283 = vmatpush1.bf16.msra.mxu0 %v191
    %284 = vmatprep.subr.bf16.mxu0 %v196
    %285 = vmatpush1.bf16.msra.mxu0 %v195
    %286 = vmatprep.subr.bf16.mxu0 0
    %287 = vmatpush1.bf16.msra.mxu0 0
    %288 = vmatprep.subr.bf16.mxu0 0
    %289 = vmatpush1.bf16.msra.mxu0 0
    %290 = vmatprep.subr.bf16.mxu0 0
    %291 = vmatpush1.bf16.msra.mxu0 0
    %292 = vmatprep.subr.bf16.mxu0 0
    %293 = vmatpush1.bf16.msra.mxu0 0
    %294 = vmatprep.subr.bf16.mxu0 0
    %295 = vmatpush1.bf16.msra.mxu0 0
    %296 = vmatprep.subr.bf16.mxu0 0
    %297 = vmatpush1.bf16.msra.mxu0 0
    %298 = vmatprep.subr.bf16.mxu0 0
    %299 = vmatpush1.bf16.msra.mxu0 0
    %300 = vmatprep.subr.bf16.mxu0 0
    %301 = vmatpush1.bf16.msra.mxu0 0
    %302 = vmatprep.mubr.bf16.mxu0 0
    %303 = vmatmul.mubr.bf16.gmra.mrb[0].mxu0 %v36
    %v304 = vpop.f32.mrb[0].mxu0
    %v305 = vadd.f32 0.0, %v304
    %v306 = vpop.f32.mrb[0].mxu0
    %v307 = vadd.f32 0.0, %v306
    %v308 = vpop.f32.mrb[0].mxu0
    %v309 = vpop.f32.mrb[0].mxu0
    %310 = vdwg.mxu0
    %v311 = vadd.f32 %v32, %v264
    %v312 = vadd.f32 %v33, %v266
    %v313 = vadd.f32 %v34, %v305
    %v314 = vadd.f32 %v35, %v307
    %v315 = vxor.u32 %v311, 2147483648
    %v316 = vmul.f32 %v315, 1.442695
    %v317 = vpow.pop %v316
    %v318 = vadd.f32 %v317, 1.0
    %v319 = vrcp.pop %v318
    %v320 = vmul.f32 1.0, %v319
    %v321 = vxor.u32 %v312, 2147483648
    %v322 = vmul.f32 %v321, 1.442695
    %v323 = vpow.pop %v322
    %v324 = vadd.f32 %v323, 1.0
    %v325 = vrcp.pop %v324
    %v326 = vmul.f32 1.0, %v325
    %v327 = vtanh.pop %v313
    %v328 = vxor.u32 %v314, 2147483648
    %v329 = vmul.f32 %v328, 1.442695
    %v330 = vpow.pop %v329
    %v331 = vadd.f32 %v330, 1.0
    %v332 = vrcp.pop %v331
    %v333 = vmul.f32 1.0, %v332
    %v334 = vmul.f32 %v326, %v29
    %v335 = vmul.f32 %v320, %v327
    %v336 = vadd.f32 %v334, %v335
    %v337 = vtanh.pop %v336
    %v338 = vmul.f32 %v333, %v337
    %v339 = vstv %s27
    %vm340 = vcmp.lt.s32.totalorder %v339, %v26
    %v341 = vsel %vm340, 1, 0
    %342 = vset.pattern.permute.xlu0 0
    %343 = vperm.xlu0 %342, %v341
    %v344 = vpop.permute.xlu0 %343
    %vm345 = vcmp.eq.s32.totalorder %v344, 1
    %v346 = vsel %vm345, %v338, %v28
    %v347 = vsel %vm345, %v336, %v29
    %v348 = vsel %vm345, %v338, 0.0
    %v349 = vpack.c.bf16 %v348, %v348
    %350 = vst [vmem:[#allocation4] sm:$0xf] %v349
    %s351 = scalar_lea.vmem %s0, 16
    %v352 = vld [vmem:[%s351] sm:$0xff]
    %v353 = vld [vmem:[%s351 + $0x8] sm:$0xff]
    %v354 = vunpack.c.l.bf16 %v352
    %v355 = vunpack.c.h.bf16 %v352
    %v356 = vunpack.c.l.bf16 %v353
    %v357 = vunpack.c.h.bf16 %v353
    %v358 = vpack.c.bf16 %v346, %v346
    %v359 = vld [vmem:[%s2] sm:$0xff]
    %v360 = vld [vmem:[%s2 + $0x8] sm:$0xff]
    %v361 = vld [vmem:[%s2 + $0x10] sm:$0xff]
    %v362 = vld [vmem:[%s2 + $0x18] sm:$0xff]
    %v363 = vld [vmem:[%s2 + $0x20] sm:$0xff]
    %v364 = vld [vmem:[%s2 + $0x28] sm:$0xff]
    %v365 = vld [vmem:[%s2 + $0x30] sm:$0xff]
    %v366 = vld [vmem:[%s2 + $0x38] sm:$0xff]
    %v367 = vld [vmem:[%s2 + $0x40] sm:$0xff]
    %v368 = vld [vmem:[%s2 + $0x48] sm:$0xff]
    %v369 = vld [vmem:[%s2 + $0x50] sm:$0xff]
    %v370 = vld [vmem:[%s2 + $0x58] sm:$0xff]
    %v371 = vld [vmem:[%s2 + $0x60] sm:$0xff]
    %v372 = vld [vmem:[%s2 + $0x68] sm:$0xff]
    %v373 = vld [vmem:[%s2 + $0x70] sm:$0xff]
    %v374 = vld [vmem:[%s2 + $0x78] sm:$0xff]
    %v375 = vld [vmem:[%s2 + $0x80] sm:$0xff]
    %v376 = vld [vmem:[%s2 + $0x88] sm:$0xff]
    %v377 = vld [vmem:[%s2 + $0x90] sm:$0xff]
    %v378 = vld [vmem:[%s2 + $0x98] sm:$0xff]
    %v379 = vld [vmem:[%s2 + $0xa0] sm:$0xff]
    %v380 = vld [vmem:[%s2 + $0xa8] sm:$0xff]
    %v381 = vld [vmem:[%s2 + $0xb0] sm:$0xff]
    %v382 = vld [vmem:[%s2 + $0xb8] sm:$0xff]
    %v383 = vld [vmem:[%s2 + $0xc0] sm:$0xff]
    %v384 = vld [vmem:[%s2 + $0xc8] sm:$0xff]
    %v385 = vld [vmem:[%s2 + $0xd0] sm:$0xff]
    %v386 = vld [vmem:[%s2 + $0xd8] sm:$0xff]
    %v387 = vld [vmem:[%s2 + $0xe0] sm:$0xff]
    %v388 = vld [vmem:[%s2 + $0xe8] sm:$0xff]
    %v389 = vld [vmem:[%s2 + $0xf0] sm:$0xff]
    %v390 = vld [vmem:[%s2 + $0xf8] sm:$0xff]
    %v423 = vunpack.c.l.b16 %v359
    %v424 = vunpack.c.h.b16 %v359
    %v425 = vunpack.c.l.b16 %v360
    %v426 = vunpack.c.h.b16 %v360
    %v427 = vunpack.c.l.b16 %v361
    %v428 = vunpack.c.h.b16 %v361
    %v429 = vunpack.c.l.b16 %v362
    %v430 = vunpack.c.h.b16 %v362
    %v431 = vunpack.c.l.b16 %v363
    %v432 = vunpack.c.h.b16 %v363
    %v433 = vunpack.c.l.b16 %v364
    %v434 = vunpack.c.h.b16 %v364
    %v435 = vunpack.c.l.b16 %v365
    %v436 = vunpack.c.h.b16 %v365
    %v437 = vunpack.c.l.b16 %v366
    %v438 = vunpack.c.h.b16 %v366
    %v439 = vunpack.c.l.b16 %v367
    %v440 = vunpack.c.h.b16 %v367
    %v441 = vunpack.c.l.b16 %v368
    %v442 = vunpack.c.h.b16 %v368
    %v443 = vunpack.c.l.b16 %v369
    %v444 = vunpack.c.h.b16 %v369
    %v445 = vunpack.c.l.b16 %v370
    %v446 = vunpack.c.h.b16 %v370
    %v447 = vunpack.c.l.b16 %v371
    %v448 = vunpack.c.h.b16 %v371
    %v449 = vunpack.c.l.b16 %v372
    %v450 = vunpack.c.h.b16 %v372
    %v451 = vunpack.c.l.b16 %v373
    %v452 = vunpack.c.h.b16 %v373
    %v453 = vunpack.c.l.b16 %v374
    %v454 = vunpack.c.h.b16 %v374
    %v455 = vunpack.c.l.b16 %v375
    %v456 = vunpack.c.h.b16 %v375
    %v457 = vunpack.c.l.b16 %v376
    %v458 = vunpack.c.h.b16 %v376
    %v459 = vunpack.c.l.b16 %v377
    %v460 = vunpack.c.h.b16 %v377
    %v461 = vunpack.c.l.b16 %v378
    %v462 = vunpack.c.h.b16 %v378
    %v463 = vunpack.c.l.b16 %v379
    %v464 = vunpack.c.h.b16 %v379
    %v465 = vunpack.c.l.b16 %v380
    %v466 = vunpack.c.h.b16 %v380
    %v467 = vunpack.c.l.b16 %v381
    %v468 = vunpack.c.h.b16 %v381
    %v469 = vunpack.c.l.b16 %v382
    %v470 = vunpack.c.h.b16 %v382
    %v471 = vunpack.c.l.b16 %v383
    %v472 = vunpack.c.h.b16 %v383
    %v473 = vunpack.c.l.b16 %v384
    %v474 = vunpack.c.h.b16 %v384
    %v475 = vunpack.c.l.b16 %v385
    %v476 = vunpack.c.h.b16 %v385
    %v477 = vunpack.c.l.b16 %v386
    %v478 = vunpack.c.h.b16 %v386
    %v479 = vunpack.c.l.b16 %v387
    %v480 = vunpack.c.h.b16 %v387
    %v481 = vunpack.c.l.b16 %v388
    %v482 = vunpack.c.h.b16 %v388
    %v483 = vunpack.c.l.b16 %v389
    %v484 = vunpack.c.h.b16 %v389
    %v485 = vunpack.c.l.b16 %v390
    %v486 = vunpack.c.h.b16 %v390
    %v487 = vpack.c.b16 %v427, %v423
    %v488 = vpack.c.b16 %v428, %v424
    %v489 = vpack.c.b16 %v429, %v425
    %v490 = vpack.c.b16 %v430, %v426
    %v491 = vpack.c.b16 %v435, %v431
    %v492 = vpack.c.b16 %v436, %v432
    %v493 = vpack.c.b16 %v437, %v433
    %v494 = vpack.c.b16 %v438, %v434
    %v495 = vpack.c.b16 %v443, %v439
    %v496 = vpack.c.b16 %v444, %v440
    %v497 = vpack.c.b16 %v445, %v441
    %v498 = vpack.c.b16 %v446, %v442
    %v499 = vpack.c.b16 %v451, %v447
    %v500 = vpack.c.b16 %v452, %v448
    %v501 = vpack.c.b16 %v453, %v449
    %v502 = vpack.c.b16 %v454, %v450
    %v503 = vpack.c.b16 %v459, %v455
    %v504 = vpack.c.b16 %v460, %v456
    %v505 = vpack.c.b16 %v461, %v457
    %v506 = vpack.c.b16 %v462, %v458
    %v507 = vpack.c.b16 %v467, %v463
    %v508 = vpack.c.b16 %v468, %v464
    %v509 = vpack.c.b16 %v469, %v465
    %v510 = vpack.c.b16 %v470, %v466
    %v511 = vpack.c.b16 %v475, %v471
    %v512 = vpack.c.b16 %v476, %v472
    %v513 = vpack.c.b16 %v477, %v473
    %v514 = vpack.c.b16 %v478, %v474
    %v515 = vpack.c.b16 %v483, %v479
    %v516 = vpack.c.b16 %v484, %v480
    %v517 = vpack.c.b16 %v485, %v481
    %v518 = vpack.c.b16 %v486, %v482
    %551 = vmatprep.subr.bf16.mxu0 %v488
    %552 = vmatpush1.bf16.msra.mxu0 %v487
    %553 = vmatprep.subr.bf16.mxu0 %v492
    %554 = vmatpush1.bf16.msra.mxu0 %v491
    %555 = vmatprep.subr.bf16.mxu0 %v496
    %556 = vmatpush1.bf16.msra.mxu0 %v495
    %557 = vmatprep.subr.bf16.mxu0 %v500
    %558 = vmatpush1.bf16.msra.mxu0 %v499
    %559 = vmatprep.subr.bf16.mxu0 %v504
    %560 = vmatpush1.bf16.msra.mxu0 %v503
    %561 = vmatprep.subr.bf16.mxu0 %v508
    %562 = vmatpush1.bf16.msra.mxu0 %v507
    %563 = vmatprep.subr.bf16.mxu0 %v512
    %564 = vmatpush1.bf16.msra.mxu0 %v511
    %565 = vmatprep.subr.bf16.mxu0 %v516
    %566 = vmatpush1.bf16.msra.mxu0 %v515
    %567 = vmatprep.subr.bf16.mxu0 0
    %568 = vmatpush1.bf16.msra.mxu0 0
    %569 = vmatprep.subr.bf16.mxu0 0
    %570 = vmatpush1.bf16.msra.mxu0 0
    %571 = vmatprep.subr.bf16.mxu0 0
    %572 = vmatpush1.bf16.msra.mxu0 0
    %573 = vmatprep.subr.bf16.mxu0 0
    %574 = vmatpush1.bf16.msra.mxu0 0
    %575 = vmatprep.subr.bf16.mxu0 0
    %576 = vmatpush1.bf16.msra.mxu0 0
    %577 = vmatprep.subr.bf16.mxu0 0
    %578 = vmatpush1.bf16.msra.mxu0 0
    %579 = vmatprep.subr.bf16.mxu0 0
    %580 = vmatpush1.bf16.msra.mxu0 0
    %581 = vmatprep.subr.bf16.mxu0 0
    %582 = vmatpush1.bf16.msra.mxu0 0
    %583 = vmatprep.mubr.bf16.mxu0 0
    %584 = vmatmul.mubr.bf16.gmra.mrb[0].mxu0 %v358
    %v585 = vpop.f32.mrb[0].mxu0
    %v586 = vadd.f32 0.0, %v585
    %v587 = vpop.f32.mrb[0].mxu0
    %v588 = vadd.f32 0.0, %v587
    %v589 = vpop.f32.mrb[0].mxu0
    %v590 = vpop.f32.mrb[0].mxu0
    %591 = vdwg.mxu0
    %592 = vmatprep.subr.bf16.mxu0 %v490
    %593 = vmatpush1.bf16.msra.mxu0 %v489
    %594 = vmatprep.subr.bf16.mxu0 %v494
    %595 = vmatpush1.bf16.msra.mxu0 %v493
    %596 = vmatprep.subr.bf16.mxu0 %v498
    %597 = vmatpush1.bf16.msra.mxu0 %v497
    %598 = vmatprep.subr.bf16.mxu0 %v502
    %599 = vmatpush1.bf16.msra.mxu0 %v501
    %600 = vmatprep.subr.bf16.mxu0 %v506
    %601 = vmatpush1.bf16.msra.mxu0 %v505
    %602 = vmatprep.subr.bf16.mxu0 %v510
    %603 = vmatpush1.bf16.msra.mxu0 %v509
    %604 = vmatprep.subr.bf16.mxu0 %v514
    %605 = vmatpush1.bf16.msra.mxu0 %v513
    %606 = vmatprep.subr.bf16.mxu0 %v518
    %607 = vmatpush1.bf16.msra.mxu0 %v517
    %608 = vmatprep.subr.bf16.mxu0 0
    %609 = vmatpush1.bf16.msra.mxu0 0
    %610 = vmatprep.subr.bf16.mxu0 0
    %611 = vmatpush1.bf16.msra.mxu0 0
    %612 = vmatprep.subr.bf16.mxu0 0
    %613 = vmatpush1.bf16.msra.mxu0 0
    %614 = vmatprep.subr.bf16.mxu0 0
    %615 = vmatpush1.bf16.msra.mxu0 0
    %616 = vmatprep.subr.bf16.mxu0 0
    %617 = vmatpush1.bf16.msra.mxu0 0
    %618 = vmatprep.subr.bf16.mxu0 0
    %619 = vmatpush1.bf16.msra.mxu0 0
    %620 = vmatprep.subr.bf16.mxu0 0
    %621 = vmatpush1.bf16.msra.mxu0 0
    %622 = vmatprep.subr.bf16.mxu0 0
    %623 = vmatpush1.bf16.msra.mxu0 0
    %624 = vmatprep.mubr.bf16.mxu0 0
    %625 = vmatmul.mubr.bf16.gmra.mrb[0].mxu0 %v358
    %v626 = vpop.f32.mrb[0].mxu0
    %v627 = vadd.f32 0.0, %v626
    %v628 = vpop.f32.mrb[0].mxu0
    %v629 = vadd.f32 0.0, %v628
    %v630 = vpop.f32.mrb[0].mxu0
    %v631 = vpop.f32.mrb[0].mxu0
    %632 = vdwg.mxu0
    %v633 = vadd.f32 %v354, %v586
    %v634 = vadd.f32 %v355, %v588
    %v635 = vadd.f32 %v356, %v627
    %v636 = vadd.f32 %v357, %v629
    %v637 = vxor.u32 %v633, 2147483648
    %v638 = vmul.f32 %v637, 1.442695
    %v639 = vpow.pop %v638
    %v640 = vadd.f32 %v639, 1.0
    %v641 = vrcp.pop %v640
    %v642 = vmul.f32 1.0, %v641
    %v643 = vxor.u32 %v634, 2147483648
    %v644 = vmul.f32 %v643, 1.442695
    %v645 = vpow.pop %v644
    %v646 = vadd.f32 %v645, 1.0
    %v647 = vrcp.pop %v646
    %v648 = vmul.f32 1.0, %v647
    %v649 = vtanh.pop %v635
    %v650 = vxor.u32 %v636, 2147483648
    %v651 = vmul.f32 %v650, 1.442695
    %v652 = vpow.pop %v651
    %v653 = vadd.f32 %v652, 1.0
    %v654 = vrcp.pop %v653
    %v655 = vmul.f32 1.0, %v654
    %v656 = vmul.f32 %v648, %v347
    %v657 = vmul.f32 %v642, %v649
    %v658 = vadd.f32 %v656, %v657
    %v659 = vtanh.pop %v658
    %v660 = vmul.f32 %v655, %v659
    %s661 = sadd.s32 %s27, 1
    %v662 = vstv %s661
    %vm663 = vcmp.lt.s32.totalorder %v662, %v26
    %v664 = vsel %vm663, 1, 0
    %665 = vset.pattern.permute.xlu0 0
    %666 = vperm.xlu0 %665, %v664
    %v667 = vpop.permute.xlu0 %666
    %vm668 = vcmp.eq.s32.totalorder %v667, 1
    %v669 = vsel %vm668, %v660, %v346
    %v670 = vsel %vm668, %v658, %v347
    %v671 = vsel %vm668, %v660, 0.0
    %v672 = vpack.c.bf16 %v671, %v671
    %s673 = scalar_lea.vmem [#allocation4], 4
    %674 = vst [vmem:[%s673] sm:$0xf] %v672
    %s675 = scalar_lea.vmem %s0, 32
    %v676 = vld [vmem:[%s675] sm:$0xff]
    %v677 = vld [vmem:[%s675 + $0x8] sm:$0xff]
    %v678 = vunpack.c.l.bf16 %v676
    %v679 = vunpack.c.h.bf16 %v676
    %v680 = vunpack.c.l.bf16 %v677
    %v681 = vunpack.c.h.bf16 %v677
    %v682 = vpack.c.bf16 %v669, %v669
    %v683 = vld [vmem:[%s2] sm:$0xff]
    %v684 = vld [vmem:[%s2 + $0x8] sm:$0xff]
    %v685 = vld [vmem:[%s2 + $0x10] sm:$0xff]
    %v686 = vld [vmem:[%s2 + $0x18] sm:$0xff]
    %v687 = vld [vmem:[%s2 + $0x20] sm:$0xff]
    %v688 = vld [vmem:[%s2 + $0x28] sm:$0xff]
    %v689 = vld [vmem:[%s2 + $0x30] sm:$0xff]
    %v690 = vld [vmem:[%s2 + $0x38] sm:$0xff]
    %v691 = vld [vmem:[%s2 + $0x40] sm:$0xff]
    %v692 = vld [vmem:[%s2 + $0x48] sm:$0xff]
    %v693 = vld [vmem:[%s2 + $0x50] sm:$0xff]
    %v694 = vld [vmem:[%s2 + $0x58] sm:$0xff]
    %v695 = vld [vmem:[%s2 + $0x60] sm:$0xff]
    %v696 = vld [vmem:[%s2 + $0x68] sm:$0xff]
    %v697 = vld [vmem:[%s2 + $0x70] sm:$0xff]
    %v698 = vld [vmem:[%s2 + $0x78] sm:$0xff]
    %v699 = vld [vmem:[%s2 + $0x80] sm:$0xff]
    %v700 = vld [vmem:[%s2 + $0x88] sm:$0xff]
    %v701 = vld [vmem:[%s2 + $0x90] sm:$0xff]
    %v702 = vld [vmem:[%s2 + $0x98] sm:$0xff]
    %v703 = vld [vmem:[%s2 + $0xa0] sm:$0xff]
    %v704 = vld [vmem:[%s2 + $0xa8] sm:$0xff]
    %v705 = vld [vmem:[%s2 + $0xb0] sm:$0xff]
    %v706 = vld [vmem:[%s2 + $0xb8] sm:$0xff]
    %v707 = vld [vmem:[%s2 + $0xc0] sm:$0xff]
    %v708 = vld [vmem:[%s2 + $0xc8] sm:$0xff]
    %v709 = vld [vmem:[%s2 + $0xd0] sm:$0xff]
    %v710 = vld [vmem:[%s2 + $0xd8] sm:$0xff]
    %v711 = vld [vmem:[%s2 + $0xe0] sm:$0xff]
    %v712 = vld [vmem:[%s2 + $0xe8] sm:$0xff]
    %v713 = vld [vmem:[%s2 + $0xf0] sm:$0xff]
    %v714 = vld [vmem:[%s2 + $0xf8] sm:$0xff]
    %v747 = vunpack.c.l.b16 %v683
    %v748 = vunpack.c.h.b16 %v683
    %v749 = vunpack.c.l.b16 %v684
    %v750 = vunpack.c.h.b16 %v684
    %v751 = vunpack.c.l.b16 %v685
    %v752 = vunpack.c.h.b16 %v685
    %v753 = vunpack.c.l.b16 %v686
    %v754 = vunpack.c.h.b16 %v686
    %v755 = vunpack.c.l.b16 %v687
    %v756 = vunpack.c.h.b16 %v687
    %v757 = vunpack.c.l.b16 %v688
    %v758 = vunpack.c.h.b16 %v688
    %v759 = vunpack.c.l.b16 %v689
    %v760 = vunpack.c.h.b16 %v689
    %v761 = vunpack.c.l.b16 %v690
    %v762 = vunpack.c.h.b16 %v690
    %v763 = vunpack.c.l.b16 %v691
    %v764 = vunpack.c.h.b16 %v691
    %v765 = vunpack.c.l.b16 %v692
    %v766 = vunpack.c.h.b16 %v692
    %v767 = vunpack.c.l.b16 %v693
    %v768 = vunpack.c.h.b16 %v693
    %v769 = vunpack.c.l.b16 %v694
    %v770 = vunpack.c.h.b16 %v694
    %v771 = vunpack.c.l.b16 %v695
    %v772 = vunpack.c.h.b16 %v695
    %v773 = vunpack.c.l.b16 %v696
    %v774 = vunpack.c.h.b16 %v696
    %v775 = vunpack.c.l.b16 %v697
    %v776 = vunpack.c.h.b16 %v697
    %v777 = vunpack.c.l.b16 %v698
    %v778 = vunpack.c.h.b16 %v698
    %v779 = vunpack.c.l.b16 %v699
    %v780 = vunpack.c.h.b16 %v699
    %v781 = vunpack.c.l.b16 %v700
    %v782 = vunpack.c.h.b16 %v700
    %v783 = vunpack.c.l.b16 %v701
    %v784 = vunpack.c.h.b16 %v701
    %v785 = vunpack.c.l.b16 %v702
    %v786 = vunpack.c.h.b16 %v702
    %v787 = vunpack.c.l.b16 %v703
    %v788 = vunpack.c.h.b16 %v703
    %v789 = vunpack.c.l.b16 %v704
    %v790 = vunpack.c.h.b16 %v704
    %v791 = vunpack.c.l.b16 %v705
    %v792 = vunpack.c.h.b16 %v705
    %v793 = vunpack.c.l.b16 %v706
    %v794 = vunpack.c.h.b16 %v706
    %v795 = vunpack.c.l.b16 %v707
    %v796 = vunpack.c.h.b16 %v707
    %v797 = vunpack.c.l.b16 %v708
    %v798 = vunpack.c.h.b16 %v708
    %v799 = vunpack.c.l.b16 %v709
    %v800 = vunpack.c.h.b16 %v709
    %v801 = vunpack.c.l.b16 %v710
    %v802 = vunpack.c.h.b16 %v710
    %v803 = vunpack.c.l.b16 %v711
    %v804 = vunpack.c.h.b16 %v711
    %v805 = vunpack.c.l.b16 %v712
    %v806 = vunpack.c.h.b16 %v712
    %v807 = vunpack.c.l.b16 %v713
    %v808 = vunpack.c.h.b16 %v713
    %v809 = vunpack.c.l.b16 %v714
    %v810 = vunpack.c.h.b16 %v714
    %v811 = vpack.c.b16 %v751, %v747
    %v812 = vpack.c.b16 %v752, %v748
    %v813 = vpack.c.b16 %v753, %v749
    %v814 = vpack.c.b16 %v754, %v750
    %v815 = vpack.c.b16 %v759, %v755
    %v816 = vpack.c.b16 %v760, %v756
    %v817 = vpack.c.b16 %v761, %v757
    %v818 = vpack.c.b16 %v762, %v758
    %v819 = vpack.c.b16 %v767, %v763
    %v820 = vpack.c.b16 %v768, %v764
    %v821 = vpack.c.b16 %v769, %v765
    %v822 = vpack.c.b16 %v770, %v766
    %v823 = vpack.c.b16 %v775, %v771
    %v824 = vpack.c.b16 %v776, %v772
    %v825 = vpack.c.b16 %v777, %v773
    %v826 = vpack.c.b16 %v778, %v774
    %v827 = vpack.c.b16 %v783, %v779
    %v828 = vpack.c.b16 %v784, %v780
    %v829 = vpack.c.b16 %v785, %v781
    %v830 = vpack.c.b16 %v786, %v782
    %v831 = vpack.c.b16 %v791, %v787
    %v832 = vpack.c.b16 %v792, %v788
    %v833 = vpack.c.b16 %v793, %v789
    %v834 = vpack.c.b16 %v794, %v790
    %v835 = vpack.c.b16 %v799, %v795
    %v836 = vpack.c.b16 %v800, %v796
    %v837 = vpack.c.b16 %v801, %v797
    %v838 = vpack.c.b16 %v802, %v798
    %v839 = vpack.c.b16 %v807, %v803
    %v840 = vpack.c.b16 %v808, %v804
    %v841 = vpack.c.b16 %v809, %v805
    %v842 = vpack.c.b16 %v810, %v806
    %875 = vmatprep.subr.bf16.mxu0 %v812
    %876 = vmatpush1.bf16.msra.mxu0 %v811
    %877 = vmatprep.subr.bf16.mxu0 %v816
    %878 = vmatpush1.bf16.msra.mxu0 %v815
    %879 = vmatprep.subr.bf16.mxu0 %v820
    %880 = vmatpush1.bf16.msra.mxu0 %v819
    %881 = vmatprep.subr.bf16.mxu0 %v824
    %882 = vmatpush1.bf16.msra.mxu0 %v823
    %883 = vmatprep.subr.bf16.mxu0 %v828
    %884 = vmatpush1.bf16.msra.mxu0 %v827
    %885 = vmatprep.subr.bf16.mxu0 %v832
    %886 = vmatpush1.bf16.msra.mxu0 %v831
    %887 = vmatprep.subr.bf16.mxu0 %v836
    %888 = vmatpush1.bf16.msra.mxu0 %v835
    %889 = vmatprep.subr.bf16.mxu0 %v840
    %890 = vmatpush1.bf16.msra.mxu0 %v839
    %891 = vmatprep.subr.bf16.mxu0 0
    %892 = vmatpush1.bf16.msra.mxu0 0
    %893 = vmatprep.subr.bf16.mxu0 0
    %894 = vmatpush1.bf16.msra.mxu0 0
    %895 = vmatprep.subr.bf16.mxu0 0
    %896 = vmatpush1.bf16.msra.mxu0 0
    %897 = vmatprep.subr.bf16.mxu0 0
    %898 = vmatpush1.bf16.msra.mxu0 0
    %899 = vmatprep.subr.bf16.mxu0 0
    %900 = vmatpush1.bf16.msra.mxu0 0
    %901 = vmatprep.subr.bf16.mxu0 0
    %902 = vmatpush1.bf16.msra.mxu0 0
    %903 = vmatprep.subr.bf16.mxu0 0
    %904 = vmatpush1.bf16.msra.mxu0 0
    %905 = vmatprep.subr.bf16.mxu0 0
    %906 = vmatpush1.bf16.msra.mxu0 0
    %907 = vmatprep.mubr.bf16.mxu0 0
    %908 = vmatmul.mubr.bf16.gmra.mrb[0].mxu0 %v682
    %v909 = vpop.f32.mrb[0].mxu0
    %v910 = vadd.f32 0.0, %v909
    %v911 = vpop.f32.mrb[0].mxu0
    %v912 = vadd.f32 0.0, %v911
    %v913 = vpop.f32.mrb[0].mxu0
    %v914 = vpop.f32.mrb[0].mxu0
    %915 = vdwg.mxu0
    %916 = vmatprep.subr.bf16.mxu0 %v814
    %917 = vmatpush1.bf16.msra.mxu0 %v813
    %918 = vmatprep.subr.bf16.mxu0 %v818
    %919 = vmatpush1.bf16.msra.mxu0 %v817
    %920 = vmatprep.subr.bf16.mxu0 %v822
    %921 = vmatpush1.bf16.msra.mxu0 %v821
    %922 = vmatprep.subr.bf16.mxu0 %v826
    %923 = vmatpush1.bf16.msra.mxu0 %v825
    %924 = vmatprep.subr.bf16.mxu0 %v830
    %925 = vmatpush1.bf16.msra.mxu0 %v829
    %926 = vmatprep.subr.bf16.mxu0 %v834
    %927 = vmatpush1.bf16.msra.mxu0 %v833
    %928 = vmatprep.subr.bf16.mxu0 %v838
    %929 = vmatpush1.bf16.msra.mxu0 %v837
    %930 = vmatprep.subr.bf16.mxu0 %v842
    %931 = vmatpush1.bf16.msra.mxu0 %v841
    %932 = vmatprep.subr.bf16.mxu0 0
    %933 = vmatpush1.bf16.msra.mxu0 0
    %934 = vmatprep.subr.bf16.mxu0 0
    %935 = vmatpush1.bf16.msra.mxu0 0
    %936 = vmatprep.subr.bf16.mxu0 0
    %937 = vmatpush1.bf16.msra.mxu0 0
    %938 = vmatprep.subr.bf16.mxu0 0
    %939 = vmatpush1.bf16.msra.mxu0 0
    %940 = vmatprep.subr.bf16.mxu0 0
    %941 = vmatpush1.bf16.msra.mxu0 0
    %942 = vmatprep.subr.bf16.mxu0 0
    %943 = vmatpush1.bf16.msra.mxu0 0
    %944 = vmatprep.subr.bf16.mxu0 0
    %945 = vmatpush1.bf16.msra.mxu0 0
    %946 = vmatprep.subr.bf16.mxu0 0
    %947 = vmatpush1.bf16.msra.mxu0 0
    %948 = vmatprep.mubr.bf16.mxu0 0
    %949 = vmatmul.mubr.bf16.gmra.mrb[0].mxu0 %v682
    %v950 = vpop.f32.mrb[0].mxu0
    %v951 = vadd.f32 0.0, %v950
    %v952 = vpop.f32.mrb[0].mxu0
    %v953 = vadd.f32 0.0, %v952
    %v954 = vpop.f32.mrb[0].mxu0
    %v955 = vpop.f32.mrb[0].mxu0
    %956 = vdwg.mxu0
    %v957 = vadd.f32 %v678, %v910
    %v958 = vadd.f32 %v679, %v912
    %v959 = vadd.f32 %v680, %v951
    %v960 = vadd.f32 %v681, %v953
    %v961 = vxor.u32 %v957, 2147483648
    %v962 = vmul.f32 %v961, 1.442695
    %v963 = vpow.pop %v962
    %v964 = vadd.f32 %v963, 1.0
    %v965 = vrcp.pop %v964
    %v966 = vmul.f32 1.0, %v965
    %v967 = vxor.u32 %v958, 2147483648
    %v968 = vmul.f32 %v967, 1.442695
    %v969 = vpow.pop %v968
    %v970 = vadd.f32 %v969, 1.0
    %v971 = vrcp.pop %v970
    %v972 = vmul.f32 1.0, %v971
    %v973 = vtanh.pop %v959
    %v974 = vxor.u32 %v960, 2147483648
    %v975 = vmul.f32 %v974, 1.442695
    %v976 = vpow.pop %v975
    %v977 = vadd.f32 %v976, 1.0
    %v978 = vrcp.pop %v977
    %v979 = vmul.f32 1.0, %v978
    %v980 = vmul.f32 %v972, %v670
    %v981 = vmul.f32 %v966, %v973
    %v982 = vadd.f32 %v980, %v981
    %v983 = vtanh.pop %v982
    %v984 = vmul.f32 %v979, %v983
    %s985 = sadd.s32 %s27, 2
    %v986 = vstv %s985
    %vm987 = vcmp.lt.s32.totalorder %v986, %v26
    %v988 = vsel %vm987, 1, 0
    %989 = vset.pattern.permute.xlu0 0
    %990 = vperm.xlu0 %989, %v988
    %v991 = vpop.permute.xlu0 %990
    %vm992 = vcmp.eq.s32.totalorder %v991, 1
    %v993 = vsel %vm992, %v984, %v669
    %v994 = vsel %vm992, %v982, %v670
    %v995 = vsel %vm992, %v984, 0.0
    %v996 = vpack.c.bf16 %v995, %v995
    %s997 = scalar_lea.vmem [#allocation4], 8
    %998 = vst [vmem:[%s997] sm:$0xf] %v996
    %s999 = scalar_lea.vmem %s0, 48
    %v1000 = vld [vmem:[%s999] sm:$0xff]
    %v1001 = vld [vmem:[%s999 + $0x8] sm:$0xff]
    %v1002 = vunpack.c.l.bf16 %v1000
    %v1003 = vunpack.c.h.bf16 %v1000
    %v1004 = vunpack.c.l.bf16 %v1001
    %v1005 = vunpack.c.h.bf16 %v1001
    %v1006 = vpack.c.bf16 %v993, %v993
    %v1007 = vld [vmem:[%s2] sm:$0xff]
    %v1008 = vld [vmem:[%s2 + $0x8] sm:$0xff]
    %v1009 = vld [vmem:[%s2 + $0x10] sm:$0xff]
    %v1010 = vld [vmem:[%s2 + $0x18] sm:$0xff]
    %v1011 = vld [vmem:[%s2 + $0x20] sm:$0xff]
    %v1012 = vld [vmem:[%s2 + $0x28] sm:$0xff]
    %v1013 = vld [vmem:[%s2 + $0x30] sm:$0xff]
    %v1014 = vld [vmem:[%s2 + $0x38] sm:$0xff]
    %v1015 = vld [vmem:[%s2 + $0x40] sm:$0xff]
    %v1016 = vld [vmem:[%s2 + $0x48] sm:$0xff]
    %v1017 = vld [vmem:[%s2 + $0x50] sm:$0xff]
    %v1018 = vld [vmem:[%s2 + $0x58] sm:$0xff]
    %v1019 = vld [vmem:[%s2 + $0x60] sm:$0xff]
    %v1020 = vld [vmem:[%s2 + $0x68] sm:$0xff]
    %v1021 = vld [vmem:[%s2 + $0x70] sm:$0xff]
    %v1022 = vld [vmem:[%s2 + $0x78] sm:$0xff]
    %v1023 = vld [vmem:[%s2 + $0x80] sm:$0xff]
    %v1024 = vld [vmem:[%s2 + $0x88] sm:$0xff]
    %v1025 = vld [vmem:[%s2 + $0x90] sm:$0xff]
    %v1026 = vld [vmem:[%s2 + $0x98] sm:$0xff]
    %v1027 = vld [vmem:[%s2 + $0xa0] sm:$0xff]
    %v1028 = vld [vmem:[%s2 + $0xa8] sm:$0xff]
    %v1029 = vld [vmem:[%s2 + $0xb0] sm:$0xff]
    %v1030 = vld [vmem:[%s2 + $0xb8] sm:$0xff]
    %v1031 = vld [vmem:[%s2 + $0xc0] sm:$0xff]
    %v1032 = vld [vmem:[%s2 + $0xc8] sm:$0xff]
    %v1033 = vld [vmem:[%s2 + $0xd0] sm:$0xff]
    %v1034 = vld [vmem:[%s2 + $0xd8] sm:$0xff]
    %v1035 = vld [vmem:[%s2 + $0xe0] sm:$0xff]
    %v1036 = vld [vmem:[%s2 + $0xe8] sm:$0xff]
    %v1037 = vld [vmem:[%s2 + $0xf0] sm:$0xff]
    %v1038 = vld [vmem:[%s2 + $0xf8] sm:$0xff]
    %v1071 = vunpack.c.l.b16 %v1007
    %v1072 = vunpack.c.h.b16 %v1007
    %v1073 = vunpack.c.l.b16 %v1008
    %v1074 = vunpack.c.h.b16 %v1008
    %v1075 = vunpack.c.l.b16 %v1009
    %v1076 = vunpack.c.h.b16 %v1009
    %v1077 = vunpack.c.l.b16 %v1010
    %v1078 = vunpack.c.h.b16 %v1010
    %v1079 = vunpack.c.l.b16 %v1011
    %v1080 = vunpack.c.h.b16 %v1011
    %v1081 = vunpack.c.l.b16 %v1012
    %v1082 = vunpack.c.h.b16 %v1012
    %v1083 = vunpack.c.l.b16 %v1013
    %v1084 = vunpack.c.h.b16 %v1013
    %v1085 = vunpack.c.l.b16 %v1014
    %v1086 = vunpack.c.h.b16 %v1014
    %v1087 = vunpack.c.l.b16 %v1015
    %v1088 = vunpack.c.h.b16 %v1015
    %v1089 = vunpack.c.l.b16 %v1016
    %v1090 = vunpack.c.h.b16 %v1016
    %v1091 = vunpack.c.l.b16 %v1017
    %v1092 = vunpack.c.h.b16 %v1017
    %v1093 = vunpack.c.l.b16 %v1018
    %v1094 = vunpack.c.h.b16 %v1018
    %v1095 = vunpack.c.l.b16 %v1019
    %v1096 = vunpack.c.h.b16 %v1019
    %v1097 = vunpack.c.l.b16 %v1020
    %v1098 = vunpack.c.h.b16 %v1020
    %v1099 = vunpack.c.l.b16 %v1021
    %v1100 = vunpack.c.h.b16 %v1021
    %v1101 = vunpack.c.l.b16 %v1022
    %v1102 = vunpack.c.h.b16 %v1022
    %v1103 = vunpack.c.l.b16 %v1023
    %v1104 = vunpack.c.h.b16 %v1023
    %v1105 = vunpack.c.l.b16 %v1024
    %v1106 = vunpack.c.h.b16 %v1024
    %v1107 = vunpack.c.l.b16 %v1025
    %v1108 = vunpack.c.h.b16 %v1025
    %v1109 = vunpack.c.l.b16 %v1026
    %v1110 = vunpack.c.h.b16 %v1026
    %v1111 = vunpack.c.l.b16 %v1027
    %v1112 = vunpack.c.h.b16 %v1027
    %v1113 = vunpack.c.l.b16 %v1028
    %v1114 = vunpack.c.h.b16 %v1028
    %v1115 = vunpack.c.l.b16 %v1029
    %v1116 = vunpack.c.h.b16 %v1029
    %v1117 = vunpack.c.l.b16 %v1030
    %v1118 = vunpack.c.h.b16 %v1030
    %v1119 = vunpack.c.l.b16 %v1031
    %v1120 = vunpack.c.h.b16 %v1031
    %v1121 = vunpack.c.l.b16 %v1032
    %v1122 = vunpack.c.h.b16 %v1032
    %v1123 = vunpack.c.l.b16 %v1033
    %v1124 = vunpack.c.h.b16 %v1033
    %v1125 = vunpack.c.l.b16 %v1034
    %v1126 = vunpack.c.h.b16 %v1034
    %v1127 = vunpack.c.l.b16 %v1035
    %v1128 = vunpack.c.h.b16 %v1035
    %v1129 = vunpack.c.l.b16 %v1036
    %v1130 = vunpack.c.h.b16 %v1036
    %v1131 = vunpack.c.l.b16 %v1037
    %v1132 = vunpack.c.h.b16 %v1037
    %v1133 = vunpack.c.l.b16 %v1038
    %v1134 = vunpack.c.h.b16 %v1038
    %v1135 = vpack.c.b16 %v1075, %v1071
    %v1136 = vpack.c.b16 %v1076, %v1072
    %v1137 = vpack.c.b16 %v1077, %v1073
    %v1138 = vpack.c.b16 %v1078, %v1074
    %v1139 = vpack.c.b16 %v1083, %v1079
    %v1140 = vpack.c.b16 %v1084, %v1080
    %v1141 = vpack.c.b16 %v1085, %v1081
    %v1142 = vpack.c.b16 %v1086, %v1082
    %v1143 = vpack.c.b16 %v1091, %v1087
    %v1144 = vpack.c.b16 %v1092, %v1088
    %v1145 = vpack.c.b16 %v1093, %v1089
    %v1146 = vpack.c.b16 %v1094, %v1090
    %v1147 = vpack.c.b16 %v1099, %v1095
    %v1148 = vpack.c.b16 %v1100, %v1096
    %v1149 = vpack.c.b16 %v1101, %v1097
    %v1150 = vpack.c.b16 %v1102, %v1098
    %v1151 = vpack.c.b16 %v1107, %v1103
    %v1152 = vpack.c.b16 %v1108, %v1104
    %v1153 = vpack.c.b16 %v1109, %v1105
    %v1154 = vpack.c.b16 %v1110, %v1106
    %v1155 = vpack.c.b16 %v1115, %v1111
    %v1156 = vpack.c.b16 %v1116, %v1112
    %v1157 = vpack.c.b16 %v1117, %v1113
    %v1158 = vpack.c.b16 %v1118, %v1114
    %v1159 = vpack.c.b16 %v1123, %v1119
    %v1160 = vpack.c.b16 %v1124, %v1120
    %v1161 = vpack.c.b16 %v1125, %v1121
    %v1162 = vpack.c.b16 %v1126, %v1122
    %v1163 = vpack.c.b16 %v1131, %v1127
    %v1164 = vpack.c.b16 %v1132, %v1128
    %v1165 = vpack.c.b16 %v1133, %v1129
    %v1166 = vpack.c.b16 %v1134, %v1130
    %1199 = vmatprep.subr.bf16.mxu0 %v1136
    %1200 = vmatpush1.bf16.msra.mxu0 %v1135
    %1201 = vmatprep.subr.bf16.mxu0 %v1140
    %1202 = vmatpush1.bf16.msra.mxu0 %v1139
    %1203 = vmatprep.subr.bf16.mxu0 %v1144
    %1204 = vmatpush1.bf16.msra.mxu0 %v1143
    %1205 = vmatprep.subr.bf16.mxu0 %v1148
    %1206 = vmatpush1.bf16.msra.mxu0 %v1147
    %1207 = vmatprep.subr.bf16.mxu0 %v1152
    %1208 = vmatpush1.bf16.msra.mxu0 %v1151
    %1209 = vmatprep.subr.bf16.mxu0 %v1156
    %1210 = vmatpush1.bf16.msra.mxu0 %v1155
    %1211 = vmatprep.subr.bf16.mxu0 %v1160
    %1212 = vmatpush1.bf16.msra.mxu0 %v1159
    %1213 = vmatprep.subr.bf16.mxu0 %v1164
    %1214 = vmatpush1.bf16.msra.mxu0 %v1163
    %1215 = vmatprep.subr.bf16.mxu0 0
    %1216 = vmatpush1.bf16.msra.mxu0 0
    %1217 = vmatprep.subr.bf16.mxu0 0
    %1218 = vmatpush1.bf16.msra.mxu0 0
    %1219 = vmatprep.subr.bf16.mxu0 0
    %1220 = vmatpush1.bf16.msra.mxu0 0
    %1221 = vmatprep.subr.bf16.mxu0 0
    %1222 = vmatpush1.bf16.msra.mxu0 0
    %1223 = vmatprep.subr.bf16.mxu0 0
    %1224 = vmatpush1.bf16.msra.mxu0 0
    %1225 = vmatprep.subr.bf16.mxu0 0
    %1226 = vmatpush1.bf16.msra.mxu0 0
    %1227 = vmatprep.subr.bf16.mxu0 0
    %1228 = vmatpush1.bf16.msra.mxu0 0
    %1229 = vmatprep.subr.bf16.mxu0 0
    %1230 = vmatpush1.bf16.msra.mxu0 0
    %1231 = vmatprep.mubr.bf16.mxu0 0
    %1232 = vmatmul.mubr.bf16.gmra.mrb[0].mxu0 %v1006
    %v1233 = vpop.f32.mrb[0].mxu0
    %v1234 = vadd.f32 0.0, %v1233
    %v1235 = vpop.f32.mrb[0].mxu0
    %v1236 = vadd.f32 0.0, %v1235
    %v1237 = vpop.f32.mrb[0].mxu0
    %v1238 = vpop.f32.mrb[0].mxu0
    %1239 = vdwg.mxu0
    %1240 = vmatprep.subr.bf16.mxu0 %v1138
    %1241 = vmatpush1.bf16.msra.mxu0 %v1137
    %1242 = vmatprep.subr.bf16.mxu0 %v1142
    %1243 = vmatpush1.bf16.msra.mxu0 %v1141
    %1244 = vmatprep.subr.bf16.mxu0 %v1146
    %1245 = vmatpush1.bf16.msra.mxu0 %v1145
    %1246 = vmatprep.subr.bf16.mxu0 %v1150
    %1247 = vmatpush1.bf16.msra.mxu0 %v1149
    %1248 = vmatprep.subr.bf16.mxu0 %v1154
    %1249 = vmatpush1.bf16.msra.mxu0 %v1153
    %1250 = vmatprep.subr.bf16.mxu0 %v1158
    %1251 = vmatpush1.bf16.msra.mxu0 %v1157
    %1252 = vmatprep.subr.bf16.mxu0 %v1162
    %1253 = vmatpush1.bf16.msra.mxu0 %v1161
    %1254 = vmatprep.subr.bf16.mxu0 %v1166
    %1255 = vmatpush1.bf16.msra.mxu0 %v1165
    %1256 = vmatprep.subr.bf16.mxu0 0
    %1257 = vmatpush1.bf16.msra.mxu0 0
    %1258 = vmatprep.subr.bf16.mxu0 0
    %1259 = vmatpush1.bf16.msra.mxu0 0
    %1260 = vmatprep.subr.bf16.mxu0 0
    %1261 = vmatpush1.bf16.msra.mxu0 0
    %1262 = vmatprep.subr.bf16.mxu0 0
    %1263 = vmatpush1.bf16.msra.mxu0 0
    %1264 = vmatprep.subr.bf16.mxu0 0
    %1265 = vmatpush1.bf16.msra.mxu0 0
    %1266 = vmatprep.subr.bf16.mxu0 0
    %1267 = vmatpush1.bf16.msra.mxu0 0
    %1268 = vmatprep.subr.bf16.mxu0 0
    %1269 = vmatpush1.bf16.msra.mxu0 0
    %1270 = vmatprep.subr.bf16.mxu0 0
    %1271 = vmatpush1.bf16.msra.mxu0 0
    %1272 = vmatprep.mubr.bf16.mxu0 0
    %1273 = vmatmul.mubr.bf16.gmra.mrb[0].mxu0 %v1006
    %v1274 = vpop.f32.mrb[0].mxu0
    %v1275 = vadd.f32 0.0, %v1274
    %v1276 = vpop.f32.mrb[0].mxu0
    %v1277 = vadd.f32 0.0, %v1276
    %v1278 = vpop.f32.mrb[0].mxu0
    %v1279 = vpop.f32.mrb[0].mxu0
    %1280 = vdwg.mxu0
    %v1281 = vadd.f32 %v1002, %v1234
    %v1282 = vadd.f32 %v1003, %v1236
    %v1283 = vadd.f32 %v1004, %v1275
    %v1284 = vadd.f32 %v1005, %v1277
    %v1285 = vxor.u32 %v1281, 2147483648
    %v1286 = vmul.f32 %v1285, 1.442695
    %v1287 = vpow.pop %v1286
    %v1288 = vadd.f32 %v1287, 1.0
    %v1289 = vrcp.pop %v1288
    %v1290 = vmul.f32 1.0, %v1289
    %v1291 = vxor.u32 %v1282, 2147483648
    %v1292 = vmul.f32 %v1291, 1.442695
    %v1293 = vpow.pop %v1292
    %v1294 = vadd.f32 %v1293, 1.0
    %v1295 = vrcp.pop %v1294
    %v1296 = vmul.f32 1.0, %v1295
    %v1297 = vtanh.pop %v1283
    %v1298 = vxor.u32 %v1284, 2147483648
    %v1299 = vmul.f32 %v1298, 1.442695
    %v1300 = vpow.pop %v1299
    %v1301 = vadd.f32 %v1300, 1.0
    %v1302 = vrcp.pop %v1301
    %v1303 = vmul.f32 1.0, %v1302
    %v1304 = vmul.f32 %v1296, %v994
    %v1305 = vmul.f32 %v1290, %v1297
    %v1306 = vadd.f32 %v1304, %v1305
    %v1307 = vtanh.pop %v1306
    %v1308 = vmul.f32 %v1303, %v1307
    %s1309 = sadd.s32 %s27, 3
    %v1310 = vstv %s1309
    %vm1311 = vcmp.lt.s32.totalorder %v1310, %v26
    %v1312 = vsel %vm1311, 1, 0
    %1313 = vset.pattern.permute.xlu0 0
    %1314 = vperm.xlu0 %1313, %v1312
    %v1315 = vpop.permute.xlu0 %1314
    %vm1316 = vcmp.eq.s32.totalorder %v1315, 1
    %v1317 = vsel %vm1316, %v1308, %v993
    %v1318 = vsel %vm1316, %v1306, %v994
    %v1319 = vsel %vm1316, %v1308, 0.0
    %v1320 = vpack.c.bf16 %v1319, %v1319
    %s1321 = scalar_lea.vmem [#allocation4], 12
    %1322 = vst [vmem:[%s1321] sm:$0xf] %v1320
    %s1323 = scalar_lea.vmem %s0, 64
    %v1324 = vld [vmem:[%s1323] sm:$0xff]
    %v1325 = vld [vmem:[%s1323 + $0x8] sm:$0xff]
    %v1326 = vunpack.c.l.bf16 %v1324
    %v1327 = vunpack.c.h.bf16 %v1324
    %v1328 = vunpack.c.l.bf16 %v1325
    %v1329 = vunpack.c.h.bf16 %v1325
    %v1330 = vpack.c.bf16 %v1317, %v1317
    %v1331 = vld [vmem:[%s2] sm:$0xff]
    %v1332 = vld [vmem:[%s2 + $0x8] sm:$0xff]
    %v1333 = vld [vmem:[%s2 + $0x10] sm:$0xff]
    %v1334 = vld [vmem:[%s2 + $0x18] sm:$0xff]
    %v1335 = vld [vmem:[%s2 + $0x20] sm:$0xff]
    %v1336 = vld [vmem:[%s2 + $0x28] sm:$0xff]
    %v1337 = vld [vmem:[%s2 + $0x30] sm:$0xff]
    %v1338 = vld [vmem:[%s2 + $0x38] sm:$0xff]
    %v1339 = vld [vmem:[%s2 + $0x40] sm:$0xff]
    %v1340 = vld [vmem:[%s2 + $0x48] sm:$0xff]
    %v1341 = vld [vmem:[%s2 + $0x50] sm:$0xff]
    %v1342 = vld [vmem:[%s2 + $0x58] sm:$0xff]
    %v1343 = vld [vmem:[%s2 + $0x60] sm:$0xff]
    %v1344 = vld [vmem:[%s2 + $0x68] sm:$0xff]
    %v1345 = vld [vmem:[%s2 + $0x70] sm:$0xff]
    %v1346 = vld [vmem:[%s2 + $0x78] sm:$0xff]
    %v1347 = vld [vmem:[%s2 + $0x80] sm:$0xff]
    %v1348 = vld [vmem:[%s2 + $0x88] sm:$0xff]
    %v1349 = vld [vmem:[%s2 + $0x90] sm:$0xff]
    %v1350 = vld [vmem:[%s2 + $0x98] sm:$0xff]
    %v1351 = vld [vmem:[%s2 + $0xa0] sm:$0xff]
    %v1352 = vld [vmem:[%s2 + $0xa8] sm:$0xff]
    %v1353 = vld [vmem:[%s2 + $0xb0] sm:$0xff]
    %v1354 = vld [vmem:[%s2 + $0xb8] sm:$0xff]
    %v1355 = vld [vmem:[%s2 + $0xc0] sm:$0xff]
    %v1356 = vld [vmem:[%s2 + $0xc8] sm:$0xff]
    %v1357 = vld [vmem:[%s2 + $0xd0] sm:$0xff]
    %v1358 = vld [vmem:[%s2 + $0xd8] sm:$0xff]
    %v1359 = vld [vmem:[%s2 + $0xe0] sm:$0xff]
    %v1360 = vld [vmem:[%s2 + $0xe8] sm:$0xff]
    %v1361 = vld [vmem:[%s2 + $0xf0] sm:$0xff]
    %v1362 = vld [vmem:[%s2 + $0xf8] sm:$0xff]
    %v1395 = vunpack.c.l.b16 %v1331
    %v1396 = vunpack.c.h.b16 %v1331
    %v1397 = vunpack.c.l.b16 %v1332
    %v1398 = vunpack.c.h.b16 %v1332
    %v1399 = vunpack.c.l.b16 %v1333
    %v1400 = vunpack.c.h.b16 %v1333
    %v1401 = vunpack.c.l.b16 %v1334
    %v1402 = vunpack.c.h.b16 %v1334
    %v1403 = vunpack.c.l.b16 %v1335
    %v1404 = vunpack.c.h.b16 %v1335
    %v1405 = vunpack.c.l.b16 %v1336
    %v1406 = vunpack.c.h.b16 %v1336
    %v1407 = vunpack.c.l.b16 %v1337
    %v1408 = vunpack.c.h.b16 %v1337
    %v1409 = vunpack.c.l.b16 %v1338
    %v1410 = vunpack.c.h.b16 %v1338
    %v1411 = vunpack.c.l.b16 %v1339
    %v1412 = vunpack.c.h.b16 %v1339
    %v1413 = vunpack.c.l.b16 %v1340
    %v1414 = vunpack.c.h.b16 %v1340
    %v1415 = vunpack.c.l.b16 %v1341
    %v1416 = vunpack.c.h.b16 %v1341
    %v1417 = vunpack.c.l.b16 %v1342
    %v1418 = vunpack.c.h.b16 %v1342
    %v1419 = vunpack.c.l.b16 %v1343
    %v1420 = vunpack.c.h.b16 %v1343
    %v1421 = vunpack.c.l.b16 %v1344
    %v1422 = vunpack.c.h.b16 %v1344
    %v1423 = vunpack.c.l.b16 %v1345
    %v1424 = vunpack.c.h.b16 %v1345
    %v1425 = vunpack.c.l.b16 %v1346
    %v1426 = vunpack.c.h.b16 %v1346
    %v1427 = vunpack.c.l.b16 %v1347
    %v1428 = vunpack.c.h.b16 %v1347
    %v1429 = vunpack.c.l.b16 %v1348
    %v1430 = vunpack.c.h.b16 %v1348
    %v1431 = vunpack.c.l.b16 %v1349
    %v1432 = vunpack.c.h.b16 %v1349
    %v1433 = vunpack.c.l.b16 %v1350
    %v1434 = vunpack.c.h.b16 %v1350
    %v1435 = vunpack.c.l.b16 %v1351
    %v1436 = vunpack.c.h.b16 %v1351
    %v1437 = vunpack.c.l.b16 %v1352
    %v1438 = vunpack.c.h.b16 %v1352
    %v1439 = vunpack.c.l.b16 %v1353
    %v1440 = vunpack.c.h.b16 %v1353
    %v1441 = vunpack.c.l.b16 %v1354
    %v1442 = vunpack.c.h.b16 %v1354
    %v1443 = vunpack.c.l.b16 %v1355
    %v1444 = vunpack.c.h.b16 %v1355
    %v1445 = vunpack.c.l.b16 %v1356
    %v1446 = vunpack.c.h.b16 %v1356
    %v1447 = vunpack.c.l.b16 %v1357
    %v1448 = vunpack.c.h.b16 %v1357
    %v1449 = vunpack.c.l.b16 %v1358
    %v1450 = vunpack.c.h.b16 %v1358
    %v1451 = vunpack.c.l.b16 %v1359
    %v1452 = vunpack.c.h.b16 %v1359
    %v1453 = vunpack.c.l.b16 %v1360
    %v1454 = vunpack.c.h.b16 %v1360
    %v1455 = vunpack.c.l.b16 %v1361
    %v1456 = vunpack.c.h.b16 %v1361
    %v1457 = vunpack.c.l.b16 %v1362
    %v1458 = vunpack.c.h.b16 %v1362
    %v1459 = vpack.c.b16 %v1399, %v1395
    %v1460 = vpack.c.b16 %v1400, %v1396
    %v1461 = vpack.c.b16 %v1401, %v1397
    %v1462 = vpack.c.b16 %v1402, %v1398
    %v1463 = vpack.c.b16 %v1407, %v1403
    %v1464 = vpack.c.b16 %v1408, %v1404
    %v1465 = vpack.c.b16 %v1409, %v1405
    %v1466 = vpack.c.b16 %v1410, %v1406
    %v1467 = vpack.c.b16 %v1415, %v1411
    %v1468 = vpack.c.b16 %v1416, %v1412
    %v1469 = vpack.c.b16 %v1417, %v1413
    %v1470 = vpack.c.b16 %v1418, %v1414
    %v1471 = vpack.c.b16 %v1423, %v1419
    %v1472 = vpack.c.b16 %v1424, %v1420
    %v1473 = vpack.c.b16 %v1425, %v1421
    %v1474 = vpack.c.b16 %v1426, %v1422
    %v1475 = vpack.c.b16 %v1431, %v1427
    %v1476 = vpack.c.b16 %v1432, %v1428
    %v1477 = vpack.c.b16 %v1433, %v1429
    %v1478 = vpack.c.b16 %v1434, %v1430
    %v1479 = vpack.c.b16 %v1439, %v1435
    %v1480 = vpack.c.b16 %v1440, %v1436
    %v1481 = vpack.c.b16 %v1441, %v1437
    %v1482 = vpack.c.b16 %v1442, %v1438
    %v1483 = vpack.c.b16 %v1447, %v1443
    %v1484 = vpack.c.b16 %v1448, %v1444
    %v1485 = vpack.c.b16 %v1449, %v1445
    %v1486 = vpack.c.b16 %v1450, %v1446
    %v1487 = vpack.c.b16 %v1455, %v1451
    %v1488 = vpack.c.b16 %v1456, %v1452
    %v1489 = vpack.c.b16 %v1457, %v1453
    %v1490 = vpack.c.b16 %v1458, %v1454
    %1523 = vmatprep.subr.bf16.mxu0 %v1460
    %1524 = vmatpush1.bf16.msra.mxu0 %v1459
    %1525 = vmatprep.subr.bf16.mxu0 %v1464
    %1526 = vmatpush1.bf16.msra.mxu0 %v1463
    %1527 = vmatprep.subr.bf16.mxu0 %v1468
    %1528 = vmatpush1.bf16.msra.mxu0 %v1467
    %1529 = vmatprep.subr.bf16.mxu0 %v1472
    %1530 = vmatpush1.bf16.msra.mxu0 %v1471
    %1531 = vmatprep.subr.bf16.mxu0 %v1476
    %1532 = vmatpush1.bf16.msra.mxu0 %v1475
    %1533 = vmatprep.subr.bf16.mxu0 %v1480
    %1534 = vmatpush1.bf16.msra.mxu0 %v1479
    %1535 = vmatprep.subr.bf16.mxu0 %v1484
    %1536 = vmatpush1.bf16.msra.mxu0 %v1483
    %1537 = vmatprep.subr.bf16.mxu0 %v1488
    %1538 = vmatpush1.bf16.msra.mxu0 %v1487
    %1539 = vmatprep.subr.bf16.mxu0 0
    %1540 = vmatpush1.bf16.msra.mxu0 0
    %1541 = vmatprep.subr.bf16.mxu0 0
    %1542 = vmatpush1.bf16.msra.mxu0 0
    %1543 = vmatprep.subr.bf16.mxu0 0
    %1544 = vmatpush1.bf16.msra.mxu0 0
    %1545 = vmatprep.subr.bf16.mxu0 0
    %1546 = vmatpush1.bf16.msra.mxu0 0
    %1547 = vmatprep.subr.bf16.mxu0 0
    %1548 = vmatpush1.bf16.msra.mxu0 0
    %1549 = vmatprep.subr.bf16.mxu0 0
    %1550 = vmatpush1.bf16.msra.mxu0 0
    %1551 = vmatprep.subr.bf16.mxu0 0
    %1552 = vmatpush1.bf16.msra.mxu0 0
    %1553 = vmatprep.subr.bf16.mxu0 0
    %1554 = vmatpush1.bf16.msra.mxu0 0
    %1555 = vmatprep.mubr.bf16.mxu0 0
    %1556 = vmatmul.mubr.bf16.gmra.mrb[0].mxu0 %v1330
    %v1557 = vpop.f32.mrb[0].mxu0
    %v1558 = vadd.f32 0.0, %v1557
    %v1559 = vpop.f32.mrb[0].mxu0
    %v1560 = vadd.f32 0.0, %v1559
    %v1561 = vpop.f32.mrb[0].mxu0
    %v1562 = vpop.f32.mrb[0].mxu0
    %1563 = vdwg.mxu0
    %1564 = vmatprep.subr.bf16.mxu0 %v1462
    %1565 = vmatpush1.bf16.msra.mxu0 %v1461
    %1566 = vmatprep.subr.bf16.mxu0 %v1466
    %1567 = vmatpush1.bf16.msra.mxu0 %v1465
    %1568 = vmatprep.subr.bf16.mxu0 %v1470
    %1569 = vmatpush1.bf16.msra.mxu0 %v1469
    %1570 = vmatprep.subr.bf16.mxu0 %v1474
    %1571 = vmatpush1.bf16.msra.mxu0 %v1473
    %1572 = vmatprep.subr.bf16.mxu0 %v1478
    %1573 = vmatpush1.bf16.msra.mxu0 %v1477
    %1574 = vmatprep.subr.bf16.mxu0 %v1482
    %1575 = vmatpush1.bf16.msra.mxu0 %v1481
    %1576 = vmatprep.subr.bf16.mxu0 %v1486
    %1577 = vmatpush1.bf16.msra.mxu0 %v1485
    %1578 = vmatprep.subr.bf16.mxu0 %v1490
    %1579 = vmatpush1.bf16.msra.mxu0 %v1489
    %1580 = vmatprep.subr.bf16.mxu0 0
    %1581 = vmatpush1.bf16.msra.mxu0 0
    %1582 = vmatprep.subr.bf16.mxu0 0
    %1583 = vmatpush1.bf16.msra.mxu0 0
    %1584 = vmatprep.subr.bf16.mxu0 0
    %1585 = vmatpush1.bf16.msra.mxu0 0
    %1586 = vmatprep.subr.bf16.mxu0 0
    %1587 = vmatpush1.bf16.msra.mxu0 0
    %1588 = vmatprep.subr.bf16.mxu0 0
    %1589 = vmatpush1.bf16.msra.mxu0 0
    %1590 = vmatprep.subr.bf16.mxu0 0
    %1591 = vmatpush1.bf16.msra.mxu0 0
    %1592 = vmatprep.subr.bf16.mxu0 0
    %1593 = vmatpush1.bf16.msra.mxu0 0
    %1594 = vmatprep.subr.bf16.mxu0 0
    %1595 = vmatpush1.bf16.msra.mxu0 0
    %1596 = vmatprep.mubr.bf16.mxu0 0
    %1597 = vmatmul.mubr.bf16.gmra.mrb[0].mxu0 %v1330
    %v1598 = vpop.f32.mrb[0].mxu0
    %v1599 = vadd.f32 0.0, %v1598
    %v1600 = vpop.f32.mrb[0].mxu0
    %v1601 = vadd.f32 0.0, %v1600
    %v1602 = vpop.f32.mrb[0].mxu0
    %v1603 = vpop.f32.mrb[0].mxu0
    %1604 = vdwg.mxu0
    %v1605 = vadd.f32 %v1326, %v1558
    %v1606 = vadd.f32 %v1327, %v1560
    %v1607 = vadd.f32 %v1328, %v1599
    %v1608 = vadd.f32 %v1329, %v1601
    %v1609 = vxor.u32 %v1605, 2147483648
    %v1610 = vmul.f32 %v1609, 1.442695
    %v1611 = vpow.pop %v1610
    %v1612 = vadd.f32 %v1611, 1.0
    %v1613 = vrcp.pop %v1612
    %v1614 = vmul.f32 1.0, %v1613
    %v1615 = vxor.u32 %v1606, 2147483648
    %v1616 = vmul.f32 %v1615, 1.442695
    %v1617 = vpow.pop %v1616
    %v1618 = vadd.f32 %v1617, 1.0
    %v1619 = vrcp.pop %v1618
    %v1620 = vmul.f32 1.0, %v1619
    %v1621 = vtanh.pop %v1607
    %v1622 = vxor.u32 %v1608, 2147483648
    %v1623 = vmul.f32 %v1622, 1.442695
    %v1624 = vpow.pop %v1623
    %v1625 = vadd.f32 %v1624, 1.0
    %v1626 = vrcp.pop %v1625
    %v1627 = vmul.f32 1.0, %v1626
    %v1628 = vmul.f32 %v1620, %v1318
    %v1629 = vmul.f32 %v1614, %v1621
    %v1630 = vadd.f32 %v1628, %v1629
    %v1631 = vtanh.pop %v1630
    %v1632 = vmul.f32 %v1627, %v1631
    %s1633 = sadd.s32 %s27, 4
    %v1634 = vstv %s1633
    %vm1635 = vcmp.lt.s32.totalorder %v1634, %v26
    %v1636 = vsel %vm1635, 1, 0
    %1637 = vset.pattern.permute.xlu0 0
    %1638 = vperm.xlu0 %1637, %v1636
    %v1639 = vpop.permute.xlu0 %1638
    %vm1640 = vcmp.eq.s32.totalorder %v1639, 1
    %v1641 = vsel %vm1640, %v1632, %v1317
    %v1642 = vsel %vm1640, %v1630, %v1318
    %v1643 = vsel %vm1640, %v1632, 0.0
    %v1644 = vpack.c.bf16 %v1643, %v1643
    %s1645 = scalar_lea.vmem [#allocation4], 16
    %1646 = vst [vmem:[%s1645] sm:$0xf] %v1644
    %s1647 = scalar_lea.vmem %s0, 80
    %v1648 = vld [vmem:[%s1647] sm:$0xff]
    %v1649 = vld [vmem:[%s1647 + $0x8] sm:$0xff]
    %v1650 = vunpack.c.l.bf16 %v1648
    %v1651 = vunpack.c.h.bf16 %v1648
    %v1652 = vunpack.c.l.bf16 %v1649
    %v1653 = vunpack.c.h.bf16 %v1649
    %v1654 = vpack.c.bf16 %v1641, %v1641
    %v1655 = vld [vmem:[%s2] sm:$0xff]
    %v1656 = vld [vmem:[%s2 + $0x8] sm:$0xff]
    %v1657 = vld [vmem:[%s2 + $0x10] sm:$0xff]
    %v1658 = vld [vmem:[%s2 + $0x18] sm:$0xff]
    %v1659 = vld [vmem:[%s2 + $0x20] sm:$0xff]
    %v1660 = vld [vmem:[%s2 + $0x28] sm:$0xff]
    %v1661 = vld [vmem:[%s2 + $0x30] sm:$0xff]
    %v1662 = vld [vmem:[%s2 + $0x38] sm:$0xff]
    %v1663 = vld [vmem:[%s2 + $0x40] sm:$0xff]
    %v1664 = vld [vmem:[%s2 + $0x48] sm:$0xff]
    %v1665 = vld [vmem:[%s2 + $0x50] sm:$0xff]
    %v1666 = vld [vmem:[%s2 + $0x58] sm:$0xff]
    %v1667 = vld [vmem:[%s2 + $0x60] sm:$0xff]
    %v1668 = vld [vmem:[%s2 + $0x68] sm:$0xff]
    %v1669 = vld [vmem:[%s2 + $0x70] sm:$0xff]
    %v1670 = vld [vmem:[%s2 + $0x78] sm:$0xff]
    %v1671 = vld [vmem:[%s2 + $0x80] sm:$0xff]
    %v1672 = vld [vmem:[%s2 + $0x88] sm:$0xff]
    %v1673 = vld [vmem:[%s2 + $0x90] sm:$0xff]
    %v1674 = vld [vmem:[%s2 + $0x98] sm:$0xff]
    %v1675 = vld [vmem:[%s2 + $0xa0] sm:$0xff]
    %v1676 = vld [vmem:[%s2 + $0xa8] sm:$0xff]
    %v1677 = vld [vmem:[%s2 + $0xb0] sm:$0xff]
    %v1678 = vld [vmem:[%s2 + $0xb8] sm:$0xff]
    %v1679 = vld [vmem:[%s2 + $0xc0] sm:$0xff]
    %v1680 = vld [vmem:[%s2 + $0xc8] sm:$0xff]
    %v1681 = vld [vmem:[%s2 + $0xd0] sm:$0xff]
    %v1682 = vld [vmem:[%s2 + $0xd8] sm:$0xff]
    %v1683 = vld [vmem:[%s2 + $0xe0] sm:$0xff]
    %v1684 = vld [vmem:[%s2 + $0xe8] sm:$0xff]
    %v1685 = vld [vmem:[%s2 + $0xf0] sm:$0xff]
    %v1686 = vld [vmem:[%s2 + $0xf8] sm:$0xff]
    %v1719 = vunpack.c.l.b16 %v1655
    %v1720 = vunpack.c.h.b16 %v1655
    %v1721 = vunpack.c.l.b16 %v1656
    %v1722 = vunpack.c.h.b16 %v1656
    %v1723 = vunpack.c.l.b16 %v1657
    %v1724 = vunpack.c.h.b16 %v1657
    %v1725 = vunpack.c.l.b16 %v1658
    %v1726 = vunpack.c.h.b16 %v1658
    %v1727 = vunpack.c.l.b16 %v1659
    %v1728 = vunpack.c.h.b16 %v1659
    %v1729 = vunpack.c.l.b16 %v1660
    %v1730 = vunpack.c.h.b16 %v1660
    %v1731 = vunpack.c.l.b16 %v1661
    %v1732 = vunpack.c.h.b16 %v1661
    %v1733 = vunpack.c.l.b16 %v1662
    %v1734 = vunpack.c.h.b16 %v1662
    %v1735 = vunpack.c.l.b16 %v1663
    %v1736 = vunpack.c.h.b16 %v1663
    %v1737 = vunpack.c.l.b16 %v1664
    %v1738 = vunpack.c.h.b16 %v1664
    %v1739 = vunpack.c.l.b16 %v1665
    %v1740 = vunpack.c.h.b16 %v1665
    %v1741 = vunpack.c.l.b16 %v1666
    %v1742 = vunpack.c.h.b16 %v1666
    %v1743 = vunpack.c.l.b16 %v1667
    %v1744 = vunpack.c.h.b16 %v1667
    %v1745 = vunpack.c.l.b16 %v1668
    %v1746 = vunpack.c.h.b16 %v1668
    %v1747 = vunpack.c.l.b16 %v1669
    %v1748 = vunpack.c.h.b16 %v1669
    %v1749 = vunpack.c.l.b16 %v1670
    %v1750 = vunpack.c.h.b16 %v1670
    %v1751 = vunpack.c.l.b16 %v1671
    %v1752 = vunpack.c.h.b16 %v1671
    %v1753 = vunpack.c.l.b16 %v1672
    %v1754 = vunpack.c.h.b16 %v1672
    %v1755 = vunpack.c.l.b16 %v1673
    %v1756 = vunpack.c.h.b16 %v1673
    %v1757 = vunpack.c.l.b16 %v1674
    %v1758 = vunpack.c.h.b16 %v1674
    %v1759 = vunpack.c.l.b16 %v1675
    %v1760 = vunpack.c.h.b16 %v1675
    %v1761 = vunpack.c.l.b16 %v1676
    %v1762 = vunpack.c.h.b16 %v1676
    %v1763 = vunpack.c.l.b16 %v1677
    %v1764 = vunpack.c.h.b16 %v1677
    %v1765 = vunpack.c.l.b16 %v1678
    %v1766 = vunpack.c.h.b16 %v1678
    %v1767 = vunpack.c.l.b16 %v1679
    %v1768 = vunpack.c.h.b16 %v1679
    %v1769 = vunpack.c.l.b16 %v1680
    %v1770 = vunpack.c.h.b16 %v1680
    %v1771 = vunpack.c.l.b16 %v1681
    %v1772 = vunpack.c.h.b16 %v1681
    %v1773 = vunpack.c.l.b16 %v1682
    %v1774 = vunpack.c.h.b16 %v1682
    %v1775 = vunpack.c.l.b16 %v1683
    %v1776 = vunpack.c.h.b16 %v1683
    %v1777 = vunpack.c.l.b16 %v1684
    %v1778 = vunpack.c.h.b16 %v1684
    %v1779 = vunpack.c.l.b16 %v1685
    %v1780 = vunpack.c.h.b16 %v1685
    %v1781 = vunpack.c.l.b16 %v1686
    %v1782 = vunpack.c.h.b16 %v1686
    %v1783 = vpack.c.b16 %v1723, %v1719
    %v1784 = vpack.c.b16 %v1724, %v1720
    %v1785 = vpack.c.b16 %v1725, %v1721
    %v1786 = vpack.c.b16 %v1726, %v1722
    %v1787 = vpack.c.b16 %v1731, %v1727
    %v1788 = vpack.c.b16 %v1732, %v1728
    %v1789 = vpack.c.b16 %v1733, %v1729
    %v1790 = vpack.c.b16 %v1734, %v1730
    %v1791 = vpack.c.b16 %v1739, %v1735
    %v1792 = vpack.c.b16 %v1740, %v1736
    %v1793 = vpack.c.b16 %v1741, %v1737
    %v1794 = vpack.c.b16 %v1742, %v1738
    %v1795 = vpack.c.b16 %v1747, %v1743
    %v1796 = vpack.c.b16 %v1748, %v1744
    %v1797 = vpack.c.b16 %v1749, %v1745
    %v1798 = vpack.c.b16 %v1750, %v1746
    %v1799 = vpack.c.b16 %v1755, %v1751
    %v1800 = vpack.c.b16 %v1756, %v1752
    %v1801 = vpack.c.b16 %v1757, %v1753
    %v1802 = vpack.c.b16 %v1758, %v1754
    %v1803 = vpack.c.b16 %v1763, %v1759
    %v1804 = vpack.c.b16 %v1764, %v1760
    %v1805 = vpack.c.b16 %v1765, %v1761
    %v1806 = vpack.c.b16 %v1766, %v1762
    %v1807 = vpack.c.b16 %v1771, %v1767
    %v1808 = vpack.c.b16 %v1772, %v1768
    %v1809 = vpack.c.b16 %v1773, %v1769
    %v1810 = vpack.c.b16 %v1774, %v1770
    %v1811 = vpack.c.b16 %v1779, %v1775
    %v1812 = vpack.c.b16 %v1780, %v1776
    %v1813 = vpack.c.b16 %v1781, %v1777
    %v1814 = vpack.c.b16 %v1782, %v1778
    %1847 = vmatprep.subr.bf16.mxu0 %v1784
    %1848 = vmatpush1.bf16.msra.mxu0 %v1783
    %1849 = vmatprep.subr.bf16.mxu0 %v1788
    %1850 = vmatpush1.bf16.msra.mxu0 %v1787
    %1851 = vmatprep.subr.bf16.mxu0 %v1792
    %1852 = vmatpush1.bf16.msra.mxu0 %v1791
    %1853 = vmatprep.subr.bf16.mxu0 %v1796
    %1854 = vmatpush1.bf16.msra.mxu0 %v1795
    %1855 = vmatprep.subr.bf16.mxu0 %v1800
    %1856 = vmatpush1.bf16.msra.mxu0 %v1799
    %1857 = vmatprep.subr.bf16.mxu0 %v1804
    %1858 = vmatpush1.bf16.msra.mxu0 %v1803
    %1859 = vmatprep.subr.bf16.mxu0 %v1808
    %1860 = vmatpush1.bf16.msra.mxu0 %v1807
    %1861 = vmatprep.subr.bf16.mxu0 %v1812
    %1862 = vmatpush1.bf16.msra.mxu0 %v1811
    %1863 = vmatprep.subr.bf16.mxu0 0
    %1864 = vmatpush1.bf16.msra.mxu0 0
    %1865 = vmatprep.subr.bf16.mxu0 0
    %1866 = vmatpush1.bf16.msra.mxu0 0
    %1867 = vmatprep.subr.bf16.mxu0 0
    %1868 = vmatpush1.bf16.msra.mxu0 0
    %1869 = vmatprep.subr.bf16.mxu0 0
    %1870 = vmatpush1.bf16.msra.mxu0 0
    %1871 = vmatprep.subr.bf16.mxu0 0
    %1872 = vmatpush1.bf16.msra.mxu0 0
    %1873 = vmatprep.subr.bf16.mxu0 0
    %1874 = vmatpush1.bf16.msra.mxu0 0
    %1875 = vmatprep.subr.bf16.mxu0 0
    %1876 = vmatpush1.bf16.msra.mxu0 0
    %1877 = vmatprep.subr.bf16.mxu0 0
    %1878 = vmatpush1.bf16.msra.mxu0 0
    %1879 = vmatprep.mubr.bf16.mxu0 0
    %1880 = vmatmul.mubr.bf16.gmra.mrb[0].mxu0 %v1654
    %v1881 = vpop.f32.mrb[0].mxu0
    %v1882 = vadd.f32 0.0, %v1881
    %v1883 = vpop.f32.mrb[0].mxu0
    %v1884 = vadd.f32 0.0, %v1883
    %v1885 = vpop.f32.mrb[0].mxu0
    %v1886 = vpop.f32.mrb[0].mxu0
    %1887 = vdwg.mxu0
    %1888 = vmatprep.subr.bf16.mxu0 %v1786
    %1889 = vmatpush1.bf16.msra.mxu0 %v1785
    %1890 = vmatprep.subr.bf16.mxu0 %v1790
    %1891 = vmatpush1.bf16.msra.mxu0 %v1789
    %1892 = vmatprep.subr.bf16.mxu0 %v1794
    %1893 = vmatpush1.bf16.msra.mxu0 %v1793
    %1894 = vmatprep.subr.bf16.mxu0 %v1798
    %1895 = vmatpush1.bf16.msra.mxu0 %v1797
    %1896 = vmatprep.subr.bf16.mxu0 %v1802
    %1897 = vmatpush1.bf16.msra.mxu0 %v1801
    %1898 = vmatprep.subr.bf16.mxu0 %v1806
    %1899 = vmatpush1.bf16.msra.mxu0 %v1805
    %1900 = vmatprep.subr.bf16.mxu0 %v1810
    %1901 = vmatpush1.bf16.msra.mxu0 %v1809
    %1902 = vmatprep.subr.bf16.mxu0 %v1814
    %1903 = vmatpush1.bf16.msra.mxu0 %v1813
    %1904 = vmatprep.subr.bf16.mxu0 0
    %1905 = vmatpush1.bf16.msra.mxu0 0
    %1906 = vmatprep.subr.bf16.mxu0 0
    %1907 = vmatpush1.bf16.msra.mxu0 0
    %1908 = vmatprep.subr.bf16.mxu0 0
    %1909 = vmatpush1.bf16.msra.mxu0 0
    %1910 = vmatprep.subr.bf16.mxu0 0
    %1911 = vmatpush1.bf16.msra.mxu0 0
    %1912 = vmatprep.subr.bf16.mxu0 0
    %1913 = vmatpush1.bf16.msra.mxu0 0
    %1914 = vmatprep.subr.bf16.mxu0 0
    %1915 = vmatpush1.bf16.msra.mxu0 0
    %1916 = vmatprep.subr.bf16.mxu0 0
    %1917 = vmatpush1.bf16.msra.mxu0 0
    %1918 = vmatprep.subr.bf16.mxu0 0
    %1919 = vmatpush1.bf16.msra.mxu0 0
    %1920 = vmatprep.mubr.bf16.mxu0 0
    %1921 = vmatmul.mubr.bf16.gmra.mrb[0].mxu0 %v1654
    %v1922 = vpop.f32.mrb[0].mxu0
    %v1923 = vadd.f32 0.0, %v1922
    %v1924 = vpop.f32.mrb[0].mxu0
    %v1925 = vadd.f32 0.0, %v1924
    %v1926 = vpop.f32.mrb[0].mxu0
    %v1927 = vpop.f32.mrb[0].mxu0
    %1928 = vdwg.mxu0
    %v1929 = vadd.f32 %v1650, %v1882
    %v1930 = vadd.f32 %v1651, %v1884
    %v1931 = vadd.f32 %v1652, %v1923
    %v1932 = vadd.f32 %v1653, %v1925
    %v1933 = vxor.u32 %v1929, 2147483648
    %v1934 = vmul.f32 %v1933, 1.442695
    %v1935 = vpow.pop %v1934
    %v1936 = vadd.f32 %v1935, 1.0
    %v1937 = vrcp.pop %v1936
    %v1938 = vmul.f32 1.0, %v1937
    %v1939 = vxor.u32 %v1930, 2147483648
    %v1940 = vmul.f32 %v1939, 1.442695
    %v1941 = vpow.pop %v1940
    %v1942 = vadd.f32 %v1941, 1.0
    %v1943 = vrcp.pop %v1942
    %v1944 = vmul.f32 1.0, %v1943
    %v1945 = vtanh.pop %v1931
    %v1946 = vxor.u32 %v1932, 2147483648
    %v1947 = vmul.f32 %v1946, 1.442695
    %v1948 = vpow.pop %v1947
    %v1949 = vadd.f32 %v1948, 1.0
    %v1950 = vrcp.pop %v1949
    %v1951 = vmul.f32 1.0, %v1950
    %v1952 = vmul.f32 %v1944, %v1642
    %v1953 = vmul.f32 %v1938, %v1945
    %v1954 = vadd.f32 %v1952, %v1953
    %v1955 = vtanh.pop %v1954
    %v1956 = vmul.f32 %v1951, %v1955
    %s1957 = sadd.s32 %s27, 5
    %v1958 = vstv %s1957
    %vm1959 = vcmp.lt.s32.totalorder %v1958, %v26
    %v1960 = vsel %vm1959, 1, 0
    %1961 = vset.pattern.permute.xlu0 0
    %1962 = vperm.xlu0 %1961, %v1960
    %v1963 = vpop.permute.xlu0 %1962
    %vm1964 = vcmp.eq.s32.totalorder %v1963, 1
    %v1965 = vsel %vm1964, %v1956, %v1641
    %v1966 = vsel %vm1964, %v1954, %v1642
    %v1967 = vsel %vm1964, %v1956, 0.0
    %v1968 = vpack.c.bf16 %v1967, %v1967
    %s1969 = scalar_lea.vmem [#allocation4], 20
    %1970 = vst [vmem:[%s1969] sm:$0xf] %v1968
    %s1971 = scalar_lea.vmem %s0, 96
    %v1972 = vld [vmem:[%s1971] sm:$0xff]
    %v1973 = vld [vmem:[%s1971 + $0x8] sm:$0xff]
    %v1974 = vunpack.c.l.bf16 %v1972
    %v1975 = vunpack.c.h.bf16 %v1972
    %v1976 = vunpack.c.l.bf16 %v1973
    %v1977 = vunpack.c.h.bf16 %v1973
    %v1978 = vpack.c.bf16 %v1965, %v1965
    %v1979 = vld [vmem:[%s2] sm:$0xff]
    %v1980 = vld [vmem:[%s2 + $0x8] sm:$0xff]
    %v1981 = vld [vmem:[%s2 + $0x10] sm:$0xff]
    %v1982 = vld [vmem:[%s2 + $0x18] sm:$0xff]
    %v1983 = vld [vmem:[%s2 + $0x20] sm:$0xff]
    %v1984 = vld [vmem:[%s2 + $0x28] sm:$0xff]
    %v1985 = vld [vmem:[%s2 + $0x30] sm:$0xff]
    %v1986 = vld [vmem:[%s2 + $0x38] sm:$0xff]
    %v1987 = vld [vmem:[%s2 + $0x40] sm:$0xff]
    %v1988 = vld [vmem:[%s2 + $0x48] sm:$0xff]
    %v1989 = vld [vmem:[%s2 + $0x50] sm:$0xff]
    %v1990 = vld [vmem:[%s2 + $0x58] sm:$0xff]
    %v1991 = vld [vmem:[%s2 + $0x60] sm:$0xff]
    %v1992 = vld [vmem:[%s2 + $0x68] sm:$0xff]
    %v1993 = vld [vmem:[%s2 + $0x70] sm:$0xff]
    %v1994 = vld [vmem:[%s2 + $0x78] sm:$0xff]
    %v1995 = vld [vmem:[%s2 + $0x80] sm:$0xff]
    %v1996 = vld [vmem:[%s2 + $0x88] sm:$0xff]
    %v1997 = vld [vmem:[%s2 + $0x90] sm:$0xff]
    %v1998 = vld [vmem:[%s2 + $0x98] sm:$0xff]
    %v1999 = vld [vmem:[%s2 + $0xa0] sm:$0xff]
    %v2000 = vld [vmem:[%s2 + $0xa8] sm:$0xff]
    %v2001 = vld [vmem:[%s2 + $0xb0] sm:$0xff]
    %v2002 = vld [vmem:[%s2 + $0xb8] sm:$0xff]
    %v2003 = vld [vmem:[%s2 + $0xc0] sm:$0xff]
    %v2004 = vld [vmem:[%s2 + $0xc8] sm:$0xff]
    %v2005 = vld [vmem:[%s2 + $0xd0] sm:$0xff]
    %v2006 = vld [vmem:[%s2 + $0xd8] sm:$0xff]
    %v2007 = vld [vmem:[%s2 + $0xe0] sm:$0xff]
    %v2008 = vld [vmem:[%s2 + $0xe8] sm:$0xff]
    %v2009 = vld [vmem:[%s2 + $0xf0] sm:$0xff]
    %v2010 = vld [vmem:[%s2 + $0xf8] sm:$0xff]
    %v2043 = vunpack.c.l.b16 %v1979
    %v2044 = vunpack.c.h.b16 %v1979
    %v2045 = vunpack.c.l.b16 %v1980
    %v2046 = vunpack.c.h.b16 %v1980
    %v2047 = vunpack.c.l.b16 %v1981
    %v2048 = vunpack.c.h.b16 %v1981
    %v2049 = vunpack.c.l.b16 %v1982
    %v2050 = vunpack.c.h.b16 %v1982
    %v2051 = vunpack.c.l.b16 %v1983
    %v2052 = vunpack.c.h.b16 %v1983
    %v2053 = vunpack.c.l.b16 %v1984
    %v2054 = vunpack.c.h.b16 %v1984
    %v2055 = vunpack.c.l.b16 %v1985
    %v2056 = vunpack.c.h.b16 %v1985
    %v2057 = vunpack.c.l.b16 %v1986
    %v2058 = vunpack.c.h.b16 %v1986
    %v2059 = vunpack.c.l.b16 %v1987
    %v2060 = vunpack.c.h.b16 %v1987
    %v2061 = vunpack.c.l.b16 %v1988
    %v2062 = vunpack.c.h.b16 %v1988
    %v2063 = vunpack.c.l.b16 %v1989
    %v2064 = vunpack.c.h.b16 %v1989
    %v2065 = vunpack.c.l.b16 %v1990
    %v2066 = vunpack.c.h.b16 %v1990
    %v2067 = vunpack.c.l.b16 %v1991
    %v2068 = vunpack.c.h.b16 %v1991
    %v2069 = vunpack.c.l.b16 %v1992
    %v2070 = vunpack.c.h.b16 %v1992
    %v2071 = vunpack.c.l.b16 %v1993
    %v2072 = vunpack.c.h.b16 %v1993
    %v2073 = vunpack.c.l.b16 %v1994
    %v2074 = vunpack.c.h.b16 %v1994
    %v2075 = vunpack.c.l.b16 %v1995
    %v2076 = vunpack.c.h.b16 %v1995
    %v2077 = vunpack.c.l.b16 %v1996
    %v2078 = vunpack.c.h.b16 %v1996
    %v2079 = vunpack.c.l.b16 %v1997
    %v2080 = vunpack.c.h.b16 %v1997
    %v2081 = vunpack.c.l.b16 %v1998
    %v2082 = vunpack.c.h.b16 %v1998
    %v2083 = vunpack.c.l.b16 %v1999
    %v2084 = vunpack.c.h.b16 %v1999
    %v2085 = vunpack.c.l.b16 %v2000
    %v2086 = vunpack.c.h.b16 %v2000
    %v2087 = vunpack.c.l.b16 %v2001
    %v2088 = vunpack.c.h.b16 %v2001
    %v2089 = vunpack.c.l.b16 %v2002
    %v2090 = vunpack.c.h.b16 %v2002
    %v2091 = vunpack.c.l.b16 %v2003
    %v2092 = vunpack.c.h.b16 %v2003
    %v2093 = vunpack.c.l.b16 %v2004
    %v2094 = vunpack.c.h.b16 %v2004
    %v2095 = vunpack.c.l.b16 %v2005
    %v2096 = vunpack.c.h.b16 %v2005
    %v2097 = vunpack.c.l.b16 %v2006
    %v2098 = vunpack.c.h.b16 %v2006
    %v2099 = vunpack.c.l.b16 %v2007
    %v2100 = vunpack.c.h.b16 %v2007
    %v2101 = vunpack.c.l.b16 %v2008
    %v2102 = vunpack.c.h.b16 %v2008
    %v2103 = vunpack.c.l.b16 %v2009
    %v2104 = vunpack.c.h.b16 %v2009
    %v2105 = vunpack.c.l.b16 %v2010
    %v2106 = vunpack.c.h.b16 %v2010
    %v2107 = vpack.c.b16 %v2047, %v2043
    %v2108 = vpack.c.b16 %v2048, %v2044
    %v2109 = vpack.c.b16 %v2049, %v2045
    %v2110 = vpack.c.b16 %v2050, %v2046
    %v2111 = vpack.c.b16 %v2055, %v2051
    %v2112 = vpack.c.b16 %v2056, %v2052
    %v2113 = vpack.c.b16 %v2057, %v2053
    %v2114 = vpack.c.b16 %v2058, %v2054
    %v2115 = vpack.c.b16 %v2063, %v2059
    %v2116 = vpack.c.b16 %v2064, %v2060
    %v2117 = vpack.c.b16 %v2065, %v2061
    %v2118 = vpack.c.b16 %v2066, %v2062
    %v2119 = vpack.c.b16 %v2071, %v2067
    %v2120 = vpack.c.b16 %v2072, %v2068
    %v2121 = vpack.c.b16 %v2073, %v2069
    %v2122 = vpack.c.b16 %v2074, %v2070
    %v2123 = vpack.c.b16 %v2079, %v2075
    %v2124 = vpack.c.b16 %v2080, %v2076
    %v2125 = vpack.c.b16 %v2081, %v2077
    %v2126 = vpack.c.b16 %v2082, %v2078
    %v2127 = vpack.c.b16 %v2087, %v2083
    %v2128 = vpack.c.b16 %v2088, %v2084
    %v2129 = vpack.c.b16 %v2089, %v2085
    %v2130 = vpack.c.b16 %v2090, %v2086
    %v2131 = vpack.c.b16 %v2095, %v2091
    %v2132 = vpack.c.b16 %v2096, %v2092
    %v2133 = vpack.c.b16 %v2097, %v2093
    %v2134 = vpack.c.b16 %v2098, %v2094
    %v2135 = vpack.c.b16 %v2103, %v2099
    %v2136 = vpack.c.b16 %v2104, %v2100
    %v2137 = vpack.c.b16 %v2105, %v2101
    %v2138 = vpack.c.b16 %v2106, %v2102
    %2171 = vmatprep.subr.bf16.mxu0 %v2108
    %2172 = vmatpush1.bf16.msra.mxu0 %v2107
    %2173 = vmatprep.subr.bf16.mxu0 %v2112
    %2174 = vmatpush1.bf16.msra.mxu0 %v2111
    %2175 = vmatprep.subr.bf16.mxu0 %v2116
    %2176 = vmatpush1.bf16.msra.mxu0 %v2115
    %2177 = vmatprep.subr.bf16.mxu0 %v2120
    %2178 = vmatpush1.bf16.msra.mxu0 %v2119
    %2179 = vmatprep.subr.bf16.mxu0 %v2124
    %2180 = vmatpush1.bf16.msra.mxu0 %v2123
    %2181 = vmatprep.subr.bf16.mxu0 %v2128
    %2182 = vmatpush1.bf16.msra.mxu0 %v2127
    %2183 = vmatprep.subr.bf16.mxu0 %v2132
    %2184 = vmatpush1.bf16.msra.mxu0 %v2131
    %2185 = vmatprep.subr.bf16.mxu0 %v2136
    %2186 = vmatpush1.bf16.msra.mxu0 %v2135
    %2187 = vmatprep.subr.bf16.mxu0 0
    %2188 = vmatpush1.bf16.msra.mxu0 0
    %2189 = vmatprep.subr.bf16.mxu0 0
    %2190 = vmatpush1.bf16.msra.mxu0 0
    %2191 = vmatprep.subr.bf16.mxu0 0
    %2192 = vmatpush1.bf16.msra.mxu0 0
    %2193 = vmatprep.subr.bf16.mxu0 0
    %2194 = vmatpush1.bf16.msra.mxu0 0
    %2195 = vmatprep.subr.bf16.mxu0 0
    %2196 = vmatpush1.bf16.msra.mxu0 0
    %2197 = vmatprep.subr.bf16.mxu0 0
    %2198 = vmatpush1.bf16.msra.mxu0 0
    %2199 = vmatprep.subr.bf16.mxu0 0
    %2200 = vmatpush1.bf16.msra.mxu0 0
    %2201 = vmatprep.subr.bf16.mxu0 0
    %2202 = vmatpush1.bf16.msra.mxu0 0
    %2203 = vmatprep.mubr.bf16.mxu0 0
    %2204 = vmatmul.mubr.bf16.gmra.mrb[0].mxu0 %v1978
    %v2205 = vpop.f32.mrb[0].mxu0
    %v2206 = vadd.f32 0.0, %v2205
    %v2207 = vpop.f32.mrb[0].mxu0
    %v2208 = vadd.f32 0.0, %v2207
    %v2209 = vpop.f32.mrb[0].mxu0
    %v2210 = vpop.f32.mrb[0].mxu0
    %2211 = vdwg.mxu0
    %2212 = vmatprep.subr.bf16.mxu0 %v2110
    %2213 = vmatpush1.bf16.msra.mxu0 %v2109
    %2214 = vmatprep.subr.bf16.mxu0 %v2114
    %2215 = vmatpush1.bf16.msra.mxu0 %v2113
    %2216 = vmatprep.subr.bf16.mxu0 %v2118
    %2217 = vmatpush1.bf16.msra.mxu0 %v2117
    %2218 = vmatprep.subr.bf16.mxu0 %v2122
    %2219 = vmatpush1.bf16.msra.mxu0 %v2121
    %2220 = vmatprep.subr.bf16.mxu0 %v2126
    %2221 = vmatpush1.bf16.msra.mxu0 %v2125
    %2222 = vmatprep.subr.bf16.mxu0 %v2130
    %2223 = vmatpush1.bf16.msra.mxu0 %v2129
    %2224 = vmatprep.subr.bf16.mxu0 %v2134
    %2225 = vmatpush1.bf16.msra.mxu0 %v2133
    %2226 = vmatprep.subr.bf16.mxu0 %v2138
    %2227 = vmatpush1.bf16.msra.mxu0 %v2137
    %2228 = vmatprep.subr.bf16.mxu0 0
    %2229 = vmatpush1.bf16.msra.mxu0 0
    %2230 = vmatprep.subr.bf16.mxu0 0
    %2231 = vmatpush1.bf16.msra.mxu0 0
    %2232 = vmatprep.subr.bf16.mxu0 0
    %2233 = vmatpush1.bf16.msra.mxu0 0
    %2234 = vmatprep.subr.bf16.mxu0 0
    %2235 = vmatpush1.bf16.msra.mxu0 0
    %2236 = vmatprep.subr.bf16.mxu0 0
    %2237 = vmatpush1.bf16.msra.mxu0 0
    %2238 = vmatprep.subr.bf16.mxu0 0
    %2239 = vmatpush1.bf16.msra.mxu0 0
    %2240 = vmatprep.subr.bf16.mxu0 0
    %2241 = vmatpush1.bf16.msra.mxu0 0
    %2242 = vmatprep.subr.bf16.mxu0 0
    %2243 = vmatpush1.bf16.msra.mxu0 0
    %2244 = vmatprep.mubr.bf16.mxu0 0
    %2245 = vmatmul.mubr.bf16.gmra.mrb[0].mxu0 %v1978
    %v2246 = vpop.f32.mrb[0].mxu0
    %v2247 = vadd.f32 0.0, %v2246
    %v2248 = vpop.f32.mrb[0].mxu0
    %v2249 = vadd.f32 0.0, %v2248
    %v2250 = vpop.f32.mrb[0].mxu0
    %v2251 = vpop.f32.mrb[0].mxu0
    %2252 = vdwg.mxu0
    %v2253 = vadd.f32 %v1974, %v2206
    %v2254 = vadd.f32 %v1975, %v2208
    %v2255 = vadd.f32 %v1976, %v2247
    %v2256 = vadd.f32 %v1977, %v2249
    %v2257 = vxor.u32 %v2253, 2147483648
    %v2258 = vmul.f32 %v2257, 1.442695
    %v2259 = vpow.pop %v2258
    %v2260 = vadd.f32 %v2259, 1.0
    %v2261 = vrcp.pop %v2260
    %v2262 = vmul.f32 1.0, %v2261
    %v2263 = vxor.u32 %v2254, 2147483648
    %v2264 = vmul.f32 %v2263, 1.442695
    %v2265 = vpow.pop %v2264
    %v2266 = vadd.f32 %v2265, 1.0
    %v2267 = vrcp.pop %v2266
    %v2268 = vmul.f32 1.0, %v2267
    %v2269 = vtanh.pop %v2255
    %v2270 = vxor.u32 %v2256, 2147483648
    %v2271 = vmul.f32 %v2270, 1.442695
    %v2272 = vpow.pop %v2271
    %v2273 = vadd.f32 %v2272, 1.0
    %v2274 = vrcp.pop %v2273
    %v2275 = vmul.f32 1.0, %v2274
    %v2276 = vmul.f32 %v2268, %v1966
    %v2277 = vmul.f32 %v2262, %v2269
    %v2278 = vadd.f32 %v2276, %v2277
    %v2279 = vtanh.pop %v2278
    %v2280 = vmul.f32 %v2275, %v2279
    %s2281 = sadd.s32 %s27, 6
    %v2282 = vstv %s2281
    %vm2283 = vcmp.lt.s32.totalorder %v2282, %v26
    %v2284 = vsel %vm2283, 1, 0
    %2285 = vset.pattern.permute.xlu0 0
    %2286 = vperm.xlu0 %2285, %v2284
    %v2287 = vpop.permute.xlu0 %2286
    %vm2288 = vcmp.eq.s32.totalorder %v2287, 1
    %v2289 = vsel %vm2288, %v2280, %v1965
    %v2290 = vsel %vm2288, %v2278, %v1966
    %v2291 = vsel %vm2288, %v2280, 0.0
    %v2292 = vpack.c.bf16 %v2291, %v2291
    %s2293 = scalar_lea.vmem [#allocation4], 24
    %2294 = vst [vmem:[%s2293] sm:$0xf] %v2292
    %s2295 = scalar_lea.vmem %s0, 112
    %v2296 = vld [vmem:[%s2295] sm:$0xff]
    %v2297 = vld [vmem:[%s2295 + $0x8] sm:$0xff]
    %v2298 = vunpack.c.l.bf16 %v2296
    %v2299 = vunpack.c.h.bf16 %v2296
    %v2300 = vunpack.c.l.bf16 %v2297
    %v2301 = vunpack.c.h.bf16 %v2297
    %v2302 = vpack.c.bf16 %v2289, %v2289
    %v2303 = vld [vmem:[%s2] sm:$0xff]
    %v2304 = vld [vmem:[%s2 + $0x8] sm:$0xff]
    %v2305 = vld [vmem:[%s2 + $0x10] sm:$0xff]
    %v2306 = vld [vmem:[%s2 + $0x18] sm:$0xff]
    %v2307 = vld [vmem:[%s2 + $0x20] sm:$0xff]
    %v2308 = vld [vmem:[%s2 + $0x28] sm:$0xff]
    %v2309 = vld [vmem:[%s2 + $0x30] sm:$0xff]
    %v2310 = vld [vmem:[%s2 + $0x38] sm:$0xff]
    %v2311 = vld [vmem:[%s2 + $0x40] sm:$0xff]
    %v2312 = vld [vmem:[%s2 + $0x48] sm:$0xff]
    %v2313 = vld [vmem:[%s2 + $0x50] sm:$0xff]
    %v2314 = vld [vmem:[%s2 + $0x58] sm:$0xff]
    %v2315 = vld [vmem:[%s2 + $0x60] sm:$0xff]
    %v2316 = vld [vmem:[%s2 + $0x68] sm:$0xff]
    %v2317 = vld [vmem:[%s2 + $0x70] sm:$0xff]
    %v2318 = vld [vmem:[%s2 + $0x78] sm:$0xff]
    %v2319 = vld [vmem:[%s2 + $0x80] sm:$0xff]
    %v2320 = vld [vmem:[%s2 + $0x88] sm:$0xff]
    %v2321 = vld [vmem:[%s2 + $0x90] sm:$0xff]
    %v2322 = vld [vmem:[%s2 + $0x98] sm:$0xff]
    %v2323 = vld [vmem:[%s2 + $0xa0] sm:$0xff]
    %v2324 = vld [vmem:[%s2 + $0xa8] sm:$0xff]
    %v2325 = vld [vmem:[%s2 + $0xb0] sm:$0xff]
    %v2326 = vld [vmem:[%s2 + $0xb8] sm:$0xff]
    %v2327 = vld [vmem:[%s2 + $0xc0] sm:$0xff]
    %v2328 = vld [vmem:[%s2 + $0xc8] sm:$0xff]
    %v2329 = vld [vmem:[%s2 + $0xd0] sm:$0xff]
    %v2330 = vld [vmem:[%s2 + $0xd8] sm:$0xff]
    %v2331 = vld [vmem:[%s2 + $0xe0] sm:$0xff]
    %v2332 = vld [vmem:[%s2 + $0xe8] sm:$0xff]
    %v2333 = vld [vmem:[%s2 + $0xf0] sm:$0xff]
    %v2334 = vld [vmem:[%s2 + $0xf8] sm:$0xff]
    %v2367 = vunpack.c.l.b16 %v2303
    %v2368 = vunpack.c.h.b16 %v2303
    %v2369 = vunpack.c.l.b16 %v2304
    %v2370 = vunpack.c.h.b16 %v2304
    %v2371 = vunpack.c.l.b16 %v2305
    %v2372 = vunpack.c.h.b16 %v2305
    %v2373 = vunpack.c.l.b16 %v2306
    %v2374 = vunpack.c.h.b16 %v2306
    %v2375 = vunpack.c.l.b16 %v2307
    %v2376 = vunpack.c.h.b16 %v2307
    %v2377 = vunpack.c.l.b16 %v2308
    %v2378 = vunpack.c.h.b16 %v2308
    %v2379 = vunpack.c.l.b16 %v2309
    %v2380 = vunpack.c.h.b16 %v2309
    %v2381 = vunpack.c.l.b16 %v2310
    %v2382 = vunpack.c.h.b16 %v2310
    %v2383 = vunpack.c.l.b16 %v2311
    %v2384 = vunpack.c.h.b16 %v2311
    %v2385 = vunpack.c.l.b16 %v2312
    %v2386 = vunpack.c.h.b16 %v2312
    %v2387 = vunpack.c.l.b16 %v2313
    %v2388 = vunpack.c.h.b16 %v2313
    %v2389 = vunpack.c.l.b16 %v2314
    %v2390 = vunpack.c.h.b16 %v2314
    %v2391 = vunpack.c.l.b16 %v2315
    %v2392 = vunpack.c.h.b16 %v2315
    %v2393 = vunpack.c.l.b16 %v2316
    %v2394 = vunpack.c.h.b16 %v2316
    %v2395 = vunpack.c.l.b16 %v2317
    %v2396 = vunpack.c.h.b16 %v2317
    %v2397 = vunpack.c.l.b16 %v2318
    %v2398 = vunpack.c.h.b16 %v2318
    %v2399 = vunpack.c.l.b16 %v2319
    %v2400 = vunpack.c.h.b16 %v2319
    %v2401 = vunpack.c.l.b16 %v2320
    %v2402 = vunpack.c.h.b16 %v2320
    %v2403 = vunpack.c.l.b16 %v2321
    %v2404 = vunpack.c.h.b16 %v2321
    %v2405 = vunpack.c.l.b16 %v2322
    %v2406 = vunpack.c.h.b16 %v2322
    %v2407 = vunpack.c.l.b16 %v2323
    %v2408 = vunpack.c.h.b16 %v2323
    %v2409 = vunpack.c.l.b16 %v2324
    %v2410 = vunpack.c.h.b16 %v2324
    %v2411 = vunpack.c.l.b16 %v2325
    %v2412 = vunpack.c.h.b16 %v2325
    %v2413 = vunpack.c.l.b16 %v2326
    %v2414 = vunpack.c.h.b16 %v2326
    %v2415 = vunpack.c.l.b16 %v2327
    %v2416 = vunpack.c.h.b16 %v2327
    %v2417 = vunpack.c.l.b16 %v2328
    %v2418 = vunpack.c.h.b16 %v2328
    %v2419 = vunpack.c.l.b16 %v2329
    %v2420 = vunpack.c.h.b16 %v2329
    %v2421 = vunpack.c.l.b16 %v2330
    %v2422 = vunpack.c.h.b16 %v2330
    %v2423 = vunpack.c.l.b16 %v2331
    %v2424 = vunpack.c.h.b16 %v2331
    %v2425 = vunpack.c.l.b16 %v2332
    %v2426 = vunpack.c.h.b16 %v2332
    %v2427 = vunpack.c.l.b16 %v2333
    %v2428 = vunpack.c.h.b16 %v2333
    %v2429 = vunpack.c.l.b16 %v2334
    %v2430 = vunpack.c.h.b16 %v2334
    %v2431 = vpack.c.b16 %v2371, %v2367
    %v2432 = vpack.c.b16 %v2372, %v2368
    %v2433 = vpack.c.b16 %v2373, %v2369
    %v2434 = vpack.c.b16 %v2374, %v2370
    %v2435 = vpack.c.b16 %v2379, %v2375
    %v2436 = vpack.c.b16 %v2380, %v2376
    %v2437 = vpack.c.b16 %v2381, %v2377
    %v2438 = vpack.c.b16 %v2382, %v2378
    %v2439 = vpack.c.b16 %v2387, %v2383
    %v2440 = vpack.c.b16 %v2388, %v2384
    %v2441 = vpack.c.b16 %v2389, %v2385
    %v2442 = vpack.c.b16 %v2390, %v2386
    %v2443 = vpack.c.b16 %v2395, %v2391
    %v2444 = vpack.c.b16 %v2396, %v2392
    %v2445 = vpack.c.b16 %v2397, %v2393
    %v2446 = vpack.c.b16 %v2398, %v2394
    %v2447 = vpack.c.b16 %v2403, %v2399
    %v2448 = vpack.c.b16 %v2404, %v2400
    %v2449 = vpack.c.b16 %v2405, %v2401
    %v2450 = vpack.c.b16 %v2406, %v2402
    %v2451 = vpack.c.b16 %v2411, %v2407
    %v2452 = vpack.c.b16 %v2412, %v2408
    %v2453 = vpack.c.b16 %v2413, %v2409
    %v2454 = vpack.c.b16 %v2414, %v2410
    %v2455 = vpack.c.b16 %v2419, %v2415
    %v2456 = vpack.c.b16 %v2420, %v2416
    %v2457 = vpack.c.b16 %v2421, %v2417
    %v2458 = vpack.c.b16 %v2422, %v2418
    %v2459 = vpack.c.b16 %v2427, %v2423
    %v2460 = vpack.c.b16 %v2428, %v2424
    %v2461 = vpack.c.b16 %v2429, %v2425
    %v2462 = vpack.c.b16 %v2430, %v2426
    %2495 = vmatprep.subr.bf16.mxu0 %v2432
    %2496 = vmatpush1.bf16.msra.mxu0 %v2431
    %2497 = vmatprep.subr.bf16.mxu0 %v2436
    %2498 = vmatpush1.bf16.msra.mxu0 %v2435
    %2499 = vmatprep.subr.bf16.mxu0 %v2440
    %2500 = vmatpush1.bf16.msra.mxu0 %v2439
    %2501 = vmatprep.subr.bf16.mxu0 %v2444
    %2502 = vmatpush1.bf16.msra.mxu0 %v2443
    %2503 = vmatprep.subr.bf16.mxu0 %v2448
    %2504 = vmatpush1.bf16.msra.mxu0 %v2447
    %2505 = vmatprep.subr.bf16.mxu0 %v2452
    %2506 = vmatpush1.bf16.msra.mxu0 %v2451
    %2507 = vmatprep.subr.bf16.mxu0 %v2456
    %2508 = vmatpush1.bf16.msra.mxu0 %v2455
    %2509 = vmatprep.subr.bf16.mxu0 %v2460
    %2510 = vmatpush1.bf16.msra.mxu0 %v2459
    %2511 = vmatprep.subr.bf16.mxu0 0
    %2512 = vmatpush1.bf16.msra.mxu0 0
    %2513 = vmatprep.subr.bf16.mxu0 0
    %2514 = vmatpush1.bf16.msra.mxu0 0
    %2515 = vmatprep.subr.bf16.mxu0 0
    %2516 = vmatpush1.bf16.msra.mxu0 0
    %2517 = vmatprep.subr.bf16.mxu0 0
    %2518 = vmatpush1.bf16.msra.mxu0 0
    %2519 = vmatprep.subr.bf16.mxu0 0
    %2520 = vmatpush1.bf16.msra.mxu0 0
    %2521 = vmatprep.subr.bf16.mxu0 0
    %2522 = vmatpush1.bf16.msra.mxu0 0
    %2523 = vmatprep.subr.bf16.mxu0 0
    %2524 = vmatpush1.bf16.msra.mxu0 0
    %2525 = vmatprep.subr.bf16.mxu0 0
    %2526 = vmatpush1.bf16.msra.mxu0 0
    %2527 = vmatprep.mubr.bf16.mxu0 0
    %2528 = vmatmul.mubr.bf16.gmra.mrb[0].mxu0 %v2302
    %v2529 = vpop.f32.mrb[0].mxu0
    %v2530 = vadd.f32 0.0, %v2529
    %v2531 = vpop.f32.mrb[0].mxu0
    %v2532 = vadd.f32 0.0, %v2531
    %v2533 = vpop.f32.mrb[0].mxu0
    %v2534 = vpop.f32.mrb[0].mxu0
    %2535 = vdwg.mxu0
    %2536 = vmatprep.subr.bf16.mxu0 %v2434
    %2537 = vmatpush1.bf16.msra.mxu0 %v2433
    %2538 = vmatprep.subr.bf16.mxu0 %v2438
    %2539 = vmatpush1.bf16.msra.mxu0 %v2437
    %2540 = vmatprep.subr.bf16.mxu0 %v2442
    %2541 = vmatpush1.bf16.msra.mxu0 %v2441
    %2542 = vmatprep.subr.bf16.mxu0 %v2446
    %2543 = vmatpush1.bf16.msra.mxu0 %v2445
    %2544 = vmatprep.subr.bf16.mxu0 %v2450
    %2545 = vmatpush1.bf16.msra.mxu0 %v2449
    %2546 = vmatprep.subr.bf16.mxu0 %v2454
    %2547 = vmatpush1.bf16.msra.mxu0 %v2453
    %2548 = vmatprep.subr.bf16.mxu0 %v2458
    %2549 = vmatpush1.bf16.msra.mxu0 %v2457
    %2550 = vmatprep.subr.bf16.mxu0 %v2462
    %2551 = vmatpush1.bf16.msra.mxu0 %v2461
    %2552 = vmatprep.subr.bf16.mxu0 0
    %2553 = vmatpush1.bf16.msra.mxu0 0
    %2554 = vmatprep.subr.bf16.mxu0 0
    %2555 = vmatpush1.bf16.msra.mxu0 0
    %2556 = vmatprep.subr.bf16.mxu0 0
    %2557 = vmatpush1.bf16.msra.mxu0 0
    %2558 = vmatprep.subr.bf16.mxu0 0
    %2559 = vmatpush1.bf16.msra.mxu0 0
    %2560 = vmatprep.subr.bf16.mxu0 0
    %2561 = vmatpush1.bf16.msra.mxu0 0
    %2562 = vmatprep.subr.bf16.mxu0 0
    %2563 = vmatpush1.bf16.msra.mxu0 0
    %2564 = vmatprep.subr.bf16.mxu0 0
    %2565 = vmatpush1.bf16.msra.mxu0 0
    %2566 = vmatprep.subr.bf16.mxu0 0
    %2567 = vmatpush1.bf16.msra.mxu0 0
    %2568 = vmatprep.mubr.bf16.mxu0 0
    %2569 = vmatmul.mubr.bf16.gmra.mrb[0].mxu0 %v2302
    %v2570 = vpop.f32.mrb[0].mxu0
    %v2571 = vadd.f32 0.0, %v2570
    %v2572 = vpop.f32.mrb[0].mxu0
    %v2573 = vadd.f32 0.0, %v2572
    %v2574 = vpop.f32.mrb[0].mxu0
    %v2575 = vpop.f32.mrb[0].mxu0
    %2576 = vdwg.mxu0
    %v2577 = vadd.f32 %v2298, %v2530
    %v2578 = vadd.f32 %v2299, %v2532
    %v2579 = vadd.f32 %v2300, %v2571
    %v2580 = vadd.f32 %v2301, %v2573
    %v2581 = vxor.u32 %v2577, 2147483648
    %v2582 = vmul.f32 %v2581, 1.442695
    %v2583 = vpow.pop %v2582
    %v2584 = vadd.f32 %v2583, 1.0
    %v2585 = vrcp.pop %v2584
    %v2586 = vmul.f32 1.0, %v2585
    %v2587 = vxor.u32 %v2578, 2147483648
    %v2588 = vmul.f32 %v2587, 1.442695
    %v2589 = vpow.pop %v2588
    %v2590 = vadd.f32 %v2589, 1.0
    %v2591 = vrcp.pop %v2590
    %v2592 = vmul.f32 1.0, %v2591
    %v2593 = vtanh.pop %v2579
    %v2594 = vxor.u32 %v2580, 2147483648
    %v2595 = vmul.f32 %v2594, 1.442695
    %v2596 = vpow.pop %v2595
    %v2597 = vadd.f32 %v2596, 1.0
    %v2598 = vrcp.pop %v2597
    %v2599 = vmul.f32 1.0, %v2598
    %v2600 = vmul.f32 %v2592, %v2290
    %v2601 = vmul.f32 %v2586, %v2593
    %v2602 = vadd.f32 %v2600, %v2601
    %v2603 = vtanh.pop %v2602
    %v2604 = vmul.f32 %v2599, %v2603
    %s2605 = sadd.s32 %s27, 7
    %v2606 = vstv %s2605
    %vm2607 = vcmp.lt.s32.totalorder %v2606, %v26
    %v2608 = vsel %vm2607, 1, 0
    %2609 = vset.pattern.permute.xlu0 0
    %2610 = vperm.xlu0 %2609, %v2608
    %v2611 = vpop.permute.xlu0 %2610
    %vm2612 = vcmp.eq.s32.totalorder %v2611, 1
    %v2613 = vsel %vm2612, %v2604, %v2289
    %v2614 = vsel %vm2612, %v2602, %v2290
    %v2615 = vsel %vm2612, %v2604, 0.0
    %v2616 = vpack.c.bf16 %v2615, %v2615
    %s2617 = scalar_lea.vmem [#allocation4], 28
    %2618 = vst [vmem:[%s2617] sm:$0xf] %v2616
    %2619 = vst [vmem:[#allocation2] sm:$0xff] %v2613
    %2620 = vst [vmem:[#allocation3] sm:$0xff] %v2614
    // Predicated region
    $region18: #{lstm_forward.3} parent=1 // pred_check
      %p2621 = pneg %p20
    $region19: #{lstm_forward.3} parent=1 // pred_check_branch
      %2623 = sbr.rel (%p2621) target = $region21
    $region20: #{lstm_forward.3} parent=1 // pred_region
      %2624 = vst [vmem:[%s4] sm:$0xff] %v2613
      %2625 = vst [vmem:[#allocation6] sm:$0xff] %v2614
    $region21: #{lstm_forward.3} parent=1 // pred_fallthru
      _
    // Predicated region
    $region22: #{lstm_forward.3} parent=1 // pred_check
      _
    $region23: #{lstm_forward.3} parent=1 // pred_check_branch
      %2627 = sbr.rel (0) target = $region25
    $region24: #{lstm_forward.3} parent=1 // pred_region
      %s2629 = ssub.s32 512, 512
      %2630 = vsyncadd [#allocation5], %s2629
      %s2631 = sshll.u32 [#allocation4], 4
      %s2632 = int_to_ptr.vmem [resolvable:$true] %s2631
      %2637 = dma.vmem_to_hbm [thread:$0]  %s2632, 512, %s3, [#allocation5], 64, 64, 4
    $region25: #{lstm_forward.3} parent=1 // pred_fallthru
      _
    // Predicated region
    $region26: #{lstm_forward.3} parent=1 // pred_check
      _
    $region27: #{lstm_forward.3} parent=1 // pred_check_branch
      %2639 = sbr.rel (0) target = $region29
    $region28: #{lstm_forward.3} parent=1 // pred_region
      _
    $region29: #{lstm_forward.3} parent=1 // pred_fallthru
      _
    // Predicated region
    $region30: #{lstm_forward.3} parent=1 // pred_check
      _
    $region31: #{lstm_forward.3} parent=1 // pred_check_branch
      %2641 = sbr.rel (0) target = $region33
    $region32: #{lstm_forward.3} parent=1 // pred_region
      %s2643 = ssub.s32 128, 128
      %2644 = vsyncadd [#allocation7], %s2643
      %s2646 = sshll.u32 [#allocation6], 4
      %s2647 = int_to_ptr.vmem [resolvable:$true] %s2646
      %2649 = dma.vmem_to_hbm [thread:$0]  %s2647, 128, %s5, [#allocation7]
    $region33: #{lstm_forward.3} parent=1 // pred_fallthru
      _
    // Predicated region
    $region34: #{lstm_forward.3} parent=1 // pred_check
      _
    $region35: #{lstm_forward.3} parent=1 // pred_check_branch
      %2651 = sbr.rel (0) target = $region37
    $region36: #{lstm_forward.3} parent=1 // pred_region
      %2652 = dma.done [#allocation5], 512
    $region37: #{lstm_forward.3} parent=1 // pred_fallthru
      _
    // Predicated region
    $region38: #{lstm_forward.3} parent=1 // pred_check
      _
    $region39: #{lstm_forward.3} parent=1 // pred_check_branch
      %2654 = sbr.rel (0) target = $region41
    $region40: #{lstm_forward.3} parent=1 // pred_region
      _
    $region41: #{lstm_forward.3} parent=1 // pred_fallthru
      _
    // Predicated region
    $region42: #{lstm_forward.3} parent=1 // pred_check
      _
    $region43: #{lstm_forward.3} parent=1 // pred_check_branch
      %2656 = sbr.rel (0) target = $region45
    $region44: #{lstm_forward.3} parent=1 // pred_region
      %2657 = dma.done [#allocation7], 128
    $region45: #{lstm_forward.3} parent=1 // pred_fallthru
      _
    %2658 = vsyncpa [#allocation5], 1
    %2659 = vsyncpa [#allocation7], 1

// kernel: lstm_forward.2
$region0: #{lstm_forward.2}
  #allocation0 [shape = 'u32[]', space=smem, size = 0x4, offset = 0x4, fixed_abs, tag = 'smem constant byte address 0x4 - core index']
  #allocation1 [shape = 'u32[144,128]{1,0:T(1,128)}', space=vmem, size = 0x12000, scoped, tag = 'internal scratch']
  #allocation2 [shape = 'f32[8,128]{1,0:T(8,128)}', space=vmem, size = 0x1000, scoped, tag = 'scratch operand']
  #allocation3 [shape = 'f32[8,128]{1,0:T(8,128)}', space=vmem, size = 0x1000, scoped, tag = 'scratch operand']
  %s0 = inlined_call_operand.vmem [shape: bf16[8,8,512], index: 0, kind: input, shape index: {}]
  %s1 = inlined_call_operand.vmem [shape: s32[8,1], index: 1, kind: input, shape index: {}]
  %s2 = inlined_call_operand.vmem [shape: bf16[128,512], index: 2, kind: input, shape index: {}]
  %s3 = inlined_call_operand.vmem [shape: bf16[8,8,128], index: 3, kind: output, shape index: {0}]
  %s4 = inlined_call_operand.vmem [shape: f32[8,128], index: 4, kind: output, shape index: {1}]
  %s5 = inlined_call_operand.hbm [shape: f32[8,128], index: 5, kind: output, shape index: {2}]
  %6 = xla_tuple %s3, %s4, %s5
  %s7 = sld [smem:[#allocation0]]
  $region46: #{lstm_forward.2} parent=0
    _
  %s9 = ssub.s32 1, %s7
  %s10 = scalar_select 0, %s9, %s7
  $region1: #{lstm_forward.2} parent=0
    #allocation4 [shape = 'u8[4096]{0}', space=vmem, size = 0x1000, scoped, tag = 'output window, operand 2, single buffered']
    #allocation5 [shape = 's32[1]{0}', space=sflag, size = 0x4, scoped, tag = 'scoped memory for lstm_forward.2']
    %11 = vsyncpa [#allocation5], 0
    // Predicated region
    $region2: #{lstm_forward.2} parent=1 // pred_check
      _
    $region3: #{lstm_forward.2} parent=1 // pred_check_branch
      %13 = sbr.rel (0) target = $region5
    $region4: #{lstm_forward.2} parent=1 // pred_region
      _
    $region5: #{lstm_forward.2} parent=1 // pred_fallthru
      _
    // Predicated region
    $region6: #{lstm_forward.2} parent=1 // pred_check
      _
    $region7: #{lstm_forward.2} parent=1 // pred_check_branch
      %15 = sbr.rel (0) target = $region9
    $region8: #{lstm_forward.2} parent=1 // pred_region
      _
    $region9: #{lstm_forward.2} parent=1 // pred_fallthru
      _
    // Predicated region
    $region10: #{lstm_forward.2} parent=1 // pred_check
      _
    $region11: #{lstm_forward.2} parent=1 // pred_check_branch
      %17 = sbr.rel (0) target = $region13
    $region12: #{lstm_forward.2} parent=1 // pred_region
      _
    $region13: #{lstm_forward.2} parent=1 // pred_fallthru
      _
    %p19 = scmp.eq.s32.totalorder 0, 0
    // Predicated region
    $region14: #{lstm_forward.2} parent=1 // pred_check
      %p20 = pneg %p19
    $region15: #{lstm_forward.2} parent=1 // pred_check_branch
      %22 = sbr.rel (%p20) target = $region17
    $region16: #{lstm_forward.2} parent=1 // pred_region
      %23 = vst [vmem:[#allocation2] sm:$0xff] 0.0
      %24 = vst [vmem:[#allocation3] sm:$0xff] 0.0
    $region17: #{lstm_forward.2} parent=1 // pred_fallthru
      _
    %v25 = vld [vmem:[%s1] sm:$0xff]
    %s26 = smul.u32 0, 8
    %v27 = vld [vmem:[#allocation2] sm:$0xff]
    %v28 = vld [vmem:[#allocation3] sm:$0xff]
    %v29 = vld [vmem:[%s0] sm:$0xff]
    %v30 = vld [vmem:[%s0 + $0x8] sm:$0xff]
    %v31 = vunpack.c.l.bf16 %v29
    %v32 = vunpack.c.h.bf16 %v29
    %v33 = vunpack.c.l.bf16 %v30
    %v34 = vunpack.c.h.bf16 %v30
    %v35 = vpack.c.bf16 %v27, %v27
    %v36 = vld [vmem:[%s2] sm:$0xff]
    %v37 = vld [vmem:[%s2 + $0x8] sm:$0xff]
    %v38 = vld [vmem:[%s2 + $0x10] sm:$0xff]
    %v39 = vld [vmem:[%s2 + $0x18] sm:$0xff]
    %v40 = vld [vmem:[%s2 + $0x20] sm:$0xff]
    %v41 = vld [vmem:[%s2 + $0x28] sm:$0xff]
    %v42 = vld [vmem:[%s2 + $0x30] sm:$0xff]
    %v43 = vld [vmem:[%s2 + $0x38] sm:$0xff]
    %v44 = vld [vmem:[%s2 + $0x40] sm:$0xff]
    %v45 = vld [vmem:[%s2 + $0x48] sm:$0xff]
    %v46 = vld [vmem:[%s2 + $0x50] sm:$0xff]
    %v47 = vld [vmem:[%s2 + $0x58] sm:$0xff]
    %v48 = vld [vmem:[%s2 + $0x60] sm:$0xff]
    %v49 = vld [vmem:[%s2 + $0x68] sm:$0xff]
    %v50 = vld [vmem:[%s2 + $0x70] sm:$0xff]
    %v51 = vld [vmem:[%s2 + $0x78] sm:$0xff]
    %v52 = vld [vmem:[%s2 + $0x80] sm:$0xff]
    %v53 = vld [vmem:[%s2 + $0x88] sm:$0xff]
    %v54 = vld [vmem:[%s2 + $0x90] sm:$0xff]
    %v55 = vld [vmem:[%s2 + $0x98] sm:$0xff]
    %v56 = vld [vmem:[%s2 + $0xa0] sm:$0xff]
    %v57 = vld [vmem:[%s2 + $0xa8] sm:$0xff]
    %v58 = vld [vmem:[%s2 + $0xb0] sm:$0xff]
    %v59 = vld [vmem:[%s2 + $0xb8] sm:$0xff]
    %v60 = vld [vmem:[%s2 + $0xc0] sm:$0xff]
    %v61 = vld [vmem:[%s2 + $0xc8] sm:$0xff]
    %v62 = vld [vmem:[%s2 + $0xd0] sm:$0xff]
    %v63 = vld [vmem:[%s2 + $0xd8] sm:$0xff]
    %v64 = vld [vmem:[%s2 + $0xe0] sm:$0xff]
    %v65 = vld [vmem:[%s2 + $0xe8] sm:$0xff]
    %v66 = vld [vmem:[%s2 + $0xf0] sm:$0xff]
    %v67 = vld [vmem:[%s2 + $0xf8] sm:$0xff]
    %v100 = vunpack.c.l.b16 %v36
    %v101 = vunpack.c.h.b16 %v36
    %v102 = vunpack.c.l.b16 %v37
    %v103 = vunpack.c.h.b16 %v37
    %v104 = vunpack.c.l.b16 %v38
    %v105 = vunpack.c.h.b16 %v38
    %v106 = vunpack.c.l.b16 %v39
    %v107 = vunpack.c.h.b16 %v39
    %v108 = vunpack.c.l.b16 %v40
    %v109 = vunpack.c.h.b16 %v40
    %v110 = vunpack.c.l.b16 %v41
    %v111 = vunpack.c.h.b16 %v41
    %v112 = vunpack.c.l.b16 %v42
    %v113 = vunpack.c.h.b16 %v42
    %v114 = vunpack.c.l.b16 %v43
    %v115 = vunpack.c.h.b16 %v43
    %v116 = vunpack.c.l.b16 %v44
    %v117 = vunpack.c.h.b16 %v44
    %v118 = vunpack.c.l.b16 %v45
    %v119 = vunpack.c.h.b16 %v45
    %v120 = vunpack.c.l.b16 %v46
    %v121 = vunpack.c.h.b16 %v46
    %v122 = vunpack.c.l.b16 %v47
    %v123 = vunpack.c.h.b16 %v47
    %v124 = vunpack.c.l.b16 %v48
    %v125 = vunpack.c.h.b16 %v48
    %v126 = vunpack.c.l.b16 %v49
    %v127 = vunpack.c.h.b16 %v49
    %v128 = vunpack.c.l.b16 %v50
    %v129 = vunpack.c.h.b16 %v50
    %v130 = vunpack.c.l.b16 %v51
    %v131 = vunpack.c.h.b16 %v51
    %v132 = vunpack.c.l.b16 %v52
    %v133 = vunpack.c.h.b16 %v52
    %v134 = vunpack.c.l.b16 %v53
    %v135 = vunpack.c.h.b16 %v53
    %v136 = vunpack.c.l.b16 %v54
    %v137 = vunpack.c.h.b16 %v54
    %v138 = vunpack.c.l.b16 %v55
    %v139 = vunpack.c.h.b16 %v55
    %v140 = vunpack.c.l.b16 %v56
    %v141 = vunpack.c.h.b16 %v56
    %v142 = vunpack.c.l.b16 %v57
    %v143 = vunpack.c.h.b16 %v57
    %v144 = vunpack.c.l.b16 %v58
    %v145 = vunpack.c.h.b16 %v58
    %v146 = vunpack.c.l.b16 %v59
    %v147 = vunpack.c.h.b16 %v59
    %v148 = vunpack.c.l.b16 %v60
    %v149 = vunpack.c.h.b16 %v60
    %v150 = vunpack.c.l.b16 %v61
    %v151 = vunpack.c.h.b16 %v61
    %v152 = vunpack.c.l.b16 %v62
    %v153 = vunpack.c.h.b16 %v62
    %v154 = vunpack.c.l.b16 %v63
    %v155 = vunpack.c.h.b16 %v63
    %v156 = vunpack.c.l.b16 %v64
    %v157 = vunpack.c.h.b16 %v64
    %v158 = vunpack.c.l.b16 %v65
    %v159 = vunpack.c.h.b16 %v65
    %v160 = vunpack.c.l.b16 %v66
    %v161 = vunpack.c.h.b16 %v66
    %v162 = vunpack.c.l.b16 %v67
    %v163 = vunpack.c.h.b16 %v67
    %v164 = vpack.c.b16 %v104, %v100
    %v165 = vpack.c.b16 %v105, %v101
    %v166 = vpack.c.b16 %v106, %v102
    %v167 = vpack.c.b16 %v107, %v103
    %v168 = vpack.c.b16 %v112, %v108
    %v169 = vpack.c.b16 %v113, %v109
    %v170 = vpack.c.b16 %v114, %v110
    %v171 = vpack.c.b16 %v115, %v111
    %v172 = vpack.c.b16 %v120, %v116
    %v173 = vpack.c.b16 %v121, %v117
    %v174 = vpack.c.b16 %v122, %v118
    %v175 = vpack.c.b16 %v123, %v119
    %v176 = vpack.c.b16 %v128, %v124
    %v177 = vpack.c.b16 %v129, %v125
    %v178 = vpack.c.b16 %v130, %v126
    %v179 = vpack.c.b16 %v131, %v127
    %v180 = vpack.c.b16 %v136, %v132
    %v181 = vpack.c.b16 %v137, %v133
    %v182 = vpack.c.b16 %v138, %v134
    %v183 = vpack.c.b16 %v139, %v135
    %v184 = vpack.c.b16 %v144, %v140
    %v185 = vpack.c.b16 %v145, %v141
    %v186 = vpack.c.b16 %v146, %v142
    %v187 = vpack.c.b16 %v147, %v143
    %v188 = vpack.c.b16 %v152, %v148
    %v189 = vpack.c.b16 %v153, %v149
    %v190 = vpack.c.b16 %v154, %v150
    %v191 = vpack.c.b16 %v155, %v151
    %v192 = vpack.c.b16 %v160, %v156
    %v193 = vpack.c.b16 %v161, %v157
    %v194 = vpack.c.b16 %v162, %v158
    %v195 = vpack.c.b16 %v163, %v159
    %228 = vmatprep.subr.bf16.mxu0 %v165
    %229 = vmatpush1.bf16.msra.mxu0 %v164
    %230 = vmatprep.subr.bf16.mxu0 %v169
    %231 = vmatpush1.bf16.msra.mxu0 %v168
    %232 = vmatprep.subr.bf16.mxu0 %v173
    %233 = vmatpush1.bf16.msra.mxu0 %v172
    %234 = vmatprep.subr.bf16.mxu0 %v177
    %235 = vmatpush1.bf16.msra.mxu0 %v176
    %236 = vmatprep.subr.bf16.mxu0 %v181
    %237 = vmatpush1.bf16.msra.mxu0 %v180
    %238 = vmatprep.subr.bf16.mxu0 %v185
    %239 = vmatpush1.bf16.msra.mxu0 %v184
    %240 = vmatprep.subr.bf16.mxu0 %v189
    %241 = vmatpush1.bf16.msra.mxu0 %v188
    %242 = vmatprep.subr.bf16.mxu0 %v193
    %243 = vmatpush1.bf16.msra.mxu0 %v192
    %244 = vmatprep.subr.bf16.mxu0 0
    %245 = vmatpush1.bf16.msra.mxu0 0
    %246 = vmatprep.subr.bf16.mxu0 0
    %247 = vmatpush1.bf16.msra.mxu0 0
    %248 = vmatprep.subr.bf16.mxu0 0
    %249 = vmatpush1.bf16.msra.mxu0 0
    %250 = vmatprep.subr.bf16.mxu0 0
    %251 = vmatpush1.bf16.msra.mxu0 0
    %252 = vmatprep.subr.bf16.mxu0 0
    %253 = vmatpush1.bf16.msra.mxu0 0
    %254 = vmatprep.subr.bf16.mxu0 0
    %255 = vmatpush1.bf16.msra.mxu0 0
    %256 = vmatprep.subr.bf16.mxu0 0
    %257 = vmatpush1.bf16.msra.mxu0 0
    %258 = vmatprep.subr.bf16.mxu0 0
    %259 = vmatpush1.bf16.msra.mxu0 0
    %260 = vmatprep.mubr.bf16.mxu0 0
    %261 = vmatmul.mubr.bf16.gmra.mrb[0].mxu0 %v35
    %v262 = vpop.f32.mrb[0].mxu0
    %v263 = vadd.f32 0.0, %v262
    %v264 = vpop.f32.mrb[0].mxu0
    %v265 = vadd.f32 0.0, %v264
    %v266 = vpop.f32.mrb[0].mxu0
    %v267 = vpop.f32.mrb[0].mxu0
    %268 = vdwg.mxu0
    %269 = vmatprep.subr.bf16.mxu0 %v167
    %270 = vmatpush1.bf16.msra.mxu0 %v166
    %271 = vmatprep.subr.bf16.mxu0 %v171
    %272 = vmatpush1.bf16.msra.mxu0 %v170
    %273 = vmatprep.subr.bf16.mxu0 %v175
    %274 = vmatpush1.bf16.msra.mxu0 %v174
    %275 = vmatprep.subr.bf16.mxu0 %v179
    %276 = vmatpush1.bf16.msra.mxu0 %v178
    %277 = vmatprep.subr.bf16.mxu0 %v183
    %278 = vmatpush1.bf16.msra.mxu0 %v182
    %279 = vmatprep.subr.bf16.mxu0 %v187
    %280 = vmatpush1.bf16.msra.mxu0 %v186
    %281 = vmatprep.subr.bf16.mxu0 %v191
    %282 = vmatpush1.bf16.msra.mxu0 %v190
    %283 = vmatprep.subr.bf16.mxu0 %v195
    %284 = vmatpush1.bf16.msra.mxu0 %v194
    %285 = vmatprep.subr.bf16.mxu0 0
    %286 = vmatpush1.bf16.msra.mxu0 0
    %287 = vmatprep.subr.bf16.mxu0 0
    %288 = vmatpush1.bf16.msra.mxu0 0
    %289 = vmatprep.subr.bf16.mxu0 0
    %290 = vmatpush1.bf16.msra.mxu0 0
    %291 = vmatprep.subr.bf16.mxu0 0
    %292 = vmatpush1.bf16.msra.mxu0 0
    %293 = vmatprep.subr.bf16.mxu0 0
    %294 = vmatpush1.bf16.msra.mxu0 0
    %295 = vmatprep.subr.bf16.mxu0 0
    %296 = vmatpush1.bf16.msra.mxu0 0
    %297 = vmatprep.subr.bf16.mxu0 0
    %298 = vmatpush1.bf16.msra.mxu0 0
    %299 = vmatprep.subr.bf16.mxu0 0
    %300 = vmatpush1.bf16.msra.mxu0 0
    %301 = vmatprep.mubr.bf16.mxu0 0
    %302 = vmatmul.mubr.bf16.gmra.mrb[0].mxu0 %v35
    %v303 = vpop.f32.mrb[0].mxu0
    %v304 = vadd.f32 0.0, %v303
    %v305 = vpop.f32.mrb[0].mxu0
    %v306 = vadd.f32 0.0, %v305
    %v307 = vpop.f32.mrb[0].mxu0
    %v308 = vpop.f32.mrb[0].mxu0
    %309 = vdwg.mxu0
    %v310 = vadd.f32 %v31, %v263
    %v311 = vadd.f32 %v32, %v265
    %v312 = vadd.f32 %v33, %v304
    %v313 = vadd.f32 %v34, %v306
    %v314 = vxor.u32 %v310, 2147483648
    %v315 = vmul.f32 %v314, 1.442695
    %v316 = vpow.pop %v315
    %v317 = vadd.f32 %v316, 1.0
    %v318 = vrcp.pop %v317
    %v319 = vmul.f32 1.0, %v318
    %v320 = vxor.u32 %v311, 2147483648
    %v321 = vmul.f32 %v320, 1.442695
    %v322 = vpow.pop %v321
    %v323 = vadd.f32 %v322, 1.0
    %v324 = vrcp.pop %v323
    %v325 = vmul.f32 1.0, %v324
    %v326 = vtanh.pop %v312
    %v327 = vxor.u32 %v313, 2147483648
    %v328 = vmul.f32 %v327, 1.442695
    %v329 = vpow.pop %v328
    %v330 = vadd.f32 %v329, 1.0
    %v331 = vrcp.pop %v330
    %v332 = vmul.f32 1.0, %v331
    %v333 = vmul.f32 %v325, %v28
    %v334 = vmul.f32 %v319, %v326
    %v335 = vadd.f32 %v333, %v334
    %v336 = vtanh.pop %v335
    %v337 = vmul.f32 %v332, %v336
    %v338 = vstv %s26
    %vm339 = vcmp.lt.s32.totalorder %v338, %v25
    %v340 = vsel %vm339, 1, 0
    %341 = vset.pattern.permute.xlu0 0
    %342 = vperm.xlu0 %341, %v340
    %v343 = vpop.permute.xlu0 %342
    %vm344 = vcmp.eq.s32.totalorder %v343, 1
    %v345 = vsel %vm344, %v337, %v27
    %v346 = vsel %vm344, %v335, %v28
    %v347 = vsel %vm344, %v337, 0.0
    %v348 = vpack.c.bf16 %v347, %v347
    %349 = vst [vmem:[%s3] sm:$0xf] %v348
    %s350 = scalar_lea.vmem %s0, 16
    %v351 = vld [vmem:[%s350] sm:$0xff]
    %v352 = vld [vmem:[%s350 + $0x8] sm:$0xff]
    %v353 = vunpack.c.l.bf16 %v351
    %v354 = vunpack.c.h.bf16 %v351
    %v355 = vunpack.c.l.bf16 %v352
    %v356 = vunpack.c.h.bf16 %v352
    %v357 = vpack.c.bf16 %v345, %v345
    %v358 = vld [vmem:[%s2] sm:$0xff]
    %v359 = vld [vmem:[%s2 + $0x8] sm:$0xff]
    %v360 = vld [vmem:[%s2 + $0x10] sm:$0xff]
    %v361 = vld [vmem:[%s2 + $0x18] sm:$0xff]
    %v362 = vld [vmem:[%s2 + $0x20] sm:$0xff]
    %v363 = vld [vmem:[%s2 + $0x28] sm:$0xff]
    %v364 = vld [vmem:[%s2 + $0x30] sm:$0xff]
    %v365 = vld [vmem:[%s2 + $0x38] sm:$0xff]
    %v366 = vld [vmem:[%s2 + $0x40] sm:$0xff]
    %v367 = vld [vmem:[%s2 + $0x48] sm:$0xff]
    %v368 = vld [vmem:[%s2 + $0x50] sm:$0xff]
    %v369 = vld [vmem:[%s2 + $0x58] sm:$0xff]
    %v370 = vld [vmem:[%s2 + $0x60] sm:$0xff]
    %v371 = vld [vmem:[%s2 + $0x68] sm:$0xff]
    %v372 = vld [vmem:[%s2 + $0x70] sm:$0xff]
    %v373 = vld [vmem:[%s2 + $0x78] sm:$0xff]
    %v374 = vld [vmem:[%s2 + $0x80] sm:$0xff]
    %v375 = vld [vmem:[%s2 + $0x88] sm:$0xff]
    %v376 = vld [vmem:[%s2 + $0x90] sm:$0xff]
    %v377 = vld [vmem:[%s2 + $0x98] sm:$0xff]
    %v378 = vld [vmem:[%s2 + $0xa0] sm:$0xff]
    %v379 = vld [vmem:[%s2 + $0xa8] sm:$0xff]
    %v380 = vld [vmem:[%s2 + $0xb0] sm:$0xff]
    %v381 = vld [vmem:[%s2 + $0xb8] sm:$0xff]
    %v382 = vld [vmem:[%s2 + $0xc0] sm:$0xff]
    %v383 = vld [vmem:[%s2 + $0xc8] sm:$0xff]
    %v384 = vld [vmem:[%s2 + $0xd0] sm:$0xff]
    %v385 = vld [vmem:[%s2 + $0xd8] sm:$0xff]
    %v386 = vld [vmem:[%s2 + $0xe0] sm:$0xff]
    %v387 = vld [vmem:[%s2 + $0xe8] sm:$0xff]
    %v388 = vld [vmem:[%s2 + $0xf0] sm:$0xff]
    %v389 = vld [vmem:[%s2 + $0xf8] sm:$0xff]
    %v422 = vunpack.c.l.b16 %v358
    %v423 = vunpack.c.h.b16 %v358
    %v424 = vunpack.c.l.b16 %v359
    %v425 = vunpack.c.h.b16 %v359
    %v426 = vunpack.c.l.b16 %v360
    %v427 = vunpack.c.h.b16 %v360
    %v428 = vunpack.c.l.b16 %v361
    %v429 = vunpack.c.h.b16 %v361
    %v430 = vunpack.c.l.b16 %v362
    %v431 = vunpack.c.h.b16 %v362
    %v432 = vunpack.c.l.b16 %v363
    %v433 = vunpack.c.h.b16 %v363
    %v434 = vunpack.c.l.b16 %v364
    %v435 = vunpack.c.h.b16 %v364
    %v436 = vunpack.c.l.b16 %v365
    %v437 = vunpack.c.h.b16 %v365
    %v438 = vunpack.c.l.b16 %v366
    %v439 = vunpack.c.h.b16 %v366
    %v440 = vunpack.c.l.b16 %v367
    %v441 = vunpack.c.h.b16 %v367
    %v442 = vunpack.c.l.b16 %v368
    %v443 = vunpack.c.h.b16 %v368
    %v444 = vunpack.c.l.b16 %v369
    %v445 = vunpack.c.h.b16 %v369
    %v446 = vunpack.c.l.b16 %v370
    %v447 = vunpack.c.h.b16 %v370
    %v448 = vunpack.c.l.b16 %v371
    %v449 = vunpack.c.h.b16 %v371
    %v450 = vunpack.c.l.b16 %v372
    %v451 = vunpack.c.h.b16 %v372
    %v452 = vunpack.c.l.b16 %v373
    %v453 = vunpack.c.h.b16 %v373
    %v454 = vunpack.c.l.b16 %v374
    %v455 = vunpack.c.h.b16 %v374
    %v456 = vunpack.c.l.b16 %v375
    %v457 = vunpack.c.h.b16 %v375
    %v458 = vunpack.c.l.b16 %v376
    %v459 = vunpack.c.h.b16 %v376
    %v460 = vunpack.c.l.b16 %v377
    %v461 = vunpack.c.h.b16 %v377
    %v462 = vunpack.c.l.b16 %v378
    %v463 = vunpack.c.h.b16 %v378
    %v464 = vunpack.c.l.b16 %v379
    %v465 = vunpack.c.h.b16 %v379
    %v466 = vunpack.c.l.b16 %v380
    %v467 = vunpack.c.h.b16 %v380
    %v468 = vunpack.c.l.b16 %v381
    %v469 = vunpack.c.h.b16 %v381
    %v470 = vunpack.c.l.b16 %v382
    %v471 = vunpack.c.h.b16 %v382
    %v472 = vunpack.c.l.b16 %v383
    %v473 = vunpack.c.h.b16 %v383
    %v474 = vunpack.c.l.b16 %v384
    %v475 = vunpack.c.h.b16 %v384
    %v476 = vunpack.c.l.b16 %v385
    %v477 = vunpack.c.h.b16 %v385
    %v478 = vunpack.c.l.b16 %v386
    %v479 = vunpack.c.h.b16 %v386
    %v480 = vunpack.c.l.b16 %v387
    %v481 = vunpack.c.h.b16 %v387
    %v482 = vunpack.c.l.b16 %v388
    %v483 = vunpack.c.h.b16 %v388
    %v484 = vunpack.c.l.b16 %v389
    %v485 = vunpack.c.h.b16 %v389
    %v486 = vpack.c.b16 %v426, %v422
    %v487 = vpack.c.b16 %v427, %v423
    %v488 = vpack.c.b16 %v428, %v424
    %v489 = vpack.c.b16 %v429, %v425
    %v490 = vpack.c.b16 %v434, %v430
    %v491 = vpack.c.b16 %v435, %v431
    %v492 = vpack.c.b16 %v436, %v432
    %v493 = vpack.c.b16 %v437, %v433
    %v494 = vpack.c.b16 %v442, %v438
    %v495 = vpack.c.b16 %v443, %v439
    %v496 = vpack.c.b16 %v444, %v440
    %v497 = vpack.c.b16 %v445, %v441
    %v498 = vpack.c.b16 %v450, %v446
    %v499 = vpack.c.b16 %v451, %v447
    %v500 = vpack.c.b16 %v452, %v448
    %v501 = vpack.c.b16 %v453, %v449
    %v502 = vpack.c.b16 %v458, %v454
    %v503 = vpack.c.b16 %v459, %v455
    %v504 = vpack.c.b16 %v460, %v456
    %v505 = vpack.c.b16 %v461, %v457
    %v506 = vpack.c.b16 %v466, %v462
    %v507 = vpack.c.b16 %v467, %v463
    %v508 = vpack.c.b16 %v468, %v464
    %v509 = vpack.c.b16 %v469, %v465
    %v510 = vpack.c.b16 %v474, %v470
    %v511 = vpack.c.b16 %v475, %v471
    %v512 = vpack.c.b16 %v476, %v472
    %v513 = vpack.c.b16 %v477, %v473
    %v514 = vpack.c.b16 %v482, %v478
    %v515 = vpack.c.b16 %v483, %v479
    %v516 = vpack.c.b16 %v484, %v480
    %v517 = vpack.c.b16 %v485, %v481
    %550 = vmatprep.subr.bf16.mxu0 %v487
    %551 = vmatpush1.bf16.msra.mxu0 %v486
    %552 = vmatprep.subr.bf16.mxu0 %v491
    %553 = vmatpush1.bf16.msra.mxu0 %v490
    %554 = vmatprep.subr.bf16.mxu0 %v495
    %555 = vmatpush1.bf16.msra.mxu0 %v494
    %556 = vmatprep.subr.bf16.mxu0 %v499
    %557 = vmatpush1.bf16.msra.mxu0 %v498
    %558 = vmatprep.subr.bf16.mxu0 %v503
    %559 = vmatpush1.bf16.msra.mxu0 %v502
    %560 = vmatprep.subr.bf16.mxu0 %v507
    %561 = vmatpush1.bf16.msra.mxu0 %v506
    %562 = vmatprep.subr.bf16.mxu0 %v511
    %563 = vmatpush1.bf16.msra.mxu0 %v510
    %564 = vmatprep.subr.bf16.mxu0 %v515
    %565 = vmatpush1.bf16.msra.mxu0 %v514
    %566 = vmatprep.subr.bf16.mxu0 0
    %567 = vmatpush1.bf16.msra.mxu0 0
    %568 = vmatprep.subr.bf16.mxu0 0
    %569 = vmatpush1.bf16.msra.mxu0 0
    %570 = vmatprep.subr.bf16.mxu0 0
    %571 = vmatpush1.bf16.msra.mxu0 0
    %572 = vmatprep.subr.bf16.mxu0 0
    %573 = vmatpush1.bf16.msra.mxu0 0
    %574 = vmatprep.subr.bf16.mxu0 0
    %575 = vmatpush1.bf16.msra.mxu0 0
    %576 = vmatprep.subr.bf16.mxu0 0
    %577 = vmatpush1.bf16.msra.mxu0 0
    %578 = vmatprep.subr.bf16.mxu0 0
    %579 = vmatpush1.bf16.msra.mxu0 0
    %580 = vmatprep.subr.bf16.mxu0 0
    %581 = vmatpush1.bf16.msra.mxu0 0
    %582 = vmatprep.mubr.bf16.mxu0 0
    %583 = vmatmul.mubr.bf16.gmra.mrb[0].mxu0 %v357
    %v584 = vpop.f32.mrb[0].mxu0
    %v585 = vadd.f32 0.0, %v584
    %v586 = vpop.f32.mrb[0].mxu0
    %v587 = vadd.f32 0.0, %v586
    %v588 = vpop.f32.mrb[0].mxu0
    %v589 = vpop.f32.mrb[0].mxu0
    %590 = vdwg.mxu0
    %591 = vmatprep.subr.bf16.mxu0 %v489
    %592 = vmatpush1.bf16.msra.mxu0 %v488
    %593 = vmatprep.subr.bf16.mxu0 %v493
    %594 = vmatpush1.bf16.msra.mxu0 %v492
    %595 = vmatprep.subr.bf16.mxu0 %v497
    %596 = vmatpush1.bf16.msra.mxu0 %v496
    %597 = vmatprep.subr.bf16.mxu0 %v501
    %598 = vmatpush1.bf16.msra.mxu0 %v500
    %599 = vmatprep.subr.bf16.mxu0 %v505
    %600 = vmatpush1.bf16.msra.mxu0 %v504
    %601 = vmatprep.subr.bf16.mxu0 %v509
    %602 = vmatpush1.bf16.msra.mxu0 %v508
    %603 = vmatprep.subr.bf16.mxu0 %v513
    %604 = vmatpush1.bf16.msra.mxu0 %v512
    %605 = vmatprep.subr.bf16.mxu0 %v517
    %606 = vmatpush1.bf16.msra.mxu0 %v516
    %607 = vmatprep.subr.bf16.mxu0 0
    %608 = vmatpush1.bf16.msra.mxu0 0
    %609 = vmatprep.subr.bf16.mxu0 0
    %610 = vmatpush1.bf16.msra.mxu0 0
    %611 = vmatprep.subr.bf16.mxu0 0
    %612 = vmatpush1.bf16.msra.mxu0 0
    %613 = vmatprep.subr.bf16.mxu0 0
    %614 = vmatpush1.bf16.msra.mxu0 0
    %615 = vmatprep.subr.bf16.mxu0 0
    %616 = vmatpush1.bf16.msra.mxu0 0
    %617 = vmatprep.subr.bf16.mxu0 0
    %618 = vmatpush1.bf16.msra.mxu0 0
    %619 = vmatprep.subr.bf16.mxu0 0
    %620 = vmatpush1.bf16.msra.mxu0 0
    %621 = vmatprep.subr.bf16.mxu0 0
    %622 = vmatpush1.bf16.msra.mxu0 0
    %623 = vmatprep.mubr.bf16.mxu0 0
    %624 = vmatmul.mubr.bf16.gmra.mrb[0].mxu0 %v357
    %v625 = vpop.f32.mrb[0].mxu0
    %v626 = vadd.f32 0.0, %v625
    %v627 = vpop.f32.mrb[0].mxu0
    %v628 = vadd.f32 0.0, %v627
    %v629 = vpop.f32.mrb[0].mxu0
    %v630 = vpop.f32.mrb[0].mxu0
    %631 = vdwg.mxu0
    %v632 = vadd.f32 %v353, %v585
    %v633 = vadd.f32 %v354, %v587
    %v634 = vadd.f32 %v355, %v626
    %v635 = vadd.f32 %v356, %v628
    %v636 = vxor.u32 %v632, 2147483648
    %v637 = vmul.f32 %v636, 1.442695
    %v638 = vpow.pop %v637
    %v639 = vadd.f32 %v638, 1.0
    %v640 = vrcp.pop %v639
    %v641 = vmul.f32 1.0, %v640
    %v642 = vxor.u32 %v633, 2147483648
    %v643 = vmul.f32 %v642, 1.442695
    %v644 = vpow.pop %v643
    %v645 = vadd.f32 %v644, 1.0
    %v646 = vrcp.pop %v645
    %v647 = vmul.f32 1.0, %v646
    %v648 = vtanh.pop %v634
    %v649 = vxor.u32 %v635, 2147483648
    %v650 = vmul.f32 %v649, 1.442695
    %v651 = vpow.pop %v650
    %v652 = vadd.f32 %v651, 1.0
    %v653 = vrcp.pop %v652
    %v654 = vmul.f32 1.0, %v653
    %v655 = vmul.f32 %v647, %v346
    %v656 = vmul.f32 %v641, %v648
    %v657 = vadd.f32 %v655, %v656
    %v658 = vtanh.pop %v657
    %v659 = vmul.f32 %v654, %v658
    %s660 = sadd.s32 %s26, 1
    %v661 = vstv %s660
    %vm662 = vcmp.lt.s32.totalorder %v661, %v25
    %v663 = vsel %vm662, 1, 0
    %664 = vset.pattern.permute.xlu0 0
    %665 = vperm.xlu0 %664, %v663
    %v666 = vpop.permute.xlu0 %665
    %vm667 = vcmp.eq.s32.totalorder %v666, 1
    %v668 = vsel %vm667, %v659, %v345
    %v669 = vsel %vm667, %v657, %v346
    %v670 = vsel %vm667, %v659, 0.0
    %v671 = vpack.c.bf16 %v670, %v670
    %s672 = scalar_lea.vmem %s3, 4
    %673 = vst [vmem:[%s672] sm:$0xf] %v671
    %s674 = scalar_lea.vmem %s0, 32
    %v675 = vld [vmem:[%s674] sm:$0xff]
    %v676 = vld [vmem:[%s674 + $0x8] sm:$0xff]
    %v677 = vunpack.c.l.bf16 %v675
    %v678 = vunpack.c.h.bf16 %v675
    %v679 = vunpack.c.l.bf16 %v676
    %v680 = vunpack.c.h.bf16 %v676
    %v681 = vpack.c.bf16 %v668, %v668
    %v682 = vld [vmem:[%s2] sm:$0xff]
    %v683 = vld [vmem:[%s2 + $0x8] sm:$0xff]
    %v684 = vld [vmem:[%s2 + $0x10] sm:$0xff]
    %v685 = vld [vmem:[%s2 + $0x18] sm:$0xff]
    %v686 = vld [vmem:[%s2 + $0x20] sm:$0xff]
    %v687 = vld [vmem:[%s2 + $0x28] sm:$0xff]
    %v688 = vld [vmem:[%s2 + $0x30] sm:$0xff]
    %v689 = vld [vmem:[%s2 + $0x38] sm:$0xff]
    %v690 = vld [vmem:[%s2 + $0x40] sm:$0xff]
    %v691 = vld [vmem:[%s2 + $0x48] sm:$0xff]
    %v692 = vld [vmem:[%s2 + $0x50] sm:$0xff]
    %v693 = vld [vmem:[%s2 + $0x58] sm:$0xff]
    %v694 = vld [vmem:[%s2 + $0x60] sm:$0xff]
    %v695 = vld [vmem:[%s2 + $0x68] sm:$0xff]
    %v696 = vld [vmem:[%s2 + $0x70] sm:$0xff]
    %v697 = vld [vmem:[%s2 + $0x78] sm:$0xff]
    %v698 = vld [vmem:[%s2 + $0x80] sm:$0xff]
    %v699 = vld [vmem:[%s2 + $0x88] sm:$0xff]
    %v700 = vld [vmem:[%s2 + $0x90] sm:$0xff]
    %v701 = vld [vmem:[%s2 + $0x98] sm:$0xff]
    %v702 = vld [vmem:[%s2 + $0xa0] sm:$0xff]
    %v703 = vld [vmem:[%s2 + $0xa8] sm:$0xff]
    %v704 = vld [vmem:[%s2 + $0xb0] sm:$0xff]
    %v705 = vld [vmem:[%s2 + $0xb8] sm:$0xff]
    %v706 = vld [vmem:[%s2 + $0xc0] sm:$0xff]
    %v707 = vld [vmem:[%s2 + $0xc8] sm:$0xff]
    %v708 = vld [vmem:[%s2 + $0xd0] sm:$0xff]
    %v709 = vld [vmem:[%s2 + $0xd8] sm:$0xff]
    %v710 = vld [vmem:[%s2 + $0xe0] sm:$0xff]
    %v711 = vld [vmem:[%s2 + $0xe8] sm:$0xff]
    %v712 = vld [vmem:[%s2 + $0xf0] sm:$0xff]
    %v713 = vld [vmem:[%s2 + $0xf8] sm:$0xff]
    %v746 = vunpack.c.l.b16 %v682
    %v747 = vunpack.c.h.b16 %v682
    %v748 = vunpack.c.l.b16 %v683
    %v749 = vunpack.c.h.b16 %v683
    %v750 = vunpack.c.l.b16 %v684
    %v751 = vunpack.c.h.b16 %v684
    %v752 = vunpack.c.l.b16 %v685
    %v753 = vunpack.c.h.b16 %v685
    %v754 = vunpack.c.l.b16 %v686
    %v755 = vunpack.c.h.b16 %v686
    %v756 = vunpack.c.l.b16 %v687
    %v757 = vunpack.c.h.b16 %v687
    %v758 = vunpack.c.l.b16 %v688
    %v759 = vunpack.c.h.b16 %v688
    %v760 = vunpack.c.l.b16 %v689
    %v761 = vunpack.c.h.b16 %v689
    %v762 = vunpack.c.l.b16 %v690
    %v763 = vunpack.c.h.b16 %v690
    %v764 = vunpack.c.l.b16 %v691
    %v765 = vunpack.c.h.b16 %v691
    %v766 = vunpack.c.l.b16 %v692
    %v767 = vunpack.c.h.b16 %v692
    %v768 = vunpack.c.l.b16 %v693
    %v769 = vunpack.c.h.b16 %v693
    %v770 = vunpack.c.l.b16 %v694
    %v771 = vunpack.c.h.b16 %v694
    %v772 = vunpack.c.l.b16 %v695
    %v773 = vunpack.c.h.b16 %v695
    %v774 = vunpack.c.l.b16 %v696
    %v775 = vunpack.c.h.b16 %v696
    %v776 = vunpack.c.l.b16 %v697
    %v777 = vunpack.c.h.b16 %v697
    %v778 = vunpack.c.l.b16 %v698
    %v779 = vunpack.c.h.b16 %v698
    %v780 = vunpack.c.l.b16 %v699
    %v781 = vunpack.c.h.b16 %v699
    %v782 = vunpack.c.l.b16 %v700
    %v783 = vunpack.c.h.b16 %v700
    %v784 = vunpack.c.l.b16 %v701
    %v785 = vunpack.c.h.b16 %v701
    %v786 = vunpack.c.l.b16 %v702
    %v787 = vunpack.c.h.b16 %v702
    %v788 = vunpack.c.l.b16 %v703
    %v789 = vunpack.c.h.b16 %v703
    %v790 = vunpack.c.l.b16 %v704
    %v791 = vunpack.c.h.b16 %v704
    %v792 = vunpack.c.l.b16 %v705
    %v793 = vunpack.c.h.b16 %v705
    %v794 = vunpack.c.l.b16 %v706
    %v795 = vunpack.c.h.b16 %v706
    %v796 = vunpack.c.l.b16 %v707
    %v797 = vunpack.c.h.b16 %v707
    %v798 = vunpack.c.l.b16 %v708
    %v799 = vunpack.c.h.b16 %v708
    %v800 = vunpack.c.l.b16 %v709
    %v801 = vunpack.c.h.b16 %v709
    %v802 = vunpack.c.l.b16 %v710
    %v803 = vunpack.c.h.b16 %v710
    %v804 = vunpack.c.l.b16 %v711
    %v805 = vunpack.c.h.b16 %v711
    %v806 = vunpack.c.l.b16 %v712
    %v807 = vunpack.c.h.b16 %v712
    %v808 = vunpack.c.l.b16 %v713
    %v809 = vunpack.c.h.b16 %v713
    %v810 = vpack.c.b16 %v750, %v746
    %v811 = vpack.c.b16 %v751, %v747
    %v812 = vpack.c.b16 %v752, %v748
    %v813 = vpack.c.b16 %v753, %v749
    %v814 = vpack.c.b16 %v758, %v754
    %v815 = vpack.c.b16 %v759, %v755
    %v816 = vpack.c.b16 %v760, %v756
    %v817 = vpack.c.b16 %v761, %v757
    %v818 = vpack.c.b16 %v766, %v762
    %v819 = vpack.c.b16 %v767, %v763
    %v820 = vpack.c.b16 %v768, %v764
    %v821 = vpack.c.b16 %v769, %v765
    %v822 = vpack.c.b16 %v774, %v770
    %v823 = vpack.c.b16 %v775, %v771
    %v824 = vpack.c.b16 %v776, %v772
    %v825 = vpack.c.b16 %v777, %v773
    %v826 = vpack.c.b16 %v782, %v778
    %v827 = vpack.c.b16 %v783, %v779
    %v828 = vpack.c.b16 %v784, %v780
    %v829 = vpack.c.b16 %v785, %v781
    %v830 = vpack.c.b16 %v790, %v786
    %v831 = vpack.c.b16 %v791, %v787
    %v832 = vpack.c.b16 %v792, %v788
    %v833 = vpack.c.b16 %v793, %v789
    %v834 = vpack.c.b16 %v798, %v794
    %v835 = vpack.c.b16 %v799, %v795
    %v836 = vpack.c.b16 %v800, %v796
    %v837 = vpack.c.b16 %v801, %v797
    %v838 = vpack.c.b16 %v806, %v802
    %v839 = vpack.c.b16 %v807, %v803
    %v840 = vpack.c.b16 %v808, %v804
    %v841 = vpack.c.b16 %v809, %v805
    %874 = vmatprep.subr.bf16.mxu0 %v811
    %875 = vmatpush1.bf16.msra.mxu0 %v810
    %876 = vmatprep.subr.bf16.mxu0 %v815
    %877 = vmatpush1.bf16.msra.mxu0 %v814
    %878 = vmatprep.subr.bf16.mxu0 %v819
    %879 = vmatpush1.bf16.msra.mxu0 %v818
    %880 = vmatprep.subr.bf16.mxu0 %v823
    %881 = vmatpush1.bf16.msra.mxu0 %v822
    %882 = vmatprep.subr.bf16.mxu0 %v827
    %883 = vmatpush1.bf16.msra.mxu0 %v826
    %884 = vmatprep.subr.bf16.mxu0 %v831
    %885 = vmatpush1.bf16.msra.mxu0 %v830
    %886 = vmatprep.subr.bf16.mxu0 %v835
    %887 = vmatpush1.bf16.msra.mxu0 %v834
    %888 = vmatprep.subr.bf16.mxu0 %v839
    %889 = vmatpush1.bf16.msra.mxu0 %v838
    %890 = vmatprep.subr.bf16.mxu0 0
    %891 = vmatpush1.bf16.msra.mxu0 0
    %892 = vmatprep.subr.bf16.mxu0 0
    %893 = vmatpush1.bf16.msra.mxu0 0
    %894 = vmatprep.subr.bf16.mxu0 0
    %895 = vmatpush1.bf16.msra.mxu0 0
    %896 = vmatprep.subr.bf16.mxu0 0
    %897 = vmatpush1.bf16.msra.mxu0 0
    %898 = vmatprep.subr.bf16.mxu0 0
    %899 = vmatpush1.bf16.msra.mxu0 0
    %900 = vmatprep.subr.bf16.mxu0 0
    %901 = vmatpush1.bf16.msra.mxu0 0
    %902 = vmatprep.subr.bf16.mxu0 0
    %903 = vmatpush1.bf16.msra.mxu0 0
    %904 = vmatprep.subr.bf16.mxu0 0
    %905 = vmatpush1.bf16.msra.mxu0 0
    %906 = vmatprep.mubr.bf16.mxu0 0
    %907 = vmatmul.mubr.bf16.gmra.mrb[0].mxu0 %v681
    %v908 = vpop.f32.mrb[0].mxu0
    %v909 = vadd.f32 0.0, %v908
    %v910 = vpop.f32.mrb[0].mxu0
    %v911 = vadd.f32 0.0, %v910
    %v912 = vpop.f32.mrb[0].mxu0
    %v913 = vpop.f32.mrb[0].mxu0
    %914 = vdwg.mxu0
    %915 = vmatprep.subr.bf16.mxu0 %v813
    %916 = vmatpush1.bf16.msra.mxu0 %v812
    %917 = vmatprep.subr.bf16.mxu0 %v817
    %918 = vmatpush1.bf16.msra.mxu0 %v816
    %919 = vmatprep.subr.bf16.mxu0 %v821
    %920 = vmatpush1.bf16.msra.mxu0 %v820
    %921 = vmatprep.subr.bf16.mxu0 %v825
    %922 = vmatpush1.bf16.msra.mxu0 %v824
    %923 = vmatprep.subr.bf16.mxu0 %v829
    %924 = vmatpush1.bf16.msra.mxu0 %v828
    %925 = vmatprep.subr.bf16.mxu0 %v833
    %926 = vmatpush1.bf16.msra.mxu0 %v832
    %927 = vmatprep.subr.bf16.mxu0 %v837
    %928 = vmatpush1.bf16.msra.mxu0 %v836
    %929 = vmatprep.subr.bf16.mxu0 %v841
    %930 = vmatpush1.bf16.msra.mxu0 %v840
    %931 = vmatprep.subr.bf16.mxu0 0
    %932 = vmatpush1.bf16.msra.mxu0 0
    %933 = vmatprep.subr.bf16.mxu0 0
    %934 = vmatpush1.bf16.msra.mxu0 0
    %935 = vmatprep.subr.bf16.mxu0 0
    %936 = vmatpush1.bf16.msra.mxu0 0
    %937 = vmatprep.subr.bf16.mxu0 0
    %938 = vmatpush1.bf16.msra.mxu0 0
    %939 = vmatprep.subr.bf16.mxu0 0
    %940 = vmatpush1.bf16.msra.mxu0 0
    %941 = vmatprep.subr.bf16.mxu0 0
    %942 = vmatpush1.bf16.msra.mxu0 0
    %943 = vmatprep.subr.bf16.mxu0 0
    %944 = vmatpush1.bf16.msra.mxu0 0
    %945 = vmatprep.subr.bf16.mxu0 0
    %946 = vmatpush1.bf16.msra.mxu0 0
    %947 = vmatprep.mubr.bf16.mxu0 0
    %948 = vmatmul.mubr.bf16.gmra.mrb[0].mxu0 %v681
    %v949 = vpop.f32.mrb[0].mxu0
    %v950 = vadd.f32 0.0, %v949
    %v951 = vpop.f32.mrb[0].mxu0
    %v952 = vadd.f32 0.0, %v951
    %v953 = vpop.f32.mrb[0].mxu0
    %v954 = vpop.f32.mrb[0].mxu0
    %955 = vdwg.mxu0
    %v956 = vadd.f32 %v677, %v909
    %v957 = vadd.f32 %v678, %v911
    %v958 = vadd.f32 %v679, %v950
    %v959 = vadd.f32 %v680, %v952
    %v960 = vxor.u32 %v956, 2147483648
    %v961 = vmul.f32 %v960, 1.442695
    %v962 = vpow.pop %v961
    %v963 = vadd.f32 %v962, 1.0
    %v964 = vrcp.pop %v963
    %v965 = vmul.f32 1.0, %v964
    %v966 = vxor.u32 %v957, 2147483648
    %v967 = vmul.f32 %v966, 1.442695
    %v968 = vpow.pop %v967
    %v969 = vadd.f32 %v968, 1.0
    %v970 = vrcp.pop %v969
    %v971 = vmul.f32 1.0, %v970
    %v972 = vtanh.pop %v958
    %v973 = vxor.u32 %v959, 2147483648
    %v974 = vmul.f32 %v973, 1.442695
    %v975 = vpow.pop %v974
    %v976 = vadd.f32 %v975, 1.0
    %v977 = vrcp.pop %v976
    %v978 = vmul.f32 1.0, %v977
    %v979 = vmul.f32 %v971, %v669
    %v980 = vmul.f32 %v965, %v972
    %v981 = vadd.f32 %v979, %v980
    %v982 = vtanh.pop %v981
    %v983 = vmul.f32 %v978, %v982
    %s984 = sadd.s32 %s26, 2
    %v985 = vstv %s984
    %vm986 = vcmp.lt.s32.totalorder %v985, %v25
    %v987 = vsel %vm986, 1, 0
    %988 = vset.pattern.permute.xlu0 0
    %989 = vperm.xlu0 %988, %v987
    %v990 = vpop.permute.xlu0 %989
    %vm991 = vcmp.eq.s32.totalorder %v990, 1
    %v992 = vsel %vm991, %v983, %v668
    %v993 = vsel %vm991, %v981, %v669
    %v994 = vsel %vm991, %v983, 0.0
    %v995 = vpack.c.bf16 %v994, %v994
    %s996 = scalar_lea.vmem %s3, 8
    %997 = vst [vmem:[%s996] sm:$0xf] %v995
    %s998 = scalar_lea.vmem %s0, 48
    %v999 = vld [vmem:[%s998] sm:$0xff]
    %v1000 = vld [vmem:[%s998 + $0x8] sm:$0xff]
    %v1001 = vunpack.c.l.bf16 %v999
    %v1002 = vunpack.c.h.bf16 %v999
    %v1003 = vunpack.c.l.bf16 %v1000
    %v1004 = vunpack.c.h.bf16 %v1000
    %v1005 = vpack.c.bf16 %v992, %v992
    %v1006 = vld [vmem:[%s2] sm:$0xff]
    %v1007 = vld [vmem:[%s2 + $0x8] sm:$0xff]
    %v1008 = vld [vmem:[%s2 + $0x10] sm:$0xff]
    %v1009 = vld [vmem:[%s2 + $0x18] sm:$0xff]
    %v1010 = vld [vmem:[%s2 + $0x20] sm:$0xff]
    %v1011 = vld [vmem:[%s2 + $0x28] sm:$0xff]
    %v1012 = vld [vmem:[%s2 + $0x30] sm:$0xff]
    %v1013 = vld [vmem:[%s2 + $0x38] sm:$0xff]
    %v1014 = vld [vmem:[%s2 + $0x40] sm:$0xff]
    %v1015 = vld [vmem:[%s2 + $0x48] sm:$0xff]
    %v1016 = vld [vmem:[%s2 + $0x50] sm:$0xff]
    %v1017 = vld [vmem:[%s2 + $0x58] sm:$0xff]
    %v1018 = vld [vmem:[%s2 + $0x60] sm:$0xff]
    %v1019 = vld [vmem:[%s2 + $0x68] sm:$0xff]
    %v1020 = vld [vmem:[%s2 + $0x70] sm:$0xff]
    %v1021 = vld [vmem:[%s2 + $0x78] sm:$0xff]
    %v1022 = vld [vmem:[%s2 + $0x80] sm:$0xff]
    %v1023 = vld [vmem:[%s2 + $0x88] sm:$0xff]
    %v1024 = vld [vmem:[%s2 + $0x90] sm:$0xff]
    %v1025 = vld [vmem:[%s2 + $0x98] sm:$0xff]
    %v1026 = vld [vmem:[%s2 + $0xa0] sm:$0xff]
    %v1027 = vld [vmem:[%s2 + $0xa8] sm:$0xff]
    %v1028 = vld [vmem:[%s2 + $0xb0] sm:$0xff]
    %v1029 = vld [vmem:[%s2 + $0xb8] sm:$0xff]
    %v1030 = vld [vmem:[%s2 + $0xc0] sm:$0xff]
    %v1031 = vld [vmem:[%s2 + $0xc8] sm:$0xff]
    %v1032 = vld [vmem:[%s2 + $0xd0] sm:$0xff]
    %v1033 = vld [vmem:[%s2 + $0xd8] sm:$0xff]
    %v1034 = vld [vmem:[%s2 + $0xe0] sm:$0xff]
    %v1035 = vld [vmem:[%s2 + $0xe8] sm:$0xff]
    %v1036 = vld [vmem:[%s2 + $0xf0] sm:$0xff]
    %v1037 = vld [vmem:[%s2 + $0xf8] sm:$0xff]
    %v1070 = vunpack.c.l.b16 %v1006
    %v1071 = vunpack.c.h.b16 %v1006
    %v1072 = vunpack.c.l.b16 %v1007
    %v1073 = vunpack.c.h.b16 %v1007
    %v1074 = vunpack.c.l.b16 %v1008
    %v1075 = vunpack.c.h.b16 %v1008
    %v1076 = vunpack.c.l.b16 %v1009
    %v1077 = vunpack.c.h.b16 %v1009
    %v1078 = vunpack.c.l.b16 %v1010
    %v1079 = vunpack.c.h.b16 %v1010
    %v1080 = vunpack.c.l.b16 %v1011
    %v1081 = vunpack.c.h.b16 %v1011
    %v1082 = vunpack.c.l.b16 %v1012
    %v1083 = vunpack.c.h.b16 %v1012
    %v1084 = vunpack.c.l.b16 %v1013
    %v1085 = vunpack.c.h.b16 %v1013
    %v1086 = vunpack.c.l.b16 %v1014
    %v1087 = vunpack.c.h.b16 %v1014
    %v1088 = vunpack.c.l.b16 %v1015
    %v1089 = vunpack.c.h.b16 %v1015
    %v1090 = vunpack.c.l.b16 %v1016
    %v1091 = vunpack.c.h.b16 %v1016
    %v1092 = vunpack.c.l.b16 %v1017
    %v1093 = vunpack.c.h.b16 %v1017
    %v1094 = vunpack.c.l.b16 %v1018
    %v1095 = vunpack.c.h.b16 %v1018
    %v1096 = vunpack.c.l.b16 %v1019
    %v1097 = vunpack.c.h.b16 %v1019
    %v1098 = vunpack.c.l.b16 %v1020
    %v1099 = vunpack.c.h.b16 %v1020
    %v1100 = vunpack.c.l.b16 %v1021
    %v1101 = vunpack.c.h.b16 %v1021
    %v1102 = vunpack.c.l.b16 %v1022
    %v1103 = vunpack.c.h.b16 %v1022
    %v1104 = vunpack.c.l.b16 %v1023
    %v1105 = vunpack.c.h.b16 %v1023
    %v1106 = vunpack.c.l.b16 %v1024
    %v1107 = vunpack.c.h.b16 %v1024
    %v1108 = vunpack.c.l.b16 %v1025
    %v1109 = vunpack.c.h.b16 %v1025
    %v1110 = vunpack.c.l.b16 %v1026
    %v1111 = vunpack.c.h.b16 %v1026
    %v1112 = vunpack.c.l.b16 %v1027
    %v1113 = vunpack.c.h.b16 %v1027
    %v1114 = vunpack.c.l.b16 %v1028
    %v1115 = vunpack.c.h.b16 %v1028
    %v1116 = vunpack.c.l.b16 %v1029
    %v1117 = vunpack.c.h.b16 %v1029
    %v1118 = vunpack.c.l.b16 %v1030
    %v1119 = vunpack.c.h.b16 %v1030
    %v1120 = vunpack.c.l.b16 %v1031
    %v1121 = vunpack.c.h.b16 %v1031
    %v1122 = vunpack.c.l.b16 %v1032
    %v1123 = vunpack.c.h.b16 %v1032
    %v1124 = vunpack.c.l.b16 %v1033
    %v1125 = vunpack.c.h.b16 %v1033
    %v1126 = vunpack.c.l.b16 %v1034
    %v1127 = vunpack.c.h.b16 %v1034
    %v1128 = vunpack.c.l.b16 %v1035
    %v1129 = vunpack.c.h.b16 %v1035
    %v1130 = vunpack.c.l.b16 %v1036
    %v1131 = vunpack.c.h.b16 %v1036
    %v1132 = vunpack.c.l.b16 %v1037
    %v1133 = vunpack.c.h.b16 %v1037
    %v1134 = vpack.c.b16 %v1074, %v1070
    %v1135 = vpack.c.b16 %v1075, %v1071
    %v1136 = vpack.c.b16 %v1076, %v1072
    %v1137 = vpack.c.b16 %v1077, %v1073
    %v1138 = vpack.c.b16 %v1082, %v1078
    %v1139 = vpack.c.b16 %v1083, %v1079
    %v1140 = vpack.c.b16 %v1084, %v1080
    %v1141 = vpack.c.b16 %v1085, %v1081
    %v1142 = vpack.c.b16 %v1090, %v1086
    %v1143 = vpack.c.b16 %v1091, %v1087
    %v1144 = vpack.c.b16 %v1092, %v1088
    %v1145 = vpack.c.b16 %v1093, %v1089
    %v1146 = vpack.c.b16 %v1098, %v1094
    %v1147 = vpack.c.b16 %v1099, %v1095
    %v1148 = vpack.c.b16 %v1100, %v1096
    %v1149 = vpack.c.b16 %v1101, %v1097
    %v1150 = vpack.c.b16 %v1106, %v1102
    %v1151 = vpack.c.b16 %v1107, %v1103
    %v1152 = vpack.c.b16 %v1108, %v1104
    %v1153 = vpack.c.b16 %v1109, %v1105
    %v1154 = vpack.c.b16 %v1114, %v1110
    %v1155 = vpack.c.b16 %v1115, %v1111
    %v1156 = vpack.c.b16 %v1116, %v1112
    %v1157 = vpack.c.b16 %v1117, %v1113
    %v1158 = vpack.c.b16 %v1122, %v1118
    %v1159 = vpack.c.b16 %v1123, %v1119
    %v1160 = vpack.c.b16 %v1124, %v1120
    %v1161 = vpack.c.b16 %v1125, %v1121
    %v1162 = vpack.c.b16 %v1130, %v1126
    %v1163 = vpack.c.b16 %v1131, %v1127
    %v1164 = vpack.c.b16 %v1132, %v1128
    %v1165 = vpack.c.b16 %v1133, %v1129
    %1198 = vmatprep.subr.bf16.mxu0 %v1135
    %1199 = vmatpush1.bf16.msra.mxu0 %v1134
    %1200 = vmatprep.subr.bf16.mxu0 %v1139
    %1201 = vmatpush1.bf16.msra.mxu0 %v1138
    %1202 = vmatprep.subr.bf16.mxu0 %v1143
    %1203 = vmatpush1.bf16.msra.mxu0 %v1142
    %1204 = vmatprep.subr.bf16.mxu0 %v1147
    %1205 = vmatpush1.bf16.msra.mxu0 %v1146
    %1206 = vmatprep.subr.bf16.mxu0 %v1151
    %1207 = vmatpush1.bf16.msra.mxu0 %v1150
    %1208 = vmatprep.subr.bf16.mxu0 %v1155
    %1209 = vmatpush1.bf16.msra.mxu0 %v1154
    %1210 = vmatprep.subr.bf16.mxu0 %v1159
    %1211 = vmatpush1.bf16.msra.mxu0 %v1158
    %1212 = vmatprep.subr.bf16.mxu0 %v1163
    %1213 = vmatpush1.bf16.msra.mxu0 %v1162
    %1214 = vmatprep.subr.bf16.mxu0 0
    %1215 = vmatpush1.bf16.msra.mxu0 0
    %1216 = vmatprep.subr.bf16.mxu0 0
    %1217 = vmatpush1.bf16.msra.mxu0 0
    %1218 = vmatprep.subr.bf16.mxu0 0
    %1219 = vmatpush1.bf16.msra.mxu0 0
    %1220 = vmatprep.subr.bf16.mxu0 0
    %1221 = vmatpush1.bf16.msra.mxu0 0
    %1222 = vmatprep.subr.bf16.mxu0 0
    %1223 = vmatpush1.bf16.msra.mxu0 0
    %1224 = vmatprep.subr.bf16.mxu0 0
    %1225 = vmatpush1.bf16.msra.mxu0 0
    %1226 = vmatprep.subr.bf16.mxu0 0
    %1227 = vmatpush1.bf16.msra.mxu0 0
    %1228 = vmatprep.subr.bf16.mxu0 0
    %1229 = vmatpush1.bf16.msra.mxu0 0
    %1230 = vmatprep.mubr.bf16.mxu0 0
    %1231 = vmatmul.mubr.bf16.gmra.mrb[0].mxu0 %v1005
    %v1232 = vpop.f32.mrb[0].mxu0
    %v1233 = vadd.f32 0.0, %v1232
    %v1234 = vpop.f32.mrb[0].mxu0
    %v1235 = vadd.f32 0.0, %v1234
    %v1236 = vpop.f32.mrb[0].mxu0
    %v1237 = vpop.f32.mrb[0].mxu0
    %1238 = vdwg.mxu0
    %1239 = vmatprep.subr.bf16.mxu0 %v1137
    %1240 = vmatpush1.bf16.msra.mxu0 %v1136
    %1241 = vmatprep.subr.bf16.mxu0 %v1141
    %1242 = vmatpush1.bf16.msra.mxu0 %v1140
    %1243 = vmatprep.subr.bf16.mxu0 %v1145
    %1244 = vmatpush1.bf16.msra.mxu0 %v1144
    %1245 = vmatprep.subr.bf16.mxu0 %v1149
    %1246 = vmatpush1.bf16.msra.mxu0 %v1148
    %1247 = vmatprep.subr.bf16.mxu0 %v1153
    %1248 = vmatpush1.bf16.msra.mxu0 %v1152
    %1249 = vmatprep.subr.bf16.mxu0 %v1157
    %1250 = vmatpush1.bf16.msra.mxu0 %v1156
    %1251 = vmatprep.subr.bf16.mxu0 %v1161
    %1252 = vmatpush1.bf16.msra.mxu0 %v1160
    %1253 = vmatprep.subr.bf16.mxu0 %v1165
    %1254 = vmatpush1.bf16.msra.mxu0 %v1164
    %1255 = vmatprep.subr.bf16.mxu0 0
    %1256 = vmatpush1.bf16.msra.mxu0 0
    %1257 = vmatprep.subr.bf16.mxu0 0
    %1258 = vmatpush1.bf16.msra.mxu0 0
    %1259 = vmatprep.subr.bf16.mxu0 0
    %1260 = vmatpush1.bf16.msra.mxu0 0
    %1261 = vmatprep.subr.bf16.mxu0 0
    %1262 = vmatpush1.bf16.msra.mxu0 0
    %1263 = vmatprep.subr.bf16.mxu0 0
    %1264 = vmatpush1.bf16.msra.mxu0 0
    %1265 = vmatprep.subr.bf16.mxu0 0
    %1266 = vmatpush1.bf16.msra.mxu0 0
    %1267 = vmatprep.subr.bf16.mxu0 0
    %1268 = vmatpush1.bf16.msra.mxu0 0
    %1269 = vmatprep.subr.bf16.mxu0 0
    %1270 = vmatpush1.bf16.msra.mxu0 0
    %1271 = vmatprep.mubr.bf16.mxu0 0
    %1272 = vmatmul.mubr.bf16.gmra.mrb[0].mxu0 %v1005
    %v1273 = vpop.f32.mrb[0].mxu0
    %v1274 = vadd.f32 0.0, %v1273
    %v1275 = vpop.f32.mrb[0].mxu0
    %v1276 = vadd.f32 0.0, %v1275
    %v1277 = vpop.f32.mrb[0].mxu0
    %v1278 = vpop.f32.mrb[0].mxu0
    %1279 = vdwg.mxu0
    %v1280 = vadd.f32 %v1001, %v1233
    %v1281 = vadd.f32 %v1002, %v1235
    %v1282 = vadd.f32 %v1003, %v1274
    %v1283 = vadd.f32 %v1004, %v1276
    %v1284 = vxor.u32 %v1280, 2147483648
    %v1285 = vmul.f32 %v1284, 1.442695
    %v1286 = vpow.pop %v1285
    %v1287 = vadd.f32 %v1286, 1.0
    %v1288 = vrcp.pop %v1287
    %v1289 = vmul.f32 1.0, %v1288
    %v1290 = vxor.u32 %v1281, 2147483648
    %v1291 = vmul.f32 %v1290, 1.442695
    %v1292 = vpow.pop %v1291
    %v1293 = vadd.f32 %v1292, 1.0
    %v1294 = vrcp.pop %v1293
    %v1295 = vmul.f32 1.0, %v1294
    %v1296 = vtanh.pop %v1282
    %v1297 = vxor.u32 %v1283, 2147483648
    %v1298 = vmul.f32 %v1297, 1.442695
    %v1299 = vpow.pop %v1298
    %v1300 = vadd.f32 %v1299, 1.0
    %v1301 = vrcp.pop %v1300
    %v1302 = vmul.f32 1.0, %v1301
    %v1303 = vmul.f32 %v1295, %v993
    %v1304 = vmul.f32 %v1289, %v1296
    %v1305 = vadd.f32 %v1303, %v1304
    %v1306 = vtanh.pop %v1305
    %v1307 = vmul.f32 %v1302, %v1306
    %s1308 = sadd.s32 %s26, 3
    %v1309 = vstv %s1308
    %vm1310 = vcmp.lt.s32.totalorder %v1309, %v25
    %v1311 = vsel %vm1310, 1, 0
    %1312 = vset.pattern.permute.xlu0 0
    %1313 = vperm.xlu0 %1312, %v1311
    %v1314 = vpop.permute.xlu0 %1313
    %vm1315 = vcmp.eq.s32.totalorder %v1314, 1
    %v1316 = vsel %vm1315, %v1307, %v992
    %v1317 = vsel %vm1315, %v1305, %v993
    %v1318 = vsel %vm1315, %v1307, 0.0
    %v1319 = vpack.c.bf16 %v1318, %v1318
    %s1320 = scalar_lea.vmem %s3, 12
    %1321 = vst [vmem:[%s1320] sm:$0xf] %v1319
    %s1322 = scalar_lea.vmem %s0, 64
    %v1323 = vld [vmem:[%s1322] sm:$0xff]
    %v1324 = vld [vmem:[%s1322 + $0x8] sm:$0xff]
    %v1325 = vunpack.c.l.bf16 %v1323
    %v1326 = vunpack.c.h.bf16 %v1323
    %v1327 = vunpack.c.l.bf16 %v1324
    %v1328 = vunpack.c.h.bf16 %v1324
    %v1329 = vpack.c.bf16 %v1316, %v1316
    %v1330 = vld [vmem:[%s2] sm:$0xff]
    %v1331 = vld [vmem:[%s2 + $0x8] sm:$0xff]
    %v1332 = vld [vmem:[%s2 + $0x10] sm:$0xff]
    %v1333 = vld [vmem:[%s2 + $0x18] sm:$0xff]
    %v1334 = vld [vmem:[%s2 + $0x20] sm:$0xff]
    %v1335 = vld [vmem:[%s2 + $0x28] sm:$0xff]
    %v1336 = vld [vmem:[%s2 + $0x30] sm:$0xff]
    %v1337 = vld [vmem:[%s2 + $0x38] sm:$0xff]
    %v1338 = vld [vmem:[%s2 + $0x40] sm:$0xff]
    %v1339 = vld [vmem:[%s2 + $0x48] sm:$0xff]
    %v1340 = vld [vmem:[%s2 + $0x50] sm:$0xff]
    %v1341 = vld [vmem:[%s2 + $0x58] sm:$0xff]
    %v1342 = vld [vmem:[%s2 + $0x60] sm:$0xff]
    %v1343 = vld [vmem:[%s2 + $0x68] sm:$0xff]
    %v1344 = vld [vmem:[%s2 + $0x70] sm:$0xff]
    %v1345 = vld [vmem:[%s2 + $0x78] sm:$0xff]
    %v1346 = vld [vmem:[%s2 + $0x80] sm:$0xff]
    %v1347 = vld [vmem:[%s2 + $0x88] sm:$0xff]
    %v1348 = vld [vmem:[%s2 + $0x90] sm:$0xff]
    %v1349 = vld [vmem:[%s2 + $0x98] sm:$0xff]
    %v1350 = vld [vmem:[%s2 + $0xa0] sm:$0xff]
    %v1351 = vld [vmem:[%s2 + $0xa8] sm:$0xff]
    %v1352 = vld [vmem:[%s2 + $0xb0] sm:$0xff]
    %v1353 = vld [vmem:[%s2 + $0xb8] sm:$0xff]
    %v1354 = vld [vmem:[%s2 + $0xc0] sm:$0xff]
    %v1355 = vld [vmem:[%s2 + $0xc8] sm:$0xff]
    %v1356 = vld [vmem:[%s2 + $0xd0] sm:$0xff]
    %v1357 = vld [vmem:[%s2 + $0xd8] sm:$0xff]
    %v1358 = vld [vmem:[%s2 + $0xe0] sm:$0xff]
    %v1359 = vld [vmem:[%s2 + $0xe8] sm:$0xff]
    %v1360 = vld [vmem:[%s2 + $0xf0] sm:$0xff]
    %v1361 = vld [vmem:[%s2 + $0xf8] sm:$0xff]
    %v1394 = vunpack.c.l.b16 %v1330
    %v1395 = vunpack.c.h.b16 %v1330
    %v1396 = vunpack.c.l.b16 %v1331
    %v1397 = vunpack.c.h.b16 %v1331
    %v1398 = vunpack.c.l.b16 %v1332
    %v1399 = vunpack.c.h.b16 %v1332
    %v1400 = vunpack.c.l.b16 %v1333
    %v1401 = vunpack.c.h.b16 %v1333
    %v1402 = vunpack.c.l.b16 %v1334
    %v1403 = vunpack.c.h.b16 %v1334
    %v1404 = vunpack.c.l.b16 %v1335
    %v1405 = vunpack.c.h.b16 %v1335
    %v1406 = vunpack.c.l.b16 %v1336
    %v1407 = vunpack.c.h.b16 %v1336
    %v1408 = vunpack.c.l.b16 %v1337
    %v1409 = vunpack.c.h.b16 %v1337
    %v1410 = vunpack.c.l.b16 %v1338
    %v1411 = vunpack.c.h.b16 %v1338
    %v1412 = vunpack.c.l.b16 %v1339
    %v1413 = vunpack.c.h.b16 %v1339
    %v1414 = vunpack.c.l.b16 %v1340
    %v1415 = vunpack.c.h.b16 %v1340
    %v1416 = vunpack.c.l.b16 %v1341
    %v1417 = vunpack.c.h.b16 %v1341
    %v1418 = vunpack.c.l.b16 %v1342
    %v1419 = vunpack.c.h.b16 %v1342
    %v1420 = vunpack.c.l.b16 %v1343
    %v1421 = vunpack.c.h.b16 %v1343
    %v1422 = vunpack.c.l.b16 %v1344
    %v1423 = vunpack.c.h.b16 %v1344
    %v1424 = vunpack.c.l.b16 %v1345
    %v1425 = vunpack.c.h.b16 %v1345
    %v1426 = vunpack.c.l.b16 %v1346
    %v1427 = vunpack.c.h.b16 %v1346
    %v1428 = vunpack.c.l.b16 %v1347
    %v1429 = vunpack.c.h.b16 %v1347
    %v1430 = vunpack.c.l.b16 %v1348
    %v1431 = vunpack.c.h.b16 %v1348
    %v1432 = vunpack.c.l.b16 %v1349
    %v1433 = vunpack.c.h.b16 %v1349
    %v1434 = vunpack.c.l.b16 %v1350
    %v1435 = vunpack.c.h.b16 %v1350
    %v1436 = vunpack.c.l.b16 %v1351
    %v1437 = vunpack.c.h.b16 %v1351
    %v1438 = vunpack.c.l.b16 %v1352
    %v1439 = vunpack.c.h.b16 %v1352
    %v1440 = vunpack.c.l.b16 %v1353
    %v1441 = vunpack.c.h.b16 %v1353
    %v1442 = vunpack.c.l.b16 %v1354
    %v1443 = vunpack.c.h.b16 %v1354
    %v1444 = vunpack.c.l.b16 %v1355
    %v1445 = vunpack.c.h.b16 %v1355
    %v1446 = vunpack.c.l.b16 %v1356
    %v1447 = vunpack.c.h.b16 %v1356
    %v1448 = vunpack.c.l.b16 %v1357
    %v1449 = vunpack.c.h.b16 %v1357
    %v1450 = vunpack.c.l.b16 %v1358
    %v1451 = vunpack.c.h.b16 %v1358
    %v1452 = vunpack.c.l.b16 %v1359
    %v1453 = vunpack.c.h.b16 %v1359
    %v1454 = vunpack.c.l.b16 %v1360
    %v1455 = vunpack.c.h.b16 %v1360
    %v1456 = vunpack.c.l.b16 %v1361
    %v1457 = vunpack.c.h.b16 %v1361
    %v1458 = vpack.c.b16 %v1398, %v1394
    %v1459 = vpack.c.b16 %v1399, %v1395
    %v1460 = vpack.c.b16 %v1400, %v1396
    %v1461 = vpack.c.b16 %v1401, %v1397
    %v1462 = vpack.c.b16 %v1406, %v1402
    %v1463 = vpack.c.b16 %v1407, %v1403
    %v1464 = vpack.c.b16 %v1408, %v1404
    %v1465 = vpack.c.b16 %v1409, %v1405
    %v1466 = vpack.c.b16 %v1414, %v1410
    %v1467 = vpack.c.b16 %v1415, %v1411
    %v1468 = vpack.c.b16 %v1416, %v1412
    %v1469 = vpack.c.b16 %v1417, %v1413
    %v1470 = vpack.c.b16 %v1422, %v1418
    %v1471 = vpack.c.b16 %v1423, %v1419
    %v1472 = vpack.c.b16 %v1424, %v1420
    %v1473 = vpack.c.b16 %v1425, %v1421
    %v1474 = vpack.c.b16 %v1430, %v1426
    %v1475 = vpack.c.b16 %v1431, %v1427
    %v1476 = vpack.c.b16 %v1432, %v1428
    %v1477 = vpack.c.b16 %v1433, %v1429
    %v1478 = vpack.c.b16 %v1438, %v1434
    %v1479 = vpack.c.b16 %v1439, %v1435
    %v1480 = vpack.c.b16 %v1440, %v1436
    %v1481 = vpack.c.b16 %v1441, %v1437
    %v1482 = vpack.c.b16 %v1446, %v1442
    %v1483 = vpack.c.b16 %v1447, %v1443
    %v1484 = vpack.c.b16 %v1448, %v1444
    %v1485 = vpack.c.b16 %v1449, %v1445
    %v1486 = vpack.c.b16 %v1454, %v1450
    %v1487 = vpack.c.b16 %v1455, %v1451
    %v1488 = vpack.c.b16 %v1456, %v1452
    %v1489 = vpack.c.b16 %v1457, %v1453
    %1522 = vmatprep.subr.bf16.mxu0 %v1459
    %1523 = vmatpush1.bf16.msra.mxu0 %v1458
    %1524 = vmatprep.subr.bf16.mxu0 %v1463
    %1525 = vmatpush1.bf16.msra.mxu0 %v1462
    %1526 = vmatprep.subr.bf16.mxu0 %v1467
    %1527 = vmatpush1.bf16.msra.mxu0 %v1466
    %1528 = vmatprep.subr.bf16.mxu0 %v1471
    %1529 = vmatpush1.bf16.msra.mxu0 %v1470
    %1530 = vmatprep.subr.bf16.mxu0 %v1475
    %1531 = vmatpush1.bf16.msra.mxu0 %v1474
    %1532 = vmatprep.subr.bf16.mxu0 %v1479
    %1533 = vmatpush1.bf16.msra.mxu0 %v1478
    %1534 = vmatprep.subr.bf16.mxu0 %v1483
    %1535 = vmatpush1.bf16.msra.mxu0 %v1482
    %1536 = vmatprep.subr.bf16.mxu0 %v1487
    %1537 = vmatpush1.bf16.msra.mxu0 %v1486
    %1538 = vmatprep.subr.bf16.mxu0 0
    %1539 = vmatpush1.bf16.msra.mxu0 0
    %1540 = vmatprep.subr.bf16.mxu0 0
    %1541 = vmatpush1.bf16.msra.mxu0 0
    %1542 = vmatprep.subr.bf16.mxu0 0
    %1543 = vmatpush1.bf16.msra.mxu0 0
    %1544 = vmatprep.subr.bf16.mxu0 0
    %1545 = vmatpush1.bf16.msra.mxu0 0
    %1546 = vmatprep.subr.bf16.mxu0 0
    %1547 = vmatpush1.bf16.msra.mxu0 0
    %1548 = vmatprep.subr.bf16.mxu0 0
    %1549 = vmatpush1.bf16.msra.mxu0 0
    %1550 = vmatprep.subr.bf16.mxu0 0
    %1551 = vmatpush1.bf16.msra.mxu0 0
    %1552 = vmatprep.subr.bf16.mxu0 0
    %1553 = vmatpush1.bf16.msra.mxu0 0
    %1554 = vmatprep.mubr.bf16.mxu0 0
    %1555 = vmatmul.mubr.bf16.gmra.mrb[0].mxu0 %v1329
    %v1556 = vpop.f32.mrb[0].mxu0
    %v1557 = vadd.f32 0.0, %v1556
    %v1558 = vpop.f32.mrb[0].mxu0
    %v1559 = vadd.f32 0.0, %v1558
    %v1560 = vpop.f32.mrb[0].mxu0
    %v1561 = vpop.f32.mrb[0].mxu0
    %1562 = vdwg.mxu0
    %1563 = vmatprep.subr.bf16.mxu0 %v1461
    %1564 = vmatpush1.bf16.msra.mxu0 %v1460
    %1565 = vmatprep.subr.bf16.mxu0 %v1465
    %1566 = vmatpush1.bf16.msra.mxu0 %v1464
    %1567 = vmatprep.subr.bf16.mxu0 %v1469
    %1568 = vmatpush1.bf16.msra.mxu0 %v1468
    %1569 = vmatprep.subr.bf16.mxu0 %v1473
    %1570 = vmatpush1.bf16.msra.mxu0 %v1472
    %1571 = vmatprep.subr.bf16.mxu0 %v1477
    %1572 = vmatpush1.bf16.msra.mxu0 %v1476
    %1573 = vmatprep.subr.bf16.mxu0 %v1481
    %1574 = vmatpush1.bf16.msra.mxu0 %v1480
    %1575 = vmatprep.subr.bf16.mxu0 %v1485
    %1576 = vmatpush1.bf16.msra.mxu0 %v1484
    %1577 = vmatprep.subr.bf16.mxu0 %v1489
    %1578 = vmatpush1.bf16.msra.mxu0 %v1488
    %1579 = vmatprep.subr.bf16.mxu0 0
    %1580 = vmatpush1.bf16.msra.mxu0 0
    %1581 = vmatprep.subr.bf16.mxu0 0
    %1582 = vmatpush1.bf16.msra.mxu0 0
    %1583 = vmatprep.subr.bf16.mxu0 0
    %1584 = vmatpush1.bf16.msra.mxu0 0
    %1585 = vmatprep.subr.bf16.mxu0 0
    %1586 = vmatpush1.bf16.msra.mxu0 0
    %1587 = vmatprep.subr.bf16.mxu0 0
    %1588 = vmatpush1.bf16.msra.mxu0 0
    %1589 = vmatprep.subr.bf16.mxu0 0
    %1590 = vmatpush1.bf16.msra.mxu0 0
    %1591 = vmatprep.subr.bf16.mxu0 0
    %1592 = vmatpush1.bf16.msra.mxu0 0
    %1593 = vmatprep.subr.bf16.mxu0 0
    %1594 = vmatpush1.bf16.msra.mxu0 0
    %1595 = vmatprep.mubr.bf16.mxu0 0
    %1596 = vmatmul.mubr.bf16.gmra.mrb[0].mxu0 %v1329
    %v1597 = vpop.f32.mrb[0].mxu0
    %v1598 = vadd.f32 0.0, %v1597
    %v1599 = vpop.f32.mrb[0].mxu0
    %v1600 = vadd.f32 0.0, %v1599
    %v1601 = vpop.f32.mrb[0].mxu0
    %v1602 = vpop.f32.mrb[0].mxu0
    %1603 = vdwg.mxu0
    %v1604 = vadd.f32 %v1325, %v1557
    %v1605 = vadd.f32 %v1326, %v1559
    %v1606 = vadd.f32 %v1327, %v1598
    %v1607 = vadd.f32 %v1328, %v1600
    %v1608 = vxor.u32 %v1604, 2147483648
    %v1609 = vmul.f32 %v1608, 1.442695
    %v1610 = vpow.pop %v1609
    %v1611 = vadd.f32 %v1610, 1.0
    %v1612 = vrcp.pop %v1611
    %v1613 = vmul.f32 1.0, %v1612
    %v1614 = vxor.u32 %v1605, 2147483648
    %v1615 = vmul.f32 %v1614, 1.442695
    %v1616 = vpow.pop %v1615
    %v1617 = vadd.f32 %v1616, 1.0
    %v1618 = vrcp.pop %v1617
    %v1619 = vmul.f32 1.0, %v1618
    %v1620 = vtanh.pop %v1606
    %v1621 = vxor.u32 %v1607, 2147483648
    %v1622 = vmul.f32 %v1621, 1.442695
    %v1623 = vpow.pop %v1622
    %v1624 = vadd.f32 %v1623, 1.0
    %v1625 = vrcp.pop %v1624
    %v1626 = vmul.f32 1.0, %v1625
    %v1627 = vmul.f32 %v1619, %v1317
    %v1628 = vmul.f32 %v1613, %v1620
    %v1629 = vadd.f32 %v1627, %v1628
    %v1630 = vtanh.pop %v1629
    %v1631 = vmul.f32 %v1626, %v1630
    %s1632 = sadd.s32 %s26, 4
    %v1633 = vstv %s1632
    %vm1634 = vcmp.lt.s32.totalorder %v1633, %v25
    %v1635 = vsel %vm1634, 1, 0
    %1636 = vset.pattern.permute.xlu0 0
    %1637 = vperm.xlu0 %1636, %v1635
    %v1638 = vpop.permute.xlu0 %1637
    %vm1639 = vcmp.eq.s32.totalorder %v1638, 1
    %v1640 = vsel %vm1639, %v1631, %v1316
    %v1641 = vsel %vm1639, %v1629, %v1317
    %v1642 = vsel %vm1639, %v1631, 0.0
    %v1643 = vpack.c.bf16 %v1642, %v1642
    %s1644 = scalar_lea.vmem %s3, 16
    %1645 = vst [vmem:[%s1644] sm:$0xf] %v1643
    %s1646 = scalar_lea.vmem %s0, 80
    %v1647 = vld [vmem:[%s1646] sm:$0xff]
    %v1648 = vld [vmem:[%s1646 + $0x8] sm:$0xff]
    %v1649 = vunpack.c.l.bf16 %v1647
    %v1650 = vunpack.c.h.bf16 %v1647
    %v1651 = vunpack.c.l.bf16 %v1648
    %v1652 = vunpack.c.h.bf16 %v1648
    %v1653 = vpack.c.bf16 %v1640, %v1640
    %v1654 = vld [vmem:[%s2] sm:$0xff]
    %v1655 = vld [vmem:[%s2 + $0x8] sm:$0xff]
    %v1656 = vld [vmem:[%s2 + $0x10] sm:$0xff]
    %v1657 = vld [vmem:[%s2 + $0x18] sm:$0xff]
    %v1658 = vld [vmem:[%s2 + $0x20] sm:$0xff]
    %v1659 = vld [vmem:[%s2 + $0x28] sm:$0xff]
    %v1660 = vld [vmem:[%s2 + $0x30] sm:$0xff]
    %v1661 = vld [vmem:[%s2 + $0x38] sm:$0xff]
    %v1662 = vld [vmem:[%s2 + $0x40] sm:$0xff]
    %v1663 = vld [vmem:[%s2 + $0x48] sm:$0xff]
    %v1664 = vld [vmem:[%s2 + $0x50] sm:$0xff]
    %v1665 = vld [vmem:[%s2 + $0x58] sm:$0xff]
    %v1666 = vld [vmem:[%s2 + $0x60] sm:$0xff]
    %v1667 = vld [vmem:[%s2 + $0x68] sm:$0xff]
    %v1668 = vld [vmem:[%s2 + $0x70] sm:$0xff]
    %v1669 = vld [vmem:[%s2 + $0x78] sm:$0xff]
    %v1670 = vld [vmem:[%s2 + $0x80] sm:$0xff]
    %v1671 = vld [vmem:[%s2 + $0x88] sm:$0xff]
    %v1672 = vld [vmem:[%s2 + $0x90] sm:$0xff]
    %v1673 = vld [vmem:[%s2 + $0x98] sm:$0xff]
    %v1674 = vld [vmem:[%s2 + $0xa0] sm:$0xff]
    %v1675 = vld [vmem:[%s2 + $0xa8] sm:$0xff]
    %v1676 = vld [vmem:[%s2 + $0xb0] sm:$0xff]
    %v1677 = vld [vmem:[%s2 + $0xb8] sm:$0xff]
    %v1678 = vld [vmem:[%s2 + $0xc0] sm:$0xff]
    %v1679 = vld [vmem:[%s2 + $0xc8] sm:$0xff]
    %v1680 = vld [vmem:[%s2 + $0xd0] sm:$0xff]
    %v1681 = vld [vmem:[%s2 + $0xd8] sm:$0xff]
    %v1682 = vld [vmem:[%s2 + $0xe0] sm:$0xff]
    %v1683 = vld [vmem:[%s2 + $0xe8] sm:$0xff]
    %v1684 = vld [vmem:[%s2 + $0xf0] sm:$0xff]
    %v1685 = vld [vmem:[%s2 + $0xf8] sm:$0xff]
    %v1718 = vunpack.c.l.b16 %v1654
    %v1719 = vunpack.c.h.b16 %v1654
    %v1720 = vunpack.c.l.b16 %v1655
    %v1721 = vunpack.c.h.b16 %v1655
    %v1722 = vunpack.c.l.b16 %v1656
    %v1723 = vunpack.c.h.b16 %v1656
    %v1724 = vunpack.c.l.b16 %v1657
    %v1725 = vunpack.c.h.b16 %v1657
    %v1726 = vunpack.c.l.b16 %v1658
    %v1727 = vunpack.c.h.b16 %v1658
    %v1728 = vunpack.c.l.b16 %v1659
    %v1729 = vunpack.c.h.b16 %v1659
    %v1730 = vunpack.c.l.b16 %v1660
    %v1731 = vunpack.c.h.b16 %v1660
    %v1732 = vunpack.c.l.b16 %v1661
    %v1733 = vunpack.c.h.b16 %v1661
    %v1734 = vunpack.c.l.b16 %v1662
    %v1735 = vunpack.c.h.b16 %v1662
    %v1736 = vunpack.c.l.b16 %v1663
    %v1737 = vunpack.c.h.b16 %v1663
    %v1738 = vunpack.c.l.b16 %v1664
    %v1739 = vunpack.c.h.b16 %v1664
    %v1740 = vunpack.c.l.b16 %v1665
    %v1741 = vunpack.c.h.b16 %v1665
    %v1742 = vunpack.c.l.b16 %v1666
    %v1743 = vunpack.c.h.b16 %v1666
    %v1744 = vunpack.c.l.b16 %v1667
    %v1745 = vunpack.c.h.b16 %v1667
    %v1746 = vunpack.c.l.b16 %v1668
    %v1747 = vunpack.c.h.b16 %v1668
    %v1748 = vunpack.c.l.b16 %v1669
    %v1749 = vunpack.c.h.b16 %v1669
    %v1750 = vunpack.c.l.b16 %v1670
    %v1751 = vunpack.c.h.b16 %v1670
    %v1752 = vunpack.c.l.b16 %v1671
    %v1753 = vunpack.c.h.b16 %v1671
    %v1754 = vunpack.c.l.b16 %v1672
    %v1755 = vunpack.c.h.b16 %v1672
    %v1756 = vunpack.c.l.b16 %v1673
    %v1757 = vunpack.c.h.b16 %v1673
    %v1758 = vunpack.c.l.b16 %v1674
    %v1759 = vunpack.c.h.b16 %v1674
    %v1760 = vunpack.c.l.b16 %v1675
    %v1761 = vunpack.c.h.b16 %v1675
    %v1762 = vunpack.c.l.b16 %v1676
    %v1763 = vunpack.c.h.b16 %v1676
    %v1764 = vunpack.c.l.b16 %v1677
    %v1765 = vunpack.c.h.b16 %v1677
    %v1766 = vunpack.c.l.b16 %v1678
    %v1767 = vunpack.c.h.b16 %v1678
    %v1768 = vunpack.c.l.b16 %v1679
    %v1769 = vunpack.c.h.b16 %v1679
    %v1770 = vunpack.c.l.b16 %v1680
    %v1771 = vunpack.c.h.b16 %v1680
    %v1772 = vunpack.c.l.b16 %v1681
    %v1773 = vunpack.c.h.b16 %v1681
    %v1774 = vunpack.c.l.b16 %v1682
    %v1775 = vunpack.c.h.b16 %v1682
    %v1776 = vunpack.c.l.b16 %v1683
    %v1777 = vunpack.c.h.b16 %v1683
    %v1778 = vunpack.c.l.b16 %v1684
    %v1779 = vunpack.c.h.b16 %v1684
    %v1780 = vunpack.c.l.b16 %v1685
    %v1781 = vunpack.c.h.b16 %v1685
    %v1782 = vpack.c.b16 %v1722, %v1718
    %v1783 = vpack.c.b16 %v1723, %v1719
    %v1784 = vpack.c.b16 %v1724, %v1720
    %v1785 = vpack.c.b16 %v1725, %v1721
    %v1786 = vpack.c.b16 %v1730, %v1726
    %v1787 = vpack.c.b16 %v1731, %v1727
    %v1788 = vpack.c.b16 %v1732, %v1728
    %v1789 = vpack.c.b16 %v1733, %v1729
    %v1790 = vpack.c.b16 %v1738, %v1734
    %v1791 = vpack.c.b16 %v1739, %v1735
    %v1792 = vpack.c.b16 %v1740, %v1736
    %v1793 = vpack.c.b16 %v1741, %v1737
    %v1794 = vpack.c.b16 %v1746, %v1742
    %v1795 = vpack.c.b16 %v1747, %v1743
    %v1796 = vpack.c.b16 %v1748, %v1744
    %v1797 = vpack.c.b16 %v1749, %v1745
    %v1798 = vpack.c.b16 %v1754, %v1750
    %v1799 = vpack.c.b16 %v1755, %v1751
    %v1800 = vpack.c.b16 %v1756, %v1752
    %v1801 = vpack.c.b16 %v1757, %v1753
    %v1802 = vpack.c.b16 %v1762, %v1758
    %v1803 = vpack.c.b16 %v1763, %v1759
    %v1804 = vpack.c.b16 %v1764, %v1760
    %v1805 = vpack.c.b16 %v1765, %v1761
    %v1806 = vpack.c.b16 %v1770, %v1766
    %v1807 = vpack.c.b16 %v1771, %v1767
    %v1808 = vpack.c.b16 %v1772, %v1768
    %v1809 = vpack.c.b16 %v1773, %v1769
    %v1810 = vpack.c.b16 %v1778, %v1774
    %v1811 = vpack.c.b16 %v1779, %v1775
    %v1812 = vpack.c.b16 %v1780, %v1776
    %v1813 = vpack.c.b16 %v1781, %v1777
    %1846 = vmatprep.subr.bf16.mxu0 %v1783
    %1847 = vmatpush1.bf16.msra.mxu0 %v1782
    %1848 = vmatprep.subr.bf16.mxu0 %v1787
    %1849 = vmatpush1.bf16.msra.mxu0 %v1786
    %1850 = vmatprep.subr.bf16.mxu0 %v1791
    %1851 = vmatpush1.bf16.msra.mxu0 %v1790
    %1852 = vmatprep.subr.bf16.mxu0 %v1795
    %1853 = vmatpush1.bf16.msra.mxu0 %v1794
    %1854 = vmatprep.subr.bf16.mxu0 %v1799
    %1855 = vmatpush1.bf16.msra.mxu0 %v1798
    %1856 = vmatprep.subr.bf16.mxu0 %v1803
    %1857 = vmatpush1.bf16.msra.mxu0 %v1802
    %1858 = vmatprep.subr.bf16.mxu0 %v1807
    %1859 = vmatpush1.bf16.msra.mxu0 %v1806
    %1860 = vmatprep.subr.bf16.mxu0 %v1811
    %1861 = vmatpush1.bf16.msra.mxu0 %v1810
    %1862 = vmatprep.subr.bf16.mxu0 0
    %1863 = vmatpush1.bf16.msra.mxu0 0
    %1864 = vmatprep.subr.bf16.mxu0 0
    %1865 = vmatpush1.bf16.msra.mxu0 0
    %1866 = vmatprep.subr.bf16.mxu0 0
    %1867 = vmatpush1.bf16.msra.mxu0 0
    %1868 = vmatprep.subr.bf16.mxu0 0
    %1869 = vmatpush1.bf16.msra.mxu0 0
    %1870 = vmatprep.subr.bf16.mxu0 0
    %1871 = vmatpush1.bf16.msra.mxu0 0
    %1872 = vmatprep.subr.bf16.mxu0 0
    %1873 = vmatpush1.bf16.msra.mxu0 0
    %1874 = vmatprep.subr.bf16.mxu0 0
    %1875 = vmatpush1.bf16.msra.mxu0 0
    %1876 = vmatprep.subr.bf16.mxu0 0
    %1877 = vmatpush1.bf16.msra.mxu0 0
    %1878 = vmatprep.mubr.bf16.mxu0 0
    %1879 = vmatmul.mubr.bf16.gmra.mrb[0].mxu0 %v1653
    %v1880 = vpop.f32.mrb[0].mxu0
    %v1881 = vadd.f32 0.0, %v1880
    %v1882 = vpop.f32.mrb[0].mxu0
    %v1883 = vadd.f32 0.0, %v1882
    %v1884 = vpop.f32.mrb[0].mxu0
    %v1885 = vpop.f32.mrb[0].mxu0
    %1886 = vdwg.mxu0
    %1887 = vmatprep.subr.bf16.mxu0 %v1785
    %1888 = vmatpush1.bf16.msra.mxu0 %v1784
    %1889 = vmatprep.subr.bf16.mxu0 %v1789
    %1890 = vmatpush1.bf16.msra.mxu0 %v1788
    %1891 = vmatprep.subr.bf16.mxu0 %v1793
    %1892 = vmatpush1.bf16.msra.mxu0 %v1792
    %1893 = vmatprep.subr.bf16.mxu0 %v1797
    %1894 = vmatpush1.bf16.msra.mxu0 %v1796
    %1895 = vmatprep.subr.bf16.mxu0 %v1801
    %1896 = vmatpush1.bf16.msra.mxu0 %v1800
    %1897 = vmatprep.subr.bf16.mxu0 %v1805
    %1898 = vmatpush1.bf16.msra.mxu0 %v1804
    %1899 = vmatprep.subr.bf16.mxu0 %v1809
    %1900 = vmatpush1.bf16.msra.mxu0 %v1808
    %1901 = vmatprep.subr.bf16.mxu0 %v1813
    %1902 = vmatpush1.bf16.msra.mxu0 %v1812
    %1903 = vmatprep.subr.bf16.mxu0 0
    %1904 = vmatpush1.bf16.msra.mxu0 0
    %1905 = vmatprep.subr.bf16.mxu0 0
    %1906 = vmatpush1.bf16.msra.mxu0 0
    %1907 = vmatprep.subr.bf16.mxu0 0
    %1908 = vmatpush1.bf16.msra.mxu0 0
    %1909 = vmatprep.subr.bf16.mxu0 0
    %1910 = vmatpush1.bf16.msra.mxu0 0
    %1911 = vmatprep.subr.bf16.mxu0 0
    %1912 = vmatpush1.bf16.msra.mxu0 0
    %1913 = vmatprep.subr.bf16.mxu0 0
    %1914 = vmatpush1.bf16.msra.mxu0 0
    %1915 = vmatprep.subr.bf16.mxu0 0
    %1916 = vmatpush1.bf16.msra.mxu0 0
    %1917 = vmatprep.subr.bf16.mxu0 0
    %1918 = vmatpush1.bf16.msra.mxu0 0
    %1919 = vmatprep.mubr.bf16.mxu0 0
    %1920 = vmatmul.mubr.bf16.gmra.mrb[0].mxu0 %v1653
    %v1921 = vpop.f32.mrb[0].mxu0
    %v1922 = vadd.f32 0.0, %v1921
    %v1923 = vpop.f32.mrb[0].mxu0
    %v1924 = vadd.f32 0.0, %v1923
    %v1925 = vpop.f32.mrb[0].mxu0
    %v1926 = vpop.f32.mrb[0].mxu0
    %1927 = vdwg.mxu0
    %v1928 = vadd.f32 %v1649, %v1881
    %v1929 = vadd.f32 %v1650, %v1883
    %v1930 = vadd.f32 %v1651, %v1922
    %v1931 = vadd.f32 %v1652, %v1924
    %v1932 = vxor.u32 %v1928, 2147483648
    %v1933 = vmul.f32 %v1932, 1.442695
    %v1934 = vpow.pop %v1933
    %v1935 = vadd.f32 %v1934, 1.0
    %v1936 = vrcp.pop %v1935
    %v1937 = vmul.f32 1.0, %v1936
    %v1938 = vxor.u32 %v1929, 2147483648
    %v1939 = vmul.f32 %v1938, 1.442695
    %v1940 = vpow.pop %v1939
    %v1941 = vadd.f32 %v1940, 1.0
    %v1942 = vrcp.pop %v1941
    %v1943 = vmul.f32 1.0, %v1942
    %v1944 = vtanh.pop %v1930
    %v1945 = vxor.u32 %v1931, 2147483648
    %v1946 = vmul.f32 %v1945, 1.442695
    %v1947 = vpow.pop %v1946
    %v1948 = vadd.f32 %v1947, 1.0
    %v1949 = vrcp.pop %v1948
    %v1950 = vmul.f32 1.0, %v1949
    %v1951 = vmul.f32 %v1943, %v1641
    %v1952 = vmul.f32 %v1937, %v1944
    %v1953 = vadd.f32 %v1951, %v1952
    %v1954 = vtanh.pop %v1953
    %v1955 = vmul.f32 %v1950, %v1954
    %s1956 = sadd.s32 %s26, 5
    %v1957 = vstv %s1956
    %vm1958 = vcmp.lt.s32.totalorder %v1957, %v25
    %v1959 = vsel %vm1958, 1, 0
    %1960 = vset.pattern.permute.xlu0 0
    %1961 = vperm.xlu0 %1960, %v1959
    %v1962 = vpop.permute.xlu0 %1961
    %vm1963 = vcmp.eq.s32.totalorder %v1962, 1
    %v1964 = vsel %vm1963, %v1955, %v1640
    %v1965 = vsel %vm1963, %v1953, %v1641
    %v1966 = vsel %vm1963, %v1955, 0.0
    %v1967 = vpack.c.bf16 %v1966, %v1966
    %s1968 = scalar_lea.vmem %s3, 20
    %1969 = vst [vmem:[%s1968] sm:$0xf] %v1967
    %s1970 = scalar_lea.vmem %s0, 96
    %v1971 = vld [vmem:[%s1970] sm:$0xff]
    %v1972 = vld [vmem:[%s1970 + $0x8] sm:$0xff]
    %v1973 = vunpack.c.l.bf16 %v1971
    %v1974 = vunpack.c.h.bf16 %v1971
    %v1975 = vunpack.c.l.bf16 %v1972
    %v1976 = vunpack.c.h.bf16 %v1972
    %v1977 = vpack.c.bf16 %v1964, %v1964
    %v1978 = vld [vmem:[%s2] sm:$0xff]
    %v1979 = vld [vmem:[%s2 + $0x8] sm:$0xff]
    %v1980 = vld [vmem:[%s2 + $0x10] sm:$0xff]
    %v1981 = vld [vmem:[%s2 + $0x18] sm:$0xff]
    %v1982 = vld [vmem:[%s2 + $0x20] sm:$0xff]
    %v1983 = vld [vmem:[%s2 + $0x28] sm:$0xff]
    %v1984 = vld [vmem:[%s2 + $0x30] sm:$0xff]
    %v1985 = vld [vmem:[%s2 + $0x38] sm:$0xff]
    %v1986 = vld [vmem:[%s2 + $0x40] sm:$0xff]
    %v1987 = vld [vmem:[%s2 + $0x48] sm:$0xff]
    %v1988 = vld [vmem:[%s2 + $0x50] sm:$0xff]
    %v1989 = vld [vmem:[%s2 + $0x58] sm:$0xff]
    %v1990 = vld [vmem:[%s2 + $0x60] sm:$0xff]
    %v1991 = vld [vmem:[%s2 + $0x68] sm:$0xff]
    %v1992 = vld [vmem:[%s2 + $0x70] sm:$0xff]
    %v1993 = vld [vmem:[%s2 + $0x78] sm:$0xff]
    %v1994 = vld [vmem:[%s2 + $0x80] sm:$0xff]
    %v1995 = vld [vmem:[%s2 + $0x88] sm:$0xff]
    %v1996 = vld [vmem:[%s2 + $0x90] sm:$0xff]
    %v1997 = vld [vmem:[%s2 + $0x98] sm:$0xff]
    %v1998 = vld [vmem:[%s2 + $0xa0] sm:$0xff]
    %v1999 = vld [vmem:[%s2 + $0xa8] sm:$0xff]
    %v2000 = vld [vmem:[%s2 + $0xb0] sm:$0xff]
    %v2001 = vld [vmem:[%s2 + $0xb8] sm:$0xff]
    %v2002 = vld [vmem:[%s2 + $0xc0] sm:$0xff]
    %v2003 = vld [vmem:[%s2 + $0xc8] sm:$0xff]
    %v2004 = vld [vmem:[%s2 + $0xd0] sm:$0xff]
    %v2005 = vld [vmem:[%s2 + $0xd8] sm:$0xff]
    %v2006 = vld [vmem:[%s2 + $0xe0] sm:$0xff]
    %v2007 = vld [vmem:[%s2 + $0xe8] sm:$0xff]
    %v2008 = vld [vmem:[%s2 + $0xf0] sm:$0xff]
    %v2009 = vld [vmem:[%s2 + $0xf8] sm:$0xff]
    %v2042 = vunpack.c.l.b16 %v1978
    %v2043 = vunpack.c.h.b16 %v1978
    %v2044 = vunpack.c.l.b16 %v1979
    %v2045 = vunpack.c.h.b16 %v1979
    %v2046 = vunpack.c.l.b16 %v1980
    %v2047 = vunpack.c.h.b16 %v1980
    %v2048 = vunpack.c.l.b16 %v1981
    %v2049 = vunpack.c.h.b16 %v1981
    %v2050 = vunpack.c.l.b16 %v1982
    %v2051 = vunpack.c.h.b16 %v1982
    %v2052 = vunpack.c.l.b16 %v1983
    %v2053 = vunpack.c.h.b16 %v1983
    %v2054 = vunpack.c.l.b16 %v1984
    %v2055 = vunpack.c.h.b16 %v1984
    %v2056 = vunpack.c.l.b16 %v1985
    %v2057 = vunpack.c.h.b16 %v1985
    %v2058 = vunpack.c.l.b16 %v1986
    %v2059 = vunpack.c.h.b16 %v1986
    %v2060 = vunpack.c.l.b16 %v1987
    %v2061 = vunpack.c.h.b16 %v1987
    %v2062 = vunpack.c.l.b16 %v1988
    %v2063 = vunpack.c.h.b16 %v1988
    %v2064 = vunpack.c.l.b16 %v1989
    %v2065 = vunpack.c.h.b16 %v1989
    %v2066 = vunpack.c.l.b16 %v1990
    %v2067 = vunpack.c.h.b16 %v1990
    %v2068 = vunpack.c.l.b16 %v1991
    %v2069 = vunpack.c.h.b16 %v1991
    %v2070 = vunpack.c.l.b16 %v1992
    %v2071 = vunpack.c.h.b16 %v1992
    %v2072 = vunpack.c.l.b16 %v1993
    %v2073 = vunpack.c.h.b16 %v1993
    %v2074 = vunpack.c.l.b16 %v1994
    %v2075 = vunpack.c.h.b16 %v1994
    %v2076 = vunpack.c.l.b16 %v1995
    %v2077 = vunpack.c.h.b16 %v1995
    %v2078 = vunpack.c.l.b16 %v1996
    %v2079 = vunpack.c.h.b16 %v1996
    %v2080 = vunpack.c.l.b16 %v1997
    %v2081 = vunpack.c.h.b16 %v1997
    %v2082 = vunpack.c.l.b16 %v1998
    %v2083 = vunpack.c.h.b16 %v1998
    %v2084 = vunpack.c.l.b16 %v1999
    %v2085 = vunpack.c.h.b16 %v1999
    %v2086 = vunpack.c.l.b16 %v2000
    %v2087 = vunpack.c.h.b16 %v2000
    %v2088 = vunpack.c.l.b16 %v2001
    %v2089 = vunpack.c.h.b16 %v2001
    %v2090 = vunpack.c.l.b16 %v2002
    %v2091 = vunpack.c.h.b16 %v2002
    %v2092 = vunpack.c.l.b16 %v2003
    %v2093 = vunpack.c.h.b16 %v2003
    %v2094 = vunpack.c.l.b16 %v2004
    %v2095 = vunpack.c.h.b16 %v2004
    %v2096 = vunpack.c.l.b16 %v2005
    %v2097 = vunpack.c.h.b16 %v2005
    %v2098 = vunpack.c.l.b16 %v2006
    %v2099 = vunpack.c.h.b16 %v2006
    %v2100 = vunpack.c.l.b16 %v2007
    %v2101 = vunpack.c.h.b16 %v2007
    %v2102 = vunpack.c.l.b16 %v2008
    %v2103 = vunpack.c.h.b16 %v2008
    %v2104 = vunpack.c.l.b16 %v2009
    %v2105 = vunpack.c.h.b16 %v2009
    %v2106 = vpack.c.b16 %v2046, %v2042
    %v2107 = vpack.c.b16 %v2047, %v2043
    %v2108 = vpack.c.b16 %v2048, %v2044
    %v2109 = vpack.c.b16 %v2049, %v2045
    %v2110 = vpack.c.b16 %v2054, %v2050
    %v2111 = vpack.c.b16 %v2055, %v2051
    %v2112 = vpack.c.b16 %v2056, %v2052
    %v2113 = vpack.c.b16 %v2057, %v2053
    %v2114 = vpack.c.b16 %v2062, %v2058
    %v2115 = vpack.c.b16 %v2063, %v2059
    %v2116 = vpack.c.b16 %v2064, %v2060
    %v2117 = vpack.c.b16 %v2065, %v2061
    %v2118 = vpack.c.b16 %v2070, %v2066
    %v2119 = vpack.c.b16 %v2071, %v2067
    %v2120 = vpack.c.b16 %v2072, %v2068
    %v2121 = vpack.c.b16 %v2073, %v2069
    %v2122 = vpack.c.b16 %v2078, %v2074
    %v2123 = vpack.c.b16 %v2079, %v2075
    %v2124 = vpack.c.b16 %v2080, %v2076
    %v2125 = vpack.c.b16 %v2081, %v2077
    %v2126 = vpack.c.b16 %v2086, %v2082
    %v2127 = vpack.c.b16 %v2087, %v2083
    %v2128 = vpack.c.b16 %v2088, %v2084
    %v2129 = vpack.c.b16 %v2089, %v2085
    %v2130 = vpack.c.b16 %v2094, %v2090
    %v2131 = vpack.c.b16 %v2095, %v2091
    %v2132 = vpack.c.b16 %v2096, %v2092
    %v2133 = vpack.c.b16 %v2097, %v2093
    %v2134 = vpack.c.b16 %v2102, %v2098
    %v2135 = vpack.c.b16 %v2103, %v2099
    %v2136 = vpack.c.b16 %v2104, %v2100
    %v2137 = vpack.c.b16 %v2105, %v2101
    %2170 = vmatprep.subr.bf16.mxu0 %v2107
    %2171 = vmatpush1.bf16.msra.mxu0 %v2106
    %2172 = vmatprep.subr.bf16.mxu0 %v2111
    %2173 = vmatpush1.bf16.msra.mxu0 %v2110
    %2174 = vmatprep.subr.bf16.mxu0 %v2115
    %2175 = vmatpush1.bf16.msra.mxu0 %v2114
    %2176 = vmatprep.subr.bf16.mxu0 %v2119
    %2177 = vmatpush1.bf16.msra.mxu0 %v2118
    %2178 = vmatprep.subr.bf16.mxu0 %v2123
    %2179 = vmatpush1.bf16.msra.mxu0 %v2122
    %2180 = vmatprep.subr.bf16.mxu0 %v2127
    %2181 = vmatpush1.bf16.msra.mxu0 %v2126
    %2182 = vmatprep.subr.bf16.mxu0 %v2131
    %2183 = vmatpush1.bf16.msra.mxu0 %v2130
    %2184 = vmatprep.subr.bf16.mxu0 %v2135
    %2185 = vmatpush1.bf16.msra.mxu0 %v2134
    %2186 = vmatprep.subr.bf16.mxu0 0
    %2187 = vmatpush1.bf16.msra.mxu0 0
    %2188 = vmatprep.subr.bf16.mxu0 0
    %2189 = vmatpush1.bf16.msra.mxu0 0
    %2190 = vmatprep.subr.bf16.mxu0 0
    %2191 = vmatpush1.bf16.msra.mxu0 0
    %2192 = vmatprep.subr.bf16.mxu0 0
    %2193 = vmatpush1.bf16.msra.mxu0 0
    %2194 = vmatprep.subr.bf16.mxu0 0
    %2195 = vmatpush1.bf16.msra.mxu0 0
    %2196 = vmatprep.subr.bf16.mxu0 0
    %2197 = vmatpush1.bf16.msra.mxu0 0
    %2198 = vmatprep.subr.bf16.mxu0 0
    %2199 = vmatpush1.bf16.msra.mxu0 0
    %2200 = vmatprep.subr.bf16.mxu0 0
    %2201 = vmatpush1.bf16.msra.mxu0 0
    %2202 = vmatprep.mubr.bf16.mxu0 0
    %2203 = vmatmul.mubr.bf16.gmra.mrb[0].mxu0 %v1977
    %v2204 = vpop.f32.mrb[0].mxu0
    %v2205 = vadd.f32 0.0, %v2204
    %v2206 = vpop.f32.mrb[0].mxu0
    %v2207 = vadd.f32 0.0, %v2206
    %v2208 = vpop.f32.mrb[0].mxu0
    %v2209 = vpop.f32.mrb[0].mxu0
    %2210 = vdwg.mxu0
    %2211 = vmatprep.subr.bf16.mxu0 %v2109
    %2212 = vmatpush1.bf16.msra.mxu0 %v2108
    %2213 = vmatprep.subr.bf16.mxu0 %v2113
    %2214 = vmatpush1.bf16.msra.mxu0 %v2112
    %2215 = vmatprep.subr.bf16.mxu0 %v2117
    %2216 = vmatpush1.bf16.msra.mxu0 %v2116
    %2217 = vmatprep.subr.bf16.mxu0 %v2121
    %2218 = vmatpush1.bf16.msra.mxu0 %v2120
    %2219 = vmatprep.subr.bf16.mxu0 %v2125
    %2220 = vmatpush1.bf16.msra.mxu0 %v2124
    %2221 = vmatprep.subr.bf16.mxu0 %v2129
    %2222 = vmatpush1.bf16.msra.mxu0 %v2128
    %2223 = vmatprep.subr.bf16.mxu0 %v2133
    %2224 = vmatpush1.bf16.msra.mxu0 %v2132
    %2225 = vmatprep.subr.bf16.mxu0 %v2137
    %2226 = vmatpush1.bf16.msra.mxu0 %v2136
    %2227 = vmatprep.subr.bf16.mxu0 0
    %2228 = vmatpush1.bf16.msra.mxu0 0
    %2229 = vmatprep.subr.bf16.mxu0 0
    %2230 = vmatpush1.bf16.msra.mxu0 0
    %2231 = vmatprep.subr.bf16.mxu0 0
    %2232 = vmatpush1.bf16.msra.mxu0 0
    %2233 = vmatprep.subr.bf16.mxu0 0
    %2234 = vmatpush1.bf16.msra.mxu0 0
    %2235 = vmatprep.subr.bf16.mxu0 0
    %2236 = vmatpush1.bf16.msra.mxu0 0
    %2237 = vmatprep.subr.bf16.mxu0 0
    %2238 = vmatpush1.bf16.msra.mxu0 0
    %2239 = vmatprep.subr.bf16.mxu0 0
    %2240 = vmatpush1.bf16.msra.mxu0 0
    %2241 = vmatprep.subr.bf16.mxu0 0
    %2242 = vmatpush1.bf16.msra.mxu0 0
    %2243 = vmatprep.mubr.bf16.mxu0 0
    %2244 = vmatmul.mubr.bf16.gmra.mrb[0].mxu0 %v1977
    %v2245 = vpop.f32.mrb[0].mxu0
    %v2246 = vadd.f32 0.0, %v2245
    %v2247 = vpop.f32.mrb[0].mxu0
    %v2248 = vadd.f32 0.0, %v2247
    %v2249 = vpop.f32.mrb[0].mxu0
    %v2250 = vpop.f32.mrb[0].mxu0
    %2251 = vdwg.mxu0
    %v2252 = vadd.f32 %v1973, %v2205
    %v2253 = vadd.f32 %v1974, %v2207
    %v2254 = vadd.f32 %v1975, %v2246
    %v2255 = vadd.f32 %v1976, %v2248
    %v2256 = vxor.u32 %v2252, 2147483648
    %v2257 = vmul.f32 %v2256, 1.442695
    %v2258 = vpow.pop %v2257
    %v2259 = vadd.f32 %v2258, 1.0
    %v2260 = vrcp.pop %v2259
    %v2261 = vmul.f32 1.0, %v2260
    %v2262 = vxor.u32 %v2253, 2147483648
    %v2263 = vmul.f32 %v2262, 1.442695
    %v2264 = vpow.pop %v2263
    %v2265 = vadd.f32 %v2264, 1.0
    %v2266 = vrcp.pop %v2265
    %v2267 = vmul.f32 1.0, %v2266
    %v2268 = vtanh.pop %v2254
    %v2269 = vxor.u32 %v2255, 2147483648
    %v2270 = vmul.f32 %v2269, 1.442695
    %v2271 = vpow.pop %v2270
    %v2272 = vadd.f32 %v2271, 1.0
    %v2273 = vrcp.pop %v2272
    %v2274 = vmul.f32 1.0, %v2273
    %v2275 = vmul.f32 %v2267, %v1965
    %v2276 = vmul.f32 %v2261, %v2268
    %v2277 = vadd.f32 %v2275, %v2276
    %v2278 = vtanh.pop %v2277
    %v2279 = vmul.f32 %v2274, %v2278
    %s2280 = sadd.s32 %s26, 6
    %v2281 = vstv %s2280
    %vm2282 = vcmp.lt.s32.totalorder %v2281, %v25
    %v2283 = vsel %vm2282, 1, 0
    %2284 = vset.pattern.permute.xlu0 0
    %2285 = vperm.xlu0 %2284, %v2283
    %v2286 = vpop.permute.xlu0 %2285
    %vm2287 = vcmp.eq.s32.totalorder %v2286, 1
    %v2288 = vsel %vm2287, %v2279, %v1964
    %v2289 = vsel %vm2287, %v2277, %v1965
    %v2290 = vsel %vm2287, %v2279, 0.0
    %v2291 = vpack.c.bf16 %v2290, %v2290
    %s2292 = scalar_lea.vmem %s3, 24
    %2293 = vst [vmem:[%s2292] sm:$0xf] %v2291
    %s2294 = scalar_lea.vmem %s0, 112
    %v2295 = vld [vmem:[%s2294] sm:$0xff]
    %v2296 = vld [vmem:[%s2294 + $0x8] sm:$0xff]
    %v2297 = vunpack.c.l.bf16 %v2295
    %v2298 = vunpack.c.h.bf16 %v2295
    %v2299 = vunpack.c.l.bf16 %v2296
    %v2300 = vunpack.c.h.bf16 %v2296
    %v2301 = vpack.c.bf16 %v2288, %v2288
    %v2302 = vld [vmem:[%s2] sm:$0xff]
    %v2303 = vld [vmem:[%s2 + $0x8] sm:$0xff]
    %v2304 = vld [vmem:[%s2 + $0x10] sm:$0xff]
    %v2305 = vld [vmem:[%s2 + $0x18] sm:$0xff]
    %v2306 = vld [vmem:[%s2 + $0x20] sm:$0xff]
    %v2307 = vld [vmem:[%s2 + $0x28] sm:$0xff]
    %v2308 = vld [vmem:[%s2 + $0x30] sm:$0xff]
    %v2309 = vld [vmem:[%s2 + $0x38] sm:$0xff]
    %v2310 = vld [vmem:[%s2 + $0x40] sm:$0xff]
    %v2311 = vld [vmem:[%s2 + $0x48] sm:$0xff]
    %v2312 = vld [vmem:[%s2 + $0x50] sm:$0xff]
    %v2313 = vld [vmem:[%s2 + $0x58] sm:$0xff]
    %v2314 = vld [vmem:[%s2 + $0x60] sm:$0xff]
    %v2315 = vld [vmem:[%s2 + $0x68] sm:$0xff]
    %v2316 = vld [vmem:[%s2 + $0x70] sm:$0xff]
    %v2317 = vld [vmem:[%s2 + $0x78] sm:$0xff]
    %v2318 = vld [vmem:[%s2 + $0x80] sm:$0xff]
    %v2319 = vld [vmem:[%s2 + $0x88] sm:$0xff]
    %v2320 = vld [vmem:[%s2 + $0x90] sm:$0xff]
    %v2321 = vld [vmem:[%s2 + $0x98] sm:$0xff]
    %v2322 = vld [vmem:[%s2 + $0xa0] sm:$0xff]
    %v2323 = vld [vmem:[%s2 + $0xa8] sm:$0xff]
    %v2324 = vld [vmem:[%s2 + $0xb0] sm:$0xff]
    %v2325 = vld [vmem:[%s2 + $0xb8] sm:$0xff]
    %v2326 = vld [vmem:[%s2 + $0xc0] sm:$0xff]
    %v2327 = vld [vmem:[%s2 + $0xc8] sm:$0xff]
    %v2328 = vld [vmem:[%s2 + $0xd0] sm:$0xff]
    %v2329 = vld [vmem:[%s2 + $0xd8] sm:$0xff]
    %v2330 = vld [vmem:[%s2 + $0xe0] sm:$0xff]
    %v2331 = vld [vmem:[%s2 + $0xe8] sm:$0xff]
    %v2332 = vld [vmem:[%s2 + $0xf0] sm:$0xff]
    %v2333 = vld [vmem:[%s2 + $0xf8] sm:$0xff]
    %v2366 = vunpack.c.l.b16 %v2302
    %v2367 = vunpack.c.h.b16 %v2302
    %v2368 = vunpack.c.l.b16 %v2303
    %v2369 = vunpack.c.h.b16 %v2303
    %v2370 = vunpack.c.l.b16 %v2304
    %v2371 = vunpack.c.h.b16 %v2304
    %v2372 = vunpack.c.l.b16 %v2305
    %v2373 = vunpack.c.h.b16 %v2305
    %v2374 = vunpack.c.l.b16 %v2306
    %v2375 = vunpack.c.h.b16 %v2306
    %v2376 = vunpack.c.l.b16 %v2307
    %v2377 = vunpack.c.h.b16 %v2307
    %v2378 = vunpack.c.l.b16 %v2308
    %v2379 = vunpack.c.h.b16 %v2308
    %v2380 = vunpack.c.l.b16 %v2309
    %v2381 = vunpack.c.h.b16 %v2309
    %v2382 = vunpack.c.l.b16 %v2310
    %v2383 = vunpack.c.h.b16 %v2310
    %v2384 = vunpack.c.l.b16 %v2311
    %v2385 = vunpack.c.h.b16 %v2311
    %v2386 = vunpack.c.l.b16 %v2312
    %v2387 = vunpack.c.h.b16 %v2312
    %v2388 = vunpack.c.l.b16 %v2313
    %v2389 = vunpack.c.h.b16 %v2313
    %v2390 = vunpack.c.l.b16 %v2314
    %v2391 = vunpack.c.h.b16 %v2314
    %v2392 = vunpack.c.l.b16 %v2315
    %v2393 = vunpack.c.h.b16 %v2315
    %v2394 = vunpack.c.l.b16 %v2316
    %v2395 = vunpack.c.h.b16 %v2316
    %v2396 = vunpack.c.l.b16 %v2317
    %v2397 = vunpack.c.h.b16 %v2317
    %v2398 = vunpack.c.l.b16 %v2318
    %v2399 = vunpack.c.h.b16 %v2318
    %v2400 = vunpack.c.l.b16 %v2319
    %v2401 = vunpack.c.h.b16 %v2319
    %v2402 = vunpack.c.l.b16 %v2320
    %v2403 = vunpack.c.h.b16 %v2320
    %v2404 = vunpack.c.l.b16 %v2321
    %v2405 = vunpack.c.h.b16 %v2321
    %v2406 = vunpack.c.l.b16 %v2322
    %v2407 = vunpack.c.h.b16 %v2322
    %v2408 = vunpack.c.l.b16 %v2323
    %v2409 = vunpack.c.h.b16 %v2323
    %v2410 = vunpack.c.l.b16 %v2324
    %v2411 = vunpack.c.h.b16 %v2324
    %v2412 = vunpack.c.l.b16 %v2325
    %v2413 = vunpack.c.h.b16 %v2325
    %v2414 = vunpack.c.l.b16 %v2326
    %v2415 = vunpack.c.h.b16 %v2326
    %v2416 = vunpack.c.l.b16 %v2327
    %v2417 = vunpack.c.h.b16 %v2327
    %v2418 = vunpack.c.l.b16 %v2328
    %v2419 = vunpack.c.h.b16 %v2328
    %v2420 = vunpack.c.l.b16 %v2329
    %v2421 = vunpack.c.h.b16 %v2329
    %v2422 = vunpack.c.l.b16 %v2330
    %v2423 = vunpack.c.h.b16 %v2330
    %v2424 = vunpack.c.l.b16 %v2331
    %v2425 = vunpack.c.h.b16 %v2331
    %v2426 = vunpack.c.l.b16 %v2332
    %v2427 = vunpack.c.h.b16 %v2332
    %v2428 = vunpack.c.l.b16 %v2333
    %v2429 = vunpack.c.h.b16 %v2333
    %v2430 = vpack.c.b16 %v2370, %v2366
    %v2431 = vpack.c.b16 %v2371, %v2367
    %v2432 = vpack.c.b16 %v2372, %v2368
    %v2433 = vpack.c.b16 %v2373, %v2369
    %v2434 = vpack.c.b16 %v2378, %v2374
    %v2435 = vpack.c.b16 %v2379, %v2375
    %v2436 = vpack.c.b16 %v2380, %v2376
    %v2437 = vpack.c.b16 %v2381, %v2377
    %v2438 = vpack.c.b16 %v2386, %v2382
    %v2439 = vpack.c.b16 %v2387, %v2383
    %v2440 = vpack.c.b16 %v2388, %v2384
    %v2441 = vpack.c.b16 %v2389, %v2385
    %v2442 = vpack.c.b16 %v2394, %v2390
    %v2443 = vpack.c.b16 %v2395, %v2391
    %v2444 = vpack.c.b16 %v2396, %v2392
    %v2445 = vpack.c.b16 %v2397, %v2393
    %v2446 = vpack.c.b16 %v2402, %v2398
    %v2447 = vpack.c.b16 %v2403, %v2399
    %v2448 = vpack.c.b16 %v2404, %v2400
    %v2449 = vpack.c.b16 %v2405, %v2401
    %v2450 = vpack.c.b16 %v2410, %v2406
    %v2451 = vpack.c.b16 %v2411, %v2407
    %v2452 = vpack.c.b16 %v2412, %v2408
    %v2453 = vpack.c.b16 %v2413, %v2409
    %v2454 = vpack.c.b16 %v2418, %v2414
    %v2455 = vpack.c.b16 %v2419, %v2415
    %v2456 = vpack.c.b16 %v2420, %v2416
    %v2457 = vpack.c.b16 %v2421, %v2417
    %v2458 = vpack.c.b16 %v2426, %v2422
    %v2459 = vpack.c.b16 %v2427, %v2423
    %v2460 = vpack.c.b16 %v2428, %v2424
    %v2461 = vpack.c.b16 %v2429, %v2425
    %2494 = vmatprep.subr.bf16.mxu0 %v2431
    %2495 = vmatpush1.bf16.msra.mxu0 %v2430
    %2496 = vmatprep.subr.bf16.mxu0 %v2435
    %2497 = vmatpush1.bf16.msra.mxu0 %v2434
    %2498 = vmatprep.subr.bf16.mxu0 %v2439
    %2499 = vmatpush1.bf16.msra.mxu0 %v2438
    %2500 = vmatprep.subr.bf16.mxu0 %v2443
    %2501 = vmatpush1.bf16.msra.mxu0 %v2442
    %2502 = vmatprep.subr.bf16.mxu0 %v2447
    %2503 = vmatpush1.bf16.msra.mxu0 %v2446
    %2504 = vmatprep.subr.bf16.mxu0 %v2451
    %2505 = vmatpush1.bf16.msra.mxu0 %v2450
    %2506 = vmatprep.subr.bf16.mxu0 %v2455
    %2507 = vmatpush1.bf16.msra.mxu0 %v2454
    %2508 = vmatprep.subr.bf16.mxu0 %v2459
    %2509 = vmatpush1.bf16.msra.mxu0 %v2458
    %2510 = vmatprep.subr.bf16.mxu0 0
    %2511 = vmatpush1.bf16.msra.mxu0 0
    %2512 = vmatprep.subr.bf16.mxu0 0
    %2513 = vmatpush1.bf16.msra.mxu0 0
    %2514 = vmatprep.subr.bf16.mxu0 0
    %2515 = vmatpush1.bf16.msra.mxu0 0
    %2516 = vmatprep.subr.bf16.mxu0 0
    %2517 = vmatpush1.bf16.msra.mxu0 0
    %2518 = vmatprep.subr.bf16.mxu0 0
    %2519 = vmatpush1.bf16.msra.mxu0 0
    %2520 = vmatprep.subr.bf16.mxu0 0
    %2521 = vmatpush1.bf16.msra.mxu0 0
    %2522 = vmatprep.subr.bf16.mxu0 0
    %2523 = vmatpush1.bf16.msra.mxu0 0
    %2524 = vmatprep.subr.bf16.mxu0 0
    %2525 = vmatpush1.bf16.msra.mxu0 0
    %2526 = vmatprep.mubr.bf16.mxu0 0
    %2527 = vmatmul.mubr.bf16.gmra.mrb[0].mxu0 %v2301
    %v2528 = vpop.f32.mrb[0].mxu0
    %v2529 = vadd.f32 0.0, %v2528
    %v2530 = vpop.f32.mrb[0].mxu0
    %v2531 = vadd.f32 0.0, %v2530
    %v2532 = vpop.f32.mrb[0].mxu0
    %v2533 = vpop.f32.mrb[0].mxu0
    %2534 = vdwg.mxu0
    %2535 = vmatprep.subr.bf16.mxu0 %v2433
    %2536 = vmatpush1.bf16.msra.mxu0 %v2432
    %2537 = vmatprep.subr.bf16.mxu0 %v2437
    %2538 = vmatpush1.bf16.msra.mxu0 %v2436
    %2539 = vmatprep.subr.bf16.mxu0 %v2441
    %2540 = vmatpush1.bf16.msra.mxu0 %v2440
    %2541 = vmatprep.subr.bf16.mxu0 %v2445
    %2542 = vmatpush1.bf16.msra.mxu0 %v2444
    %2543 = vmatprep.subr.bf16.mxu0 %v2449
    %2544 = vmatpush1.bf16.msra.mxu0 %v2448
    %2545 = vmatprep.subr.bf16.mxu0 %v2453
    %2546 = vmatpush1.bf16.msra.mxu0 %v2452
    %2547 = vmatprep.subr.bf16.mxu0 %v2457
    %2548 = vmatpush1.bf16.msra.mxu0 %v2456
    %2549 = vmatprep.subr.bf16.mxu0 %v2461
    %2550 = vmatpush1.bf16.msra.mxu0 %v2460
    %2551 = vmatprep.subr.bf16.mxu0 0
    %2552 = vmatpush1.bf16.msra.mxu0 0
    %2553 = vmatprep.subr.bf16.mxu0 0
    %2554 = vmatpush1.bf16.msra.mxu0 0
    %2555 = vmatprep.subr.bf16.mxu0 0
    %2556 = vmatpush1.bf16.msra.mxu0 0
    %2557 = vmatprep.subr.bf16.mxu0 0
    %2558 = vmatpush1.bf16.msra.mxu0 0
    %2559 = vmatprep.subr.bf16.mxu0 0
    %2560 = vmatpush1.bf16.msra.mxu0 0
    %2561 = vmatprep.subr.bf16.mxu0 0
    %2562 = vmatpush1.bf16.msra.mxu0 0
    %2563 = vmatprep.subr.bf16.mxu0 0
    %2564 = vmatpush1.bf16.msra.mxu0 0
    %2565 = vmatprep.subr.bf16.mxu0 0
    %2566 = vmatpush1.bf16.msra.mxu0 0
    %2567 = vmatprep.mubr.bf16.mxu0 0
    %2568 = vmatmul.mubr.bf16.gmra.mrb[0].mxu0 %v2301
    %v2569 = vpop.f32.mrb[0].mxu0
    %v2570 = vadd.f32 0.0, %v2569
    %v2571 = vpop.f32.mrb[0].mxu0
    %v2572 = vadd.f32 0.0, %v2571
    %v2573 = vpop.f32.mrb[0].mxu0
    %v2574 = vpop.f32.mrb[0].mxu0
    %2575 = vdwg.mxu0
    %v2576 = vadd.f32 %v2297, %v2529
    %v2577 = vadd.f32 %v2298, %v2531
    %v2578 = vadd.f32 %v2299, %v2570
    %v2579 = vadd.f32 %v2300, %v2572
    %v2580 = vxor.u32 %v2576, 2147483648
    %v2581 = vmul.f32 %v2580, 1.442695
    %v2582 = vpow.pop %v2581
    %v2583 = vadd.f32 %v2582, 1.0
    %v2584 = vrcp.pop %v2583
    %v2585 = vmul.f32 1.0, %v2584
    %v2586 = vxor.u32 %v2577, 2147483648
    %v2587 = vmul.f32 %v2586, 1.442695
    %v2588 = vpow.pop %v2587
    %v2589 = vadd.f32 %v2588, 1.0
    %v2590 = vrcp.pop %v2589
    %v2591 = vmul.f32 1.0, %v2590
    %v2592 = vtanh.pop %v2578
    %v2593 = vxor.u32 %v2579, 2147483648
    %v2594 = vmul.f32 %v2593, 1.442695
    %v2595 = vpow.pop %v2594
    %v2596 = vadd.f32 %v2595, 1.0
    %v2597 = vrcp.pop %v2596
    %v2598 = vmul.f32 1.0, %v2597
    %v2599 = vmul.f32 %v2591, %v2289
    %v2600 = vmul.f32 %v2585, %v2592
    %v2601 = vadd.f32 %v2599, %v2600
    %v2602 = vtanh.pop %v2601
    %v2603 = vmul.f32 %v2598, %v2602
    %s2604 = sadd.s32 %s26, 7
    %v2605 = vstv %s2604
    %vm2606 = vcmp.lt.s32.totalorder %v2605, %v25
    %v2607 = vsel %vm2606, 1, 0
    %2608 = vset.pattern.permute.xlu0 0
    %2609 = vperm.xlu0 %2608, %v2607
    %v2610 = vpop.permute.xlu0 %2609
    %vm2611 = vcmp.eq.s32.totalorder %v2610, 1
    %v2612 = vsel %vm2611, %v2603, %v2288
    %v2613 = vsel %vm2611, %v2601, %v2289
    %v2614 = vsel %vm2611, %v2603, 0.0
    %v2615 = vpack.c.bf16 %v2614, %v2614
    %s2616 = scalar_lea.vmem %s3, 28
    %2617 = vst [vmem:[%s2616] sm:$0xf] %v2615
    %2618 = vst [vmem:[#allocation2] sm:$0xff] %v2612
    %2619 = vst [vmem:[#allocation3] sm:$0xff] %v2613
    // Predicated region
    $region18: #{lstm_forward.2} parent=1 // pred_check
      %p2620 = pneg %p19
    $region19: #{lstm_forward.2} parent=1 // pred_check_branch
      %2622 = sbr.rel (%p2620) target = $region21
    $region20: #{lstm_forward.2} parent=1 // pred_region
      %2623 = vst [vmem:[%s4] sm:$0xff] %v2612
      %2624 = vst [vmem:[#allocation4] sm:$0xff] %v2613
    $region21: #{lstm_forward.2} parent=1 // pred_fallthru
      _
    // Predicated region
    $region22: #{lstm_forward.2} parent=1 // pred_check
      _
    $region23: #{lstm_forward.2} parent=1 // pred_check_branch
      %2626 = sbr.rel (0) target = $region25
    $region24: #{lstm_forward.2} parent=1 // pred_region
      _
    $region25: #{lstm_forward.2} parent=1 // pred_fallthru
      _
    // Predicated region
    $region26: #{lstm_forward.2} parent=1 // pred_check
      _
    $region27: #{lstm_forward.2} parent=1 // pred_check_branch
      %2628 = sbr.rel (0) target = $region29
    $region28: #{lstm_forward.2} parent=1 // pred_region
      _
    $region29: #{lstm_forward.2} parent=1 // pred_fallthru
      _
    // Predicated region
    $region30: #{lstm_forward.2} parent=1 // pred_check
      _
    $region31: #{lstm_forward.2} parent=1 // pred_check_branch
      %2630 = sbr.rel (0) target = $region33
    $region32: #{lstm_forward.2} parent=1 // pred_region
      %s2632 = ssub.s32 128, 128
      %2633 = vsyncadd [#allocation5], %s2632
      %s2635 = sshll.u32 [#allocation4], 4
      %s2636 = int_to_ptr.vmem [resolvable:$true] %s2635
      %2638 = dma.vmem_to_hbm [thread:$0]  %s2636, 128, %s5, [#allocation5]
    $region33: #{lstm_forward.2} parent=1 // pred_fallthru
      _
    // Predicated region
    $region34: #{lstm_forward.2} parent=1 // pred_check
      _
    $region35: #{lstm_forward.2} parent=1 // pred_check_branch
      %2640 = sbr.rel (0) target = $region37
    $region36: #{lstm_forward.2} parent=1 // pred_region
      _
    $region37: #{lstm_forward.2} parent=1 // pred_fallthru
      _
    // Predicated region
    $region38: #{lstm_forward.2} parent=1 // pred_check
      _
    $region39: #{lstm_forward.2} parent=1 // pred_check_branch
      %2642 = sbr.rel (0) target = $region41
    $region40: #{lstm_forward.2} parent=1 // pred_region
      _
    $region41: #{lstm_forward.2} parent=1 // pred_fallthru
      _
    // Predicated region
    $region42: #{lstm_forward.2} parent=1 // pred_check
      _
    $region43: #{lstm_forward.2} parent=1 // pred_check_branch
      %2644 = sbr.rel (0) target = $region45
    $region44: #{lstm_forward.2} parent=1 // pred_region
      %2645 = dma.done [#allocation5], 128
    $region45: #{lstm_forward.2} parent=1 // pred_fallthru
      _
    %2646 = vsyncpa [#allocation5], 1

</llo_original>
